<compile_context>
chip_gen: v6e
topology: v6e:2x2x1
jax: 0.10.0
libtpu: 0.0.40
codegen_flags: <defaults>
</compile_context>

<pallas_src>
import math

import jax
import jax.numpy as jnp
import numpy as np
from jax.experimental import pallas as pl
from jax.experimental.pallas import tpu as pltpu

MAX_NUM_ATOMS = 13 + 3  # 16, as in the PyTorch module


def _round_up(x: int, m: int) -> int:
    return ((x + m - 1) // m) * m


def _compute_ids(x, fact, fact_type, n_fact):
    """Glue: per-factor parameter row index (same as the PyTorch code)."""
    if fact_type == 'B':
        atom_pairs = x[fact[:, 0]][:, 1:3]
        ids = atom_pairs[:, 0] * MAX_NUM_ATOMS + atom_pairs[:, 1]
    elif fact_type == 'C':
        ids = jnp.zeros((n_fact,), dtype=jnp.int32)
    elif fact_type == 'A':
        ids = x[fact[:, 0]][:, 1]
    else:
        raise ValueError(f"unknown fact_type {fact_type}")
    return ids.astype(jnp.int32)


def _make_kernel(order: int, msg_to: int, tm: int, hidden: int, out_dim: int,
                 num_params: int):
    kept = [i for i in range(order) if i != msg_to]

    def kernel(ids_ref, inp_ref, wflat_ref, bflat_ref, o_ref):
        # ids_ref  : (tm, 1) int32                 row-block parameter ids
        # inp_ref  : (order, tm, hidden)           current row block (orig layout)
        # wflat_ref: (num_params, hidden*out_dim)  VMEM-resident weight table
        # bflat_ref: (num_params, out_dim)         VMEM-resident bias table
        # o_ref    : (tm, out_dim)

        # Factor product over kept slots (VPU), kept in vregs.
        if kept:
            fp = inp_ref[kept[0]]
            for i in kept[1:]:
                fp = fp * inp_ref[i]
        else:
            fp = jnp.ones((tm, hidden), dtype=jnp.float32)

        # One-hot row selection: (tm, num_params), built with a single iota +
        # compare against the VMEM ids block (no scalar-unit loop).
        ids = ids_ref[...]                                            # (tm, 1)
        col = jax.lax.broadcasted_iota(jnp.int32, (tm, num_params), 1)
        sel = (ids == col).astype(jnp.float32)                        # (tm, P)

        # Tile-level weight/bias gather as MXU matmuls (M = tm).
        w_tile = jnp.dot(sel, wflat_ref[...],
                         preferred_element_type=jnp.float32)          # (tm, H*O)
        acc = jnp.dot(sel, bflat_ref[...],
                      preferred_element_type=jnp.float32)             # (tm, O)

        # Contract fp over hidden with VPU mul+add on static lane slices
        # (fully unrolled -> full LLO scheduler visibility).
        for h in range(hidden):
            acc = acc + fp[:, h:h + 1] * w_tile[:, h * out_dim:(h + 1) * out_dim]

        # Single full-block store per grid step.
        o_ref[...] = acc.astype(o_ref.dtype)

    return kernel


def high_order_net_forward(x, fact, inp, msg_to, order, fact_type, params, bias,
                           *, tm_max: int = 128):
    """Pallas implementation of HighOrderNet.forward.

    x      : int32 [num_nodes, >=3]     node table (cols 1,2 are atom indices)
    fact   : int32 [N, >=1]             first column indexes rows of x
    inp    : float32 [order, N, hidden]
    params : float32 [num_params, hidden, out]
    bias   : float32 [num_params, 1, out]
    returns: float32 [N, out]
    """
    order_, n_fact, hidden = inp.shape
    assert order_ == order
    num_params, hidden_p, out_dim = params.shape
    assert hidden_p == hidden

    ids = _compute_ids(x, fact, fact_type, n_fact)
    # The in-kernel one-hot compare simply drops out-of-range ids; clamp so the
    # behaviour matches the reference (PyTorch would raise on OOB indices).
    ids = jnp.clip(ids, 0, num_params - 1).astype(jnp.int32)

    # Pick TM so there are >= 2 row blocks whenever possible (v7x has 2 TCs and
    # the "parallel" grid axis only helps with >= 2 blocks).
    tm = max(8, min(tm_max, _round_up(max(1, -(-n_fact // 2)), 8)))
    n_pad = _round_up(max(n_fact, 1), tm)
    if n_pad != n_fact:
        ids = jnp.pad(ids, (0, n_pad - n_fact))
        inp = jnp.pad(inp, ((0, 0), (0, n_pad - n_fact), (0, 0)))
    ids2 = ids.reshape(n_pad, 1)

    # Lane-dense, pre-flattened weight tables (same memory as params/bias).
    wflat = params.reshape(num_params, hidden * out_dim)
    bflat = bias.reshape(num_params, out_dim)

    kernel = _make_kernel(order, int(msg_to), tm, hidden, out_dim, num_params)

    out = pl.pallas_call(
        kernel,
        out_shape=jax.ShapeDtypeStruct((n_pad, out_dim), jnp.float32),
        grid=(n_pad // tm,),
        in_specs=[
            # ids tile, int32 VMEM block.
            pl.BlockSpec((tm, 1), lambda t: (t, 0)),
            # inp stays in [order, N, hidden] layout -> no wrapper transpose.
            pl.BlockSpec((order, tm, hidden), lambda t: (0, t, 0)),
            # weight / bias tables: full arrays, constant block index (VMEM resident).
            pl.BlockSpec((num_params, hidden * out_dim), lambda t: (0, 0)),
            pl.BlockSpec((num_params, out_dim), lambda t: (0, 0)),
        ],
        out_specs=pl.BlockSpec((tm, out_dim), lambda t: (t, 0)),
        compiler_params=pltpu.CompilerParams(
            dimension_semantics=("parallel",),   # row blocks are independent
        ),
    )(ids2, inp, wflat, bflat)

    return out[:n_fact]


def high_order_net_reference(x, fact, inp, msg_to, order, fact_type, params, bias):
    """Pure-JAX reference matching the PyTorch forward."""
    keep = jnp.array([i for i in range(order) if i != msg_to], dtype=jnp.int32)
    fact_prod = jnp.prod(inp[keep], axis=0)                       # (N, hidden)
    ids = _compute_ids(x, fact, fact_type, fact.shape[0])
    ids = jnp.clip(ids, 0, params.shape[0] - 1)
    W = params[ids]                                               # (N, hidden, out)
    b = bias[ids][:, 0, :]                                        # (N, out)
    return jnp.einsum('nh,nho->no', fact_prod, W) + b


if __name__ == "__main__":
    # Small, deterministic problem consistent with the module's shapes.
    fact_type = 'B'
    hidden = 32
    out_dim = 32
    order = 3
    msg_to = 1
    num_nodes = 40
    N = 200                                  # number of factors (exercises 2 row blocks)
    num_params = MAX_NUM_ATOMS ** 2          # fact_type 'B' -> 256

    key = jax.random.PRNGKey(0)
    k_params, k_bias, k_inp, k_atoms, k_fact = jax.random.split(key, 5)

    # Parameter init mirroring reset_parameters(): U(-stdv, stdv), stdv = 1/sqrt(out_dim)
    stdv = 1.0 / math.sqrt(out_dim)
    params = jax.random.uniform(k_params, (num_params, hidden, out_dim),
                                minval=-stdv, maxval=stdv, dtype=jnp.float32)
    bias = jax.random.uniform(k_bias, (num_params, 1, out_dim),
                              minval=-stdv, maxval=stdv, dtype=jnp.float32)

    # Node table: column 0 unused, columns 1,2 are atom indices in [0, 16).
    atoms = jax.random.randint(k_atoms, (num_nodes, 2), 0, MAX_NUM_ATOMS, dtype=jnp.int32)
    x = jnp.concatenate([jnp.arange(num_nodes, dtype=jnp.int32)[:, None], atoms], axis=1)

    # Factors: first column indexes rows of x.
    fact = jax.random.randint(k_fact, (N, 3), 0, num_nodes, dtype=jnp.int32)

    # Incoming messages: [order, N, hidden]
    inp = jax.random.normal(k_inp, (order, N, hidden), dtype=jnp.float32)

    out = high_order_net_forward(x, fact, inp, msg_to, order, fact_type, params, bias)
    out = jax.block_until_ready(out)

    ref = high_order_net_reference(x, fact, inp, msg_to, order, fact_type, params, bias)
    np.testing.assert_allclose(np.asarray(out), np.asarray(ref), rtol=1e-5, atol=1e-5)

    print("KERNEL_OK")
</pallas_src>

<mosaic_0001>
module attributes {stable_mosaic.version = 11 : i64} {
  func.func @kernel(%arg0: i32, %arg1: memref<104x1xi32, #tpu.memory_space<vmem>>, %arg2: memref<3x104x32xf32, #tpu.memory_space<vmem>>, %arg3: memref<256x1024xf32, #tpu.memory_space<vmem>>, %arg4: memref<256x32xf32, #tpu.memory_space<vmem>>, %arg5: memref<104x32xf32, #tpu.memory_space<vmem>>) attributes {dimension_semantics = [#tpu.dimension_semantics<parallel>], iteration_bounds = array<i64: 2>, scalar_prefetch = 0 : i64, scratch_operands = 0 : i64, tpu.core_type = #tpu.core_type<tc>, window_params = [{transform_indices = @transform_0, window_bounds = array<i64: 104, 1>}, {transform_indices = @transform_1, window_bounds = array<i64: 3, 104, 32>}, {pipeline_mode = #tpu.pipeline_mode<synchronous>, transform_indices = @transform_2, window_bounds = array<i64: 256, 1024>}, {pipeline_mode = #tpu.pipeline_mode<synchronous>, transform_indices = @transform_3, window_bounds = array<i64: 256, 32>}, {transform_indices = @transform_4, window_bounds = array<i64: 104, 32>}]} {
    %c0 = arith.constant 0 : index
    %c0_0 = arith.constant 0 : index
    %c0_1 = arith.constant 0 : index
    %0 = vector.load %arg2[%c0, %c0_0, %c0_1] : memref<3x104x32xf32, #tpu.memory_space<vmem>>, vector<1x104x32xf32>
    %1 = vector.shape_cast %0 : vector<1x104x32xf32> to vector<104x32xf32>
    %c2 = arith.constant 2 : index
    %c0_2 = arith.constant 0 : index
    %c0_3 = arith.constant 0 : index
    %2 = vector.load %arg2[%c2, %c0_2, %c0_3] : memref<3x104x32xf32, #tpu.memory_space<vmem>>, vector<1x104x32xf32>
    %3 = vector.shape_cast %2 : vector<1x104x32xf32> to vector<104x32xf32>
    %4 = arith.mulf %1, %3 : vector<104x32xf32>
    %c0_4 = arith.constant 0 : index
    %c0_5 = arith.constant 0 : index
    %5 = vector.load %arg1[%c0_4, %c0_5] : memref<104x1xi32, #tpu.memory_space<vmem>>, vector<104x1xi32>
    %6 = tpu.iota {dimensions = array<i32: 1>} : vector<104x256xi32>
    %7 = vector.broadcast %5 : vector<104x1xi32> to vector<104x256xi32>
    %8 = arith.cmpi eq, %7, %6 : vector<104x256xi32>
    %9 = arith.extui %8 : vector<104x256xi1> to vector<104x256xi32>
    %10 = arith.sitofp %9 : vector<104x256xi32> to vector<104x256xf32>
    %c0_6 = arith.constant 0 : index
    %c0_7 = arith.constant 0 : index
    %11 = vector.load %arg3[%c0_6, %c0_7] : memref<256x1024xf32, #tpu.memory_space<vmem>>, vector<256x1024xf32>
    %cst = arith.constant dense<0.000000e+00> : vector<104x1024xf32>
    %12 = tpu.matmul %10, %11, %cst {dimension_numbers = #tpu.dot_dimension_numbers<[1], [0], [0], [1], [0, 0, 1, 1], [], []>} : vector<104x256xf32>, vector<256x1024xf32>, vector<104x1024xf32> -> vector<104x1024xf32>
    %c0_8 = arith.constant 0 : index
    %c0_9 = arith.constant 0 : index
    %13 = vector.load %arg4[%c0_8, %c0_9] : memref<256x32xf32, #tpu.memory_space<vmem>>, vector<256x32xf32>
    %cst_10 = arith.constant dense<0.000000e+00> : vector<104x32xf32>
    %14 = tpu.matmul %10, %13, %cst_10 {dimension_numbers = #tpu.dot_dimension_numbers<[1], [0], [0], [1], [0, 0, 1, 1], [], []>} : vector<104x256xf32>, vector<256x32xf32>, vector<104x32xf32> -> vector<104x32xf32>
    %15 = vector.extract_strided_slice %4 {offsets = [0, 0], sizes = [104, 1], strides = [1, 1]} : vector<104x32xf32> to vector<104x1xf32>
    %16 = vector.extract_strided_slice %12 {offsets = [0, 0], sizes = [104, 32], strides = [1, 1]} : vector<104x1024xf32> to vector<104x32xf32>
    %17 = vector.broadcast %15 : vector<104x1xf32> to vector<104x32xf32>
    %18 = arith.mulf %17, %16 : vector<104x32xf32>
    %19 = arith.addf %14, %18 : vector<104x32xf32>
    %20 = vector.extract_strided_slice %4 {offsets = [0, 1], sizes = [104, 1], strides = [1, 1]} : vector<104x32xf32> to vector<104x1xf32>
    %21 = vector.extract_strided_slice %12 {offsets = [0, 32], sizes = [104, 32], strides = [1, 1]} : vector<104x1024xf32> to vector<104x32xf32>
    %22 = vector.broadcast %20 : vector<104x1xf32> to vector<104x32xf32>
    %23 = arith.mulf %22, %21 : vector<104x32xf32>
    %24 = arith.addf %19, %23 : vector<104x32xf32>
    %25 = vector.extract_strided_slice %4 {offsets = [0, 2], sizes = [104, 1], strides = [1, 1]} : vector<104x32xf32> to vector<104x1xf32>
    %26 = vector.extract_strided_slice %12 {offsets = [0, 64], sizes = [104, 32], strides = [1, 1]} : vector<104x1024xf32> to vector<104x32xf32>
    %27 = vector.broadcast %25 : vector<104x1xf32> to vector<104x32xf32>
    %28 = arith.mulf %27, %26 : vector<104x32xf32>
    %29 = arith.addf %24, %28 : vector<104x32xf32>
    %30 = vector.extract_strided_slice %4 {offsets = [0, 3], sizes = [104, 1], strides = [1, 1]} : vector<104x32xf32> to vector<104x1xf32>
    %31 = vector.extract_strided_slice %12 {offsets = [0, 96], sizes = [104, 32], strides = [1, 1]} : vector<104x1024xf32> to vector<104x32xf32>
    %32 = vector.broadcast %30 : vector<104x1xf32> to vector<104x32xf32>
    %33 = arith.mulf %32, %31 : vector<104x32xf32>
    %34 = arith.addf %29, %33 : vector<104x32xf32>
    %35 = vector.extract_strided_slice %4 {offsets = [0, 4], sizes = [104, 1], strides = [1, 1]} : vector<104x32xf32> to vector<104x1xf32>
    %36 = vector.extract_strided_slice %12 {offsets = [0, 128], sizes = [104, 32], strides = [1, 1]} : vector<104x1024xf32> to vector<104x32xf32>
    %37 = vector.broadcast %35 : vector<104x1xf32> to vector<104x32xf32>
    %38 = arith.mulf %37, %36 : vector<104x32xf32>
    %39 = arith.addf %34, %38 : vector<104x32xf32>
    %40 = vector.extract_strided_slice %4 {offsets = [0, 5], sizes = [104, 1], strides = [1, 1]} : vector<104x32xf32> to vector<104x1xf32>
    %41 = vector.extract_strided_slice %12 {offsets = [0, 160], sizes = [104, 32], strides = [1, 1]} : vector<104x1024xf32> to vector<104x32xf32>
    %42 = vector.broadcast %40 : vector<104x1xf32> to vector<104x32xf32>
    %43 = arith.mulf %42, %41 : vector<104x32xf32>
    %44 = arith.addf %39, %43 : vector<104x32xf32>
    %45 = vector.extract_strided_slice %4 {offsets = [0, 6], sizes = [104, 1], strides = [1, 1]} : vector<104x32xf32> to vector<104x1xf32>
    %46 = vector.extract_strided_slice %12 {offsets = [0, 192], sizes = [104, 32], strides = [1, 1]} : vector<104x1024xf32> to vector<104x32xf32>
    %47 = vector.broadcast %45 : vector<104x1xf32> to vector<104x32xf32>
    %48 = arith.mulf %47, %46 : vector<104x32xf32>
    %49 = arith.addf %44, %48 : vector<104x32xf32>
    %50 = vector.extract_strided_slice %4 {offsets = [0, 7], sizes = [104, 1], strides = [1, 1]} : vector<104x32xf32> to vector<104x1xf32>
    %51 = vector.extract_strided_slice %12 {offsets = [0, 224], sizes = [104, 32], strides = [1, 1]} : vector<104x1024xf32> to vector<104x32xf32>
    %52 = vector.broadcast %50 : vector<104x1xf32> to vector<104x32xf32>
    %53 = arith.mulf %52, %51 : vector<104x32xf32>
    %54 = arith.addf %49, %53 : vector<104x32xf32>
    %55 = vector.extract_strided_slice %4 {offsets = [0, 8], sizes = [104, 1], strides = [1, 1]} : vector<104x32xf32> to vector<104x1xf32>
    %56 = vector.extract_strided_slice %12 {offsets = [0, 256], sizes = [104, 32], strides = [1, 1]} : vector<104x1024xf32> to vector<104x32xf32>
    %57 = vector.broadcast %55 : vector<104x1xf32> to vector<104x32xf32>
    %58 = arith.mulf %57, %56 : vector<104x32xf32>
    %59 = arith.addf %54, %58 : vector<104x32xf32>
    %60 = vector.extract_strided_slice %4 {offsets = [0, 9], sizes = [104, 1], strides = [1, 1]} : vector<104x32xf32> to vector<104x1xf32>
    %61 = vector.extract_strided_slice %12 {offsets = [0, 288], sizes = [104, 32], strides = [1, 1]} : vector<104x1024xf32> to vector<104x32xf32>
    %62 = vector.broadcast %60 : vector<104x1xf32> to vector<104x32xf32>
    %63 = arith.mulf %62, %61 : vector<104x32xf32>
    %64 = arith.addf %59, %63 : vector<104x32xf32>
    %65 = vector.extract_strided_slice %4 {offsets = [0, 10], sizes = [104, 1], strides = [1, 1]} : vector<104x32xf32> to vector<104x1xf32>
    %66 = vector.extract_strided_slice %12 {offsets = [0, 320], sizes = [104, 32], strides = [1, 1]} : vector<104x1024xf32> to vector<104x32xf32>
    %67 = vector.broadcast %65 : vector<104x1xf32> to vector<104x32xf32>
    %68 = arith.mulf %67, %66 : vector<104x32xf32>
    %69 = arith.addf %64, %68 : vector<104x32xf32>
    %70 = vector.extract_strided_slice %4 {offsets = [0, 11], sizes = [104, 1], strides = [1, 1]} : vector<104x32xf32> to vector<104x1xf32>
    %71 = vector.extract_strided_slice %12 {offsets = [0, 352], sizes = [104, 32], strides = [1, 1]} : vector<104x1024xf32> to vector<104x32xf32>
    %72 = vector.broadcast %70 : vector<104x1xf32> to vector<104x32xf32>
    %73 = arith.mulf %72, %71 : vector<104x32xf32>
    %74 = arith.addf %69, %73 : vector<104x32xf32>
    %75 = vector.extract_strided_slice %4 {offsets = [0, 12], sizes = [104, 1], strides = [1, 1]} : vector<104x32xf32> to vector<104x1xf32>
    %76 = vector.extract_strided_slice %12 {offsets = [0, 384], sizes = [104, 32], strides = [1, 1]} : vector<104x1024xf32> to vector<104x32xf32>
    %77 = vector.broadcast %75 : vector<104x1xf32> to vector<104x32xf32>
    %78 = arith.mulf %77, %76 : vector<104x32xf32>
    %79 = arith.addf %74, %78 : vector<104x32xf32>
    %80 = vector.extract_strided_slice %4 {offsets = [0, 13], sizes = [104, 1], strides = [1, 1]} : vector<104x32xf32> to vector<104x1xf32>
    %81 = vector.extract_strided_slice %12 {offsets = [0, 416], sizes = [104, 32], strides = [1, 1]} : vector<104x1024xf32> to vector<104x32xf32>
    %82 = vector.broadcast %80 : vector<104x1xf32> to vector<104x32xf32>
    %83 = arith.mulf %82, %81 : vector<104x32xf32>
    %84 = arith.addf %79, %83 : vector<104x32xf32>
    %85 = vector.extract_strided_slice %4 {offsets = [0, 14], sizes = [104, 1], strides = [1, 1]} : vector<104x32xf32> to vector<104x1xf32>
    %86 = vector.extract_strided_slice %12 {offsets = [0, 448], sizes = [104, 32], strides = [1, 1]} : vector<104x1024xf32> to vector<104x32xf32>
    %87 = vector.broadcast %85 : vector<104x1xf32> to vector<104x32xf32>
    %88 = arith.mulf %87, %86 : vector<104x32xf32>
    %89 = arith.addf %84, %88 : vector<104x32xf32>
    %90 = vector.extract_strided_slice %4 {offsets = [0, 15], sizes = [104, 1], strides = [1, 1]} : vector<104x32xf32> to vector<104x1xf32>
    %91 = vector.extract_strided_slice %12 {offsets = [0, 480], sizes = [104, 32], strides = [1, 1]} : vector<104x1024xf32> to vector<104x32xf32>
    %92 = vector.broadcast %90 : vector<104x1xf32> to vector<104x32xf32>
    %93 = arith.mulf %92, %91 : vector<104x32xf32>
    %94 = arith.addf %89, %93 : vector<104x32xf32>
    %95 = vector.extract_strided_slice %4 {offsets = [0, 16], sizes = [104, 1], strides = [1, 1]} : vector<104x32xf32> to vector<104x1xf32>
    %96 = vector.extract_strided_slice %12 {offsets = [0, 512], sizes = [104, 32], strides = [1, 1]} : vector<104x1024xf32> to vector<104x32xf32>
    %97 = vector.broadcast %95 : vector<104x1xf32> to vector<104x32xf32>
    %98 = arith.mulf %97, %96 : vector<104x32xf32>
    %99 = arith.addf %94, %98 : vector<104x32xf32>
    %100 = vector.extract_strided_slice %4 {offsets = [0, 17], sizes = [104, 1], strides = [1, 1]} : vector<104x32xf32> to vector<104x1xf32>
    %101 = vector.extract_strided_slice %12 {offsets = [0, 544], sizes = [104, 32], strides = [1, 1]} : vector<104x1024xf32> to vector<104x32xf32>
    %102 = vector.broadcast %100 : vector<104x1xf32> to vector<104x32xf32>
    %103 = arith.mulf %102, %101 : vector<104x32xf32>
    %104 = arith.addf %99, %103 : vector<104x32xf32>
    %105 = vector.extract_strided_slice %4 {offsets = [0, 18], sizes = [104, 1], strides = [1, 1]} : vector<104x32xf32> to vector<104x1xf32>
    %106 = vector.extract_strided_slice %12 {offsets = [0, 576], sizes = [104, 32], strides = [1, 1]} : vector<104x1024xf32> to vector<104x32xf32>
    %107 = vector.broadcast %105 : vector<104x1xf32> to vector<104x32xf32>
    %108 = arith.mulf %107, %106 : vector<104x32xf32>
    %109 = arith.addf %104, %108 : vector<104x32xf32>
    %110 = vector.extract_strided_slice %4 {offsets = [0, 19], sizes = [104, 1], strides = [1, 1]} : vector<104x32xf32> to vector<104x1xf32>
    %111 = vector.extract_strided_slice %12 {offsets = [0, 608], sizes = [104, 32], strides = [1, 1]} : vector<104x1024xf32> to vector<104x32xf32>
    %112 = vector.broadcast %110 : vector<104x1xf32> to vector<104x32xf32>
    %113 = arith.mulf %112, %111 : vector<104x32xf32>
    %114 = arith.addf %109, %113 : vector<104x32xf32>
    %115 = vector.extract_strided_slice %4 {offsets = [0, 20], sizes = [104, 1], strides = [1, 1]} : vector<104x32xf32> to vector<104x1xf32>
    %116 = vector.extract_strided_slice %12 {offsets = [0, 640], sizes = [104, 32], strides = [1, 1]} : vector<104x1024xf32> to vector<104x32xf32>
    %117 = vector.broadcast %115 : vector<104x1xf32> to vector<104x32xf32>
    %118 = arith.mulf %117, %116 : vector<104x32xf32>
    %119 = arith.addf %114, %118 : vector<104x32xf32>
    %120 = vector.extract_strided_slice %4 {offsets = [0, 21], sizes = [104, 1], strides = [1, 1]} : vector<104x32xf32> to vector<104x1xf32>
    %121 = vector.extract_strided_slice %12 {offsets = [0, 672], sizes = [104, 32], strides = [1, 1]} : vector<104x1024xf32> to vector<104x32xf32>
    %122 = vector.broadcast %120 : vector<104x1xf32> to vector<104x32xf32>
    %123 = arith.mulf %122, %121 : vector<104x32xf32>
    %124 = arith.addf %119, %123 : vector<104x32xf32>
    %125 = vector.extract_strided_slice %4 {offsets = [0, 22], sizes = [104, 1], strides = [1, 1]} : vector<104x32xf32> to vector<104x1xf32>
    %126 = vector.extract_strided_slice %12 {offsets = [0, 704], sizes = [104, 32], strides = [1, 1]} : vector<104x1024xf32> to vector<104x32xf32>
    %127 = vector.broadcast %125 : vector<104x1xf32> to vector<104x32xf32>
    %128 = arith.mulf %127, %126 : vector<104x32xf32>
    %129 = arith.addf %124, %128 : vector<104x32xf32>
    %130 = vector.extract_strided_slice %4 {offsets = [0, 23], sizes = [104, 1], strides = [1, 1]} : vector<104x32xf32> to vector<104x1xf32>
    %131 = vector.extract_strided_slice %12 {offsets = [0, 736], sizes = [104, 32], strides = [1, 1]} : vector<104x1024xf32> to vector<104x32xf32>
    %132 = vector.broadcast %130 : vector<104x1xf32> to vector<104x32xf32>
    %133 = arith.mulf %132, %131 : vector<104x32xf32>
    %134 = arith.addf %129, %133 : vector<104x32xf32>
    %135 = vector.extract_strided_slice %4 {offsets = [0, 24], sizes = [104, 1], strides = [1, 1]} : vector<104x32xf32> to vector<104x1xf32>
    %136 = vector.extract_strided_slice %12 {offsets = [0, 768], sizes = [104, 32], strides = [1, 1]} : vector<104x1024xf32> to vector<104x32xf32>
    %137 = vector.broadcast %135 : vector<104x1xf32> to vector<104x32xf32>
    %138 = arith.mulf %137, %136 : vector<104x32xf32>
    %139 = arith.addf %134, %138 : vector<104x32xf32>
    %140 = vector.extract_strided_slice %4 {offsets = [0, 25], sizes = [104, 1], strides = [1, 1]} : vector<104x32xf32> to vector<104x1xf32>
    %141 = vector.extract_strided_slice %12 {offsets = [0, 800], sizes = [104, 32], strides = [1, 1]} : vector<104x1024xf32> to vector<104x32xf32>
    %142 = vector.broadcast %140 : vector<104x1xf32> to vector<104x32xf32>
    %143 = arith.mulf %142, %141 : vector<104x32xf32>
    %144 = arith.addf %139, %143 : vector<104x32xf32>
    %145 = vector.extract_strided_slice %4 {offsets = [0, 26], sizes = [104, 1], strides = [1, 1]} : vector<104x32xf32> to vector<104x1xf32>
    %146 = vector.extract_strided_slice %12 {offsets = [0, 832], sizes = [104, 32], strides = [1, 1]} : vector<104x1024xf32> to vector<104x32xf32>
    %147 = vector.broadcast %145 : vector<104x1xf32> to vector<104x32xf32>
    %148 = arith.mulf %147, %146 : vector<104x32xf32>
    %149 = arith.addf %144, %148 : vector<104x32xf32>
    %150 = vector.extract_strided_slice %4 {offsets = [0, 27], sizes = [104, 1], strides = [1, 1]} : vector<104x32xf32> to vector<104x1xf32>
    %151 = vector.extract_strided_slice %12 {offsets = [0, 864], sizes = [104, 32], strides = [1, 1]} : vector<104x1024xf32> to vector<104x32xf32>
    %152 = vector.broadcast %150 : vector<104x1xf32> to vector<104x32xf32>
    %153 = arith.mulf %152, %151 : vector<104x32xf32>
    %154 = arith.addf %149, %153 : vector<104x32xf32>
    %155 = vector.extract_strided_slice %4 {offsets = [0, 28], sizes = [104, 1], strides = [1, 1]} : vector<104x32xf32> to vector<104x1xf32>
    %156 = vector.extract_strided_slice %12 {offsets = [0, 896], sizes = [104, 32], strides = [1, 1]} : vector<104x1024xf32> to vector<104x32xf32>
    %157 = vector.broadcast %155 : vector<104x1xf32> to vector<104x32xf32>
    %158 = arith.mulf %157, %156 : vector<104x32xf32>
    %159 = arith.addf %154, %158 : vector<104x32xf32>
    %160 = vector.extract_strided_slice %4 {offsets = [0, 29], sizes = [104, 1], strides = [1, 1]} : vector<104x32xf32> to vector<104x1xf32>
    %161 = vector.extract_strided_slice %12 {offsets = [0, 928], sizes = [104, 32], strides = [1, 1]} : vector<104x1024xf32> to vector<104x32xf32>
    %162 = vector.broadcast %160 : vector<104x1xf32> to vector<104x32xf32>
    %163 = arith.mulf %162, %161 : vector<104x32xf32>
    %164 = arith.addf %159, %163 : vector<104x32xf32>
    %165 = vector.extract_strided_slice %4 {offsets = [0, 30], sizes = [104, 1], strides = [1, 1]} : vector<104x32xf32> to vector<104x1xf32>
    %166 = vector.extract_strided_slice %12 {offsets = [0, 960], sizes = [104, 32], strides = [1, 1]} : vector<104x1024xf32> to vector<104x32xf32>
    %167 = vector.broadcast %165 : vector<104x1xf32> to vector<104x32xf32>
    %168 = arith.mulf %167, %166 : vector<104x32xf32>
    %169 = arith.addf %164, %168 : vector<104x32xf32>
    %170 = vector.extract_strided_slice %4 {offsets = [0, 31], sizes = [104, 1], strides = [1, 1]} : vector<104x32xf32> to vector<104x1xf32>
    %171 = vector.extract_strided_slice %12 {offsets = [0, 992], sizes = [104, 32], strides = [1, 1]} : vector<104x1024xf32> to vector<104x32xf32>
    %172 = vector.broadcast %170 : vector<104x1xf32> to vector<104x32xf32>
    %173 = arith.mulf %172, %171 : vector<104x32xf32>
    %174 = arith.addf %169, %173 : vector<104x32xf32>
    %c0_11 = arith.constant 0 : index
    %c0_12 = arith.constant 0 : index
    %175 = vector.load %arg5[%c0_11, %c0_12] : memref<104x32xf32, #tpu.memory_space<vmem>>, vector<104x32xf32>
    tpu.vector_store %arg5[%c0_11, %c0_12], %174 {strides = array<i32>} : memref<104x32xf32, #tpu.memory_space<vmem>>, vector<104x32xf32>,
    return
  }
  func.func @transform_0(%arg0: i32) -> (i32, i32) {
    %c0_i32 = arith.constant 0 : i32
    %c0_i32_0 = arith.constant 0 : i32
    return %arg0, %c0_i32 : i32, i32
  }
  func.func @transform_1(%arg0: i32) -> (i32, i32, i32) {
    %c0_i32 = arith.constant 0 : i32
    %c0_i32_0 = arith.constant 0 : i32
    %c0_i32_1 = arith.constant 0 : i32
    return %c0_i32, %arg0, %c0_i32_0 : i32, i32, i32
  }
  func.func @transform_2(%arg0: i32) -> (i32, i32) {
    %c0_i32 = arith.constant 0 : i32
    %c0_i32_0 = arith.constant 0 : i32
    %c0_i32_1 = arith.constant 0 : i32
    return %c0_i32, %c0_i32_0 : i32, i32
  }
  func.func @transform_3(%arg0: i32) -> (i32, i32) {
    %c0_i32 = arith.constant 0 : i32
    %c0_i32_0 = arith.constant 0 : i32
    %c0_i32_1 = arith.constant 0 : i32
    return %c0_i32, %c0_i32_0 : i32, i32
  }
  func.func @transform_4(%arg0: i32) -> (i32, i32) {
    %c0_i32 = arith.constant 0 : i32
    %c0_i32_0 = arith.constant 0 : i32
    return %arg0, %c0_i32 : i32, i32
  }
}

</mosaic_0001>

<llo_original>
// kernel: tpu_custom_call.1
$region0: #{tpu_custom_call.1}
  #allocation0 [shape = 'u32[]', space=smem, size = 0x4, offset = 0x4, fixed_abs, tag = 'smem constant byte address 0x4 - core index']
  #allocation1 [shape = 'u32[144,128]{1,0:T(1,128)}', space=vmem, size = 0x12000, scoped, tag = 'internal scratch']
  %s0 = inlined_call_operand.vmem [shape: s32[208,1], index: 0, kind: input, shape index: {}]
  %s1 = inlined_call_operand.vmem [shape: f32[3,208,32], index: 1, kind: input, shape index: {}]
  %s2 = inlined_call_operand.hbm [shape: f32[256,1024], index: 2, kind: input, shape index: {}]
  %s3 = inlined_call_operand.vmem [shape: f32[256,32], index: 3, kind: input, shape index: {}]
  %s4 = inlined_call_operand.vmem [shape: f32[208,32], index: 4, kind: output, shape index: {}]
  %s5 = sld [smem:[#allocation0]]
  $region91: #{tpu_custom_call.1} parent=0
    _
  %s7 = ssub.s32 1, %s5
  %s8 = scalar_select 0, %s7, %s5
  $region1: #{tpu_custom_call.1} parent=0
    #allocation2 [shape = 'u8[319488]{0}', space=vmem, size = 0x4e000, scoped, tag = 'input window, operand 1']
    #allocation3 [shape = 'u8[1048576]{0}', space=vmem, size = 0x100000, scoped, tag = 'input window, operand 2, single buffered']
    #allocation4 [shape = 's32[2]{0}', space=sflag, size = 0x8, scoped, tag = 'scoped memory for tpu_custom_call.1']
    %9 = vsyncpa [#allocation4], 0
    loop: start=0, step=1, limit=4
    $region2: #{tpu_custom_call.1} parent=1 // loop_pre_header
      _
    $region3: #{tpu_custom_call.1} parent=1 // loop_header
      %s11 = sphi 0, %s15
      %p12 = scmp.ge.s32.totalorder %s11, 4
      %s21 = sphi 0, %s23
      %s24 = sphi 0, %s21
      %s25 = sphi 0, %s24
      %s41 = sphi 0, %s25
      %s47 = sphi 0, %s49
      %s50 = sphi 0, %s47
      %s51 = sphi 0, %s50
      %s67 = sphi 0, %s51
      %s71 = sphi 0, %s71
      %s73 = sphi 0, %s71
      %s74 = sphi 0, %s73
      %s88 = sphi 0, %s74
      %s92 = sphi 0, %s92
      %s94 = sphi 0, %s92
      %s95 = sphi 0, %s94
      %s109 = sphi 0, %s95
      %s115 = sphi 0, %s117
      %s118 = sphi 0, %s115
      %s119 = sphi 0, %s118
      %s135 = sphi 0, %s119
    $region4: #{tpu_custom_call.1} parent=1 // loop_header_branch
      %14 = sbr.rel (%p12) target = $region8
    $region5: #{tpu_custom_call.1} parent=1 // loop_body
      %s16 = ssub.s32 %s11, 1
      %s17 = ssub.s32 %s11, 2
      %s18 = sadd.s32 %s11, 1
      %s19 = ssub.s32 %s11, %s18
      %p20 = scmp.eq.s32.totalorder %s19, 0
      %s22 = sadd.s32 %s21, 1
      %s23 = scalar_select %p20, %s21, %s22
      %p26 = pneg %p20
      %p27 = scmp.eq.s32.totalorder %s11, 1
      %p28 = por %p26, %p27
      %p29 = scmp.ne.s32.totalorder %s21, %s24
      %p30 = scmp.eq.s32.totalorder %s11, 0
      %p31 = por %p29, %p30
      %p32 = scmp.ne.s32.totalorder %s21, %s24
      %p33 = scmp.eq.s32.totalorder %s16, 1
      %p34 = por %p32, %p33
      %p35 = scmp.ne.s32.totalorder %s24, %s25
      %p36 = scmp.eq.s32.totalorder %s16, 0
      %p37 = por %p35, %p36
      %p38 = scmp.ne.s32.totalorder %s24, %s25
      %p39 = scmp.eq.s32.totalorder %s17, 1
      %p40 = por %p38, %p39
      %p42 = scmp.ne.s32.totalorder %s25, %s41
      %p43 = scmp.eq.s32.totalorder %s17, 0
      %p44 = por %p42, %p43
      %s45 = ssub.s32 %s11, %s18
      %p46 = scmp.eq.s32.totalorder %s45, 0
      %s48 = sadd.s32 %s47, 1
      %s49 = scalar_select %p46, %s47, %s48
      %p52 = pneg %p46
      %p53 = scmp.eq.s32.totalorder %s11, 1
      %p54 = por %p52, %p53
      %p55 = scmp.ne.s32.totalorder %s47, %s50
      %p56 = scmp.eq.s32.totalorder %s11, 0
      %p57 = por %p55, %p56
      %p58 = scmp.ne.s32.totalorder %s47, %s50
      %p59 = scmp.eq.s32.totalorder %s16, 1
      %p60 = por %p58, %p59
      %p61 = scmp.ne.s32.totalorder %s50, %s51
      %p62 = scmp.eq.s32.totalorder %s16, 0
      %p63 = por %p61, %p62
      %p64 = scmp.ne.s32.totalorder %s50, %s51
      %p65 = scmp.eq.s32.totalorder %s17, 1
      %p66 = por %p64, %p65
      %p68 = scmp.ne.s32.totalorder %s51, %s67
      %p69 = scmp.eq.s32.totalorder %s17, 0
      %p70 = por %p68, %p69
      %s72 = sadd.s32 %s71, 1
      %p75 = scmp.eq.s32.totalorder %s11, 1
      %p76 = scmp.ne.s32.totalorder %s71, %s73
      %p77 = scmp.eq.s32.totalorder %s11, 0
      %p78 = por %p76, %p77
      %p79 = scmp.ne.s32.totalorder %s71, %s73
      %p80 = scmp.eq.s32.totalorder %s16, 1
      %p81 = por %p79, %p80
      %p82 = scmp.ne.s32.totalorder %s73, %s74
      %p83 = scmp.eq.s32.totalorder %s16, 0
      %p84 = por %p82, %p83
      %p85 = scmp.ne.s32.totalorder %s73, %s74
      %p86 = scmp.eq.s32.totalorder %s17, 1
      %p87 = por %p85, %p86
      %p89 = scmp.ne.s32.totalorder %s74, %s88
      %p90 = scmp.eq.s32.totalorder %s17, 0
      %p91 = por %p89, %p90
      %s93 = sadd.s32 %s92, 1
      %p96 = scmp.eq.s32.totalorder %s11, 1
      %p97 = scmp.ne.s32.totalorder %s92, %s94
      %p98 = scmp.eq.s32.totalorder %s11, 0
      %p99 = por %p97, %p98
      %p100 = scmp.ne.s32.totalorder %s92, %s94
      %p101 = scmp.eq.s32.totalorder %s16, 1
      %p102 = por %p100, %p101
      %p103 = scmp.ne.s32.totalorder %s94, %s95
      %p104 = scmp.eq.s32.totalorder %s16, 0
      %p105 = por %p103, %p104
      %p106 = scmp.ne.s32.totalorder %s94, %s95
      %p107 = scmp.eq.s32.totalorder %s17, 1
      %p108 = por %p106, %p107
      %p110 = scmp.ne.s32.totalorder %s95, %s109
      %p111 = scmp.eq.s32.totalorder %s17, 0
      %p112 = por %p110, %p111
      %s113 = ssub.s32 %s11, %s18
      %p114 = scmp.eq.s32.totalorder %s113, 0
      %s116 = sadd.s32 %s115, 1
      %s117 = scalar_select %p114, %s115, %s116
      %p120 = pneg %p114
      %p121 = scmp.eq.s32.totalorder %s11, 1
      %p122 = por %p120, %p121
      %p123 = scmp.ne.s32.totalorder %s115, %s118
      %p124 = scmp.eq.s32.totalorder %s11, 0
      %p125 = por %p123, %p124
      %p126 = scmp.ne.s32.totalorder %s115, %s118
      %p127 = scmp.eq.s32.totalorder %s16, 1
      %p128 = por %p126, %p127
      %p129 = scmp.ne.s32.totalorder %s118, %s119
      %p130 = scmp.eq.s32.totalorder %s16, 0
      %p131 = por %p129, %p130
      %p132 = scmp.ne.s32.totalorder %s118, %s119
      %p133 = scmp.eq.s32.totalorder %s17, 1
      %p134 = por %p132, %p133
      %p136 = scmp.ne.s32.totalorder %s119, %s135
      %p137 = scmp.eq.s32.totalorder %s17, 0
      %p138 = por %p136, %p137
      %p139 = scmp.le.s32.totalorder 1, %s11
      %p140 = scmp.lt.s32.totalorder %s11, 3
      %p141 = pnand %p139, %p140
      %p142 = pneg %p141
      // Predicated region
      $region9: #{tpu_custom_call.1} parent=5 // pred_check
        _
      $region10: #{tpu_custom_call.1} parent=5 // pred_check_branch
        %144 = sbr.rel (%p141) target = $region12
      $region11: #{tpu_custom_call.1} parent=5 // pred_region
        %s145 = ssub.s32 %s11, 1
        // Predicated region
        $region13: #{tpu_custom_call.1} parent=11 // pred_check
          %p146 = pneg %p84
        $region14: #{tpu_custom_call.1} parent=11 // pred_check_branch
          %148 = sbr.rel (%p146) target = $region16
        $region15: #{tpu_custom_call.1} parent=11 // pred_region
          %s150 = ssub.s32 32768, 32768
          %151 = vsyncadd [#allocation4], %s150
          %s152 = sshll.u32 [#allocation3], 4
          %s153 = int_to_ptr.vmem [resolvable:$true] %s152
          %158 = dma.hbm_to_vmem [thread:$0]  %s2, 32768, %s153, [#allocation4], 1024, 1024, 64
        $region16: #{tpu_custom_call.1} parent=11 // pred_fallthru
          _
        // Predicated region
        $region17: #{tpu_custom_call.1} parent=11 // pred_check
          %p159 = pneg %p105
        $region18: #{tpu_custom_call.1} parent=11 // pred_check_branch
          %161 = sbr.rel (%p159) target = $region20
        $region19: #{tpu_custom_call.1} parent=11 // pred_region
          _
        $region20: #{tpu_custom_call.1} parent=11 // pred_fallthru
          _
      $region12: #{tpu_custom_call.1} parent=5 // pred_fallthru
        _
      %p162 = scmp.lt.s32.totalorder %s11, 2
      // Predicated region
      $region21: #{tpu_custom_call.1} parent=5 // pred_check
        %p163 = pneg %p162
      $region22: #{tpu_custom_call.1} parent=5 // pred_check_branch
        %165 = sbr.rel (%p163) target = $region24
      $region23: #{tpu_custom_call.1} parent=5 // pred_region
        // Predicated region
        $region25: #{tpu_custom_call.1} parent=23 // pred_check
          %p166 = pneg %p31
        $region26: #{tpu_custom_call.1} parent=23 // pred_check_branch
          %168 = sbr.rel (%p166) target = $region28
        $region27: #{tpu_custom_call.1} parent=23 // pred_region
          %s169 = smul.u32 13, %s11
          %p170 = scmp.lt.s32.totalorder %s169, 25
          %s171 = scalar_select %p170, %s169, 25
          %s172 = smul.addr %s171, 8
          %s173 = scalar_lea.vmem %s0, %s172
          %s174 = smul.u32 13, %s11
        $region28: #{tpu_custom_call.1} parent=23 // pred_fallthru
          _
        // Predicated region
        $region29: #{tpu_custom_call.1} parent=23 // pred_check
          %p175 = pneg %p57
        $region30: #{tpu_custom_call.1} parent=23 // pred_check_branch
          %177 = sbr.rel (%p175) target = $region32
        $region31: #{tpu_custom_call.1} parent=23 // pred_region
          %s178 = sand.u32 %s47, 1
          %s179 = sand.u32 %s47, 1
          %s180 = smul.addr %s179, 312
          %s181 = scalar_lea.vmem [#allocation2], %s180
          %s182 = smul.u32 13, %s11
          %s183 = smul.addr %s182, 8
          %s184 = scalar_lea.vmem %s1, %s183
          // Predicated region
          $region33: #{tpu_custom_call.1} parent=31 // pred_check
            _
          $region34: #{tpu_custom_call.1} parent=31 // pred_check_branch
            %186 = sbr.rel (0) target = $region36
          $region35: #{tpu_custom_call.1} parent=31 // pred_region
            // Predicated region
            $region37: #{tpu_custom_call.1} parent=35 // pred_check
              _
            $region38: #{tpu_custom_call.1} parent=35 // pred_check_branch
              %188 = sbr.rel (0) target = $region40
            $region39: #{tpu_custom_call.1} parent=35 // pred_region
              // Predicated region
              $region52: #{tpu_custom_call.1} parent=39 // pred_check
                _
              $region53: #{tpu_custom_call.1} parent=39 // pred_check_branch
                %280 = sbr.rel (0) target = $region55
              $region54: #{tpu_custom_call.1} parent=39 // pred_region
                loop: start=0, step=1, limit=1
                $region56: #{tpu_custom_call.1} parent=54 // loop_pre_header
                  _
                $region57: #{tpu_custom_call.1} parent=54 // loop_header
                  %s282 = sphi 0, %s286
                  %p283 = scmp.ge.s32.totalorder %s282, 1
                  %s287 = sphi %s184, %s184
                  %s288 = sphi %s181, %s181
                $region58: #{tpu_custom_call.1} parent=54 // loop_header_branch
                  %285 = sbr.rel (%p283) target = $region62
                $region59: #{tpu_custom_call.1} parent=54 // loop_body
                  %v289 = vld [vmem:[%s287] sm:$0xff]
                  %290 = vst [vmem:[%s288] sm:$0xff] %v289
                  %v291 = vld [vmem:[%s287 + $0x8] sm:$0xff]
                  %292 = vst [vmem:[%s288 + $0x8] sm:$0xff] %v291
                  %v293 = vld [vmem:[%s287 + $0x10] sm:$0xff]
                  %294 = vst [vmem:[%s288 + $0x10] sm:$0xff] %v293
                  %v295 = vld [vmem:[%s287 + $0x18] sm:$0xff]
                  %296 = vst [vmem:[%s288 + $0x18] sm:$0xff] %v295
                  %v297 = vld [vmem:[%s287 + $0x20] sm:$0xff]
                  %298 = vst [vmem:[%s288 + $0x20] sm:$0xff] %v297
                  %v299 = vld [vmem:[%s287 + $0x28] sm:$0xff]
                  %300 = vst [vmem:[%s288 + $0x28] sm:$0xff] %v299
                  %v301 = vld [vmem:[%s287 + $0x30] sm:$0xff]
                  %302 = vst [vmem:[%s288 + $0x30] sm:$0xff] %v301
                  %v303 = vld [vmem:[%s287 + $0x38] sm:$0xff]
                  %304 = vst [vmem:[%s288 + $0x38] sm:$0xff] %v303
                  %v305 = vld [vmem:[%s287 + $0x40] sm:$0xff]
                  %306 = vst [vmem:[%s288 + $0x40] sm:$0xff] %v305
                  %v307 = vld [vmem:[%s287 + $0x48] sm:$0xff]
                  %308 = vst [vmem:[%s288 + $0x48] sm:$0xff] %v307
                  %v309 = vld [vmem:[%s287 + $0x50] sm:$0xff]
                  %310 = vst [vmem:[%s288 + $0x50] sm:$0xff] %v309
                  %v311 = vld [vmem:[%s287 + $0x58] sm:$0xff]
                  %312 = vst [vmem:[%s288 + $0x58] sm:$0xff] %v311
                  %v313 = vld [vmem:[%s287 + $0x60] sm:$0xff]
                  %314 = vst [vmem:[%s288 + $0x60] sm:$0xff] %v313
                  %v315 = vld [vmem:[%s287 + $0xd0] sm:$0xff]
                  %316 = vst [vmem:[%s288 + $0x68] sm:$0xff] %v315
                  %v317 = vld [vmem:[%s287 + $0xd8] sm:$0xff]
                  %318 = vst [vmem:[%s288 + $0x70] sm:$0xff] %v317
                  %v319 = vld [vmem:[%s287 + $0xe0] sm:$0xff]
                  %320 = vst [vmem:[%s288 + $0x78] sm:$0xff] %v319
                  %v321 = vld [vmem:[%s287 + $0xe8] sm:$0xff]
                  %322 = vst [vmem:[%s288 + $0x80] sm:$0xff] %v321
                  %v323 = vld [vmem:[%s287 + $0xf0] sm:$0xff]
                  %324 = vst [vmem:[%s288 + $0x88] sm:$0xff] %v323
                  %v325 = vld [vmem:[%s287 + $0xf8] sm:$0xff]
                  %326 = vst [vmem:[%s288 + $0x90] sm:$0xff] %v325
                  %v327 = vld [vmem:[%s287 + $0x100] sm:$0xff]
                  %328 = vst [vmem:[%s288 + $0x98] sm:$0xff] %v327
                  %v329 = vld [vmem:[%s287 + $0x108] sm:$0xff]
                  %330 = vst [vmem:[%s288 + $0xa0] sm:$0xff] %v329
                  %v331 = vld [vmem:[%s287 + $0x110] sm:$0xff]
                  %332 = vst [vmem:[%s288 + $0xa8] sm:$0xff] %v331
                  %v333 = vld [vmem:[%s287 + $0x118] sm:$0xff]
                  %334 = vst [vmem:[%s288 + $0xb0] sm:$0xff] %v333
                  %v335 = vld [vmem:[%s287 + $0x120] sm:$0xff]
                  %336 = vst [vmem:[%s288 + $0xb8] sm:$0xff] %v335
                  %v337 = vld [vmem:[%s287 + $0x128] sm:$0xff]
                  %338 = vst [vmem:[%s288 + $0xc0] sm:$0xff] %v337
                  %v339 = vld [vmem:[%s287 + $0x130] sm:$0xff]
                  %340 = vst [vmem:[%s288 + $0xc8] sm:$0xff] %v339
                  %v341 = vld [vmem:[%s287 + $0x1a0] sm:$0xff]
                  %342 = vst [vmem:[%s288 + $0xd0] sm:$0xff] %v341
                  %v343 = vld [vmem:[%s287 + $0x1a8] sm:$0xff]
                  %344 = vst [vmem:[%s288 + $0xd8] sm:$0xff] %v343
                  %v345 = vld [vmem:[%s287 + $0x1b0] sm:$0xff]
                  %346 = vst [vmem:[%s288 + $0xe0] sm:$0xff] %v345
                  %v347 = vld [vmem:[%s287 + $0x1b8] sm:$0xff]
                  %348 = vst [vmem:[%s288 + $0xe8] sm:$0xff] %v347
                  %v349 = vld [vmem:[%s287 + $0x1c0] sm:$0xff]
                  %350 = vst [vmem:[%s288 + $0xf0] sm:$0xff] %v349
                  %v351 = vld [vmem:[%s287 + $0x1c8] sm:$0xff]
                  %352 = vst [vmem:[%s288 + $0xf8] sm:$0xff] %v351
                  %v353 = vld [vmem:[%s287 + $0x1d0] sm:$0xff]
                  %354 = vst [vmem:[%s288 + $0x100] sm:$0xff] %v353
                  %v355 = vld [vmem:[%s287 + $0x1d8] sm:$0xff]
                  %356 = vst [vmem:[%s288 + $0x108] sm:$0xff] %v355
                  %v357 = vld [vmem:[%s287 + $0x1e0] sm:$0xff]
                  %358 = vst [vmem:[%s288 + $0x110] sm:$0xff] %v357
                  %v359 = vld [vmem:[%s287 + $0x1e8] sm:$0xff]
                  %360 = vst [vmem:[%s288 + $0x118] sm:$0xff] %v359
                  %v361 = vld [vmem:[%s287 + $0x1f0] sm:$0xff]
                  %362 = vst [vmem:[%s288 + $0x120] sm:$0xff] %v361
                  %v363 = vld [vmem:[%s287 + $0x1f8] sm:$0xff]
                  %364 = vst [vmem:[%s288 + $0x128] sm:$0xff] %v363
                  %v365 = vld [vmem:[%s287 + $0x200] sm:$0xff]
                  %366 = vst [vmem:[%s288 + $0x130] sm:$0xff] %v365
                $region60: #{tpu_custom_call.1} parent=54 // loop_footer
                  %s286 = sadd.s32 1, %s282
                $region61: #{tpu_custom_call.1} parent=54 // loop_footer_branch
                  %281 = sbr.rel target = $region57
                $region62: #{tpu_custom_call.1} parent=54 // loop_exit
                  _
              $region55: #{tpu_custom_call.1} parent=39 // pred_fallthru
                _
              // Predicated region
              $region63: #{tpu_custom_call.1} parent=39 // pred_check
                _
              $region64: #{tpu_custom_call.1} parent=39 // pred_check_branch
                %368 = sbr.rel target = $region66
              $region65: #{tpu_custom_call.1} parent=39 // pred_region
                _
              $region66: #{tpu_custom_call.1} parent=39 // pred_fallthru
                _
            $region40: #{tpu_custom_call.1} parent=35 // pred_fallthru
              _
            // Predicated region
            $region41: #{tpu_custom_call.1} parent=35 // pred_check
              _
            $region42: #{tpu_custom_call.1} parent=35 // pred_check_branch
              %190 = sbr.rel target = $region44
            $region43: #{tpu_custom_call.1} parent=35 // pred_region
              %s192 = ssub.s32 256, 1
              loop: start=0, step=1, limit=1
              $region45: #{tpu_custom_call.1} parent=43 // loop_pre_header
                _
              $region46: #{tpu_custom_call.1} parent=43 // loop_header
                %s194 = sphi 0, %s198
                %p195 = scmp.ge.s32.totalorder %s194, 1
                %s199 = sphi %s184, %s184
                %s200 = sphi %s181, %s181
              $region47: #{tpu_custom_call.1} parent=43 // loop_header_branch
                %197 = sbr.rel (%p195) target = $region51
              $region48: #{tpu_custom_call.1} parent=43 // loop_body
                %v201 = vld [vmem:[%s199] sm:%s192]
                %202 = vst [vmem:[%s200] sm:%s192] %v201
                %v203 = vld [vmem:[%s199 + $0x8] sm:%s192]
                %204 = vst [vmem:[%s200 + $0x8] sm:%s192] %v203
                %v205 = vld [vmem:[%s199 + $0x10] sm:%s192]
                %206 = vst [vmem:[%s200 + $0x10] sm:%s192] %v205
                %v207 = vld [vmem:[%s199 + $0x18] sm:%s192]
                %208 = vst [vmem:[%s200 + $0x18] sm:%s192] %v207
                %v209 = vld [vmem:[%s199 + $0x20] sm:%s192]
                %210 = vst [vmem:[%s200 + $0x20] sm:%s192] %v209
                %v211 = vld [vmem:[%s199 + $0x28] sm:%s192]
                %212 = vst [vmem:[%s200 + $0x28] sm:%s192] %v211
                %v213 = vld [vmem:[%s199 + $0x30] sm:%s192]
                %214 = vst [vmem:[%s200 + $0x30] sm:%s192] %v213
                %v215 = vld [vmem:[%s199 + $0x38] sm:%s192]
                %216 = vst [vmem:[%s200 + $0x38] sm:%s192] %v215
                %v217 = vld [vmem:[%s199 + $0x40] sm:%s192]
                %218 = vst [vmem:[%s200 + $0x40] sm:%s192] %v217
                %v219 = vld [vmem:[%s199 + $0x48] sm:%s192]
                %220 = vst [vmem:[%s200 + $0x48] sm:%s192] %v219
                %v221 = vld [vmem:[%s199 + $0x50] sm:%s192]
                %222 = vst [vmem:[%s200 + $0x50] sm:%s192] %v221
                %v223 = vld [vmem:[%s199 + $0x58] sm:%s192]
                %224 = vst [vmem:[%s200 + $0x58] sm:%s192] %v223
                %v225 = vld [vmem:[%s199 + $0x60] sm:%s192]
                %226 = vst [vmem:[%s200 + $0x60] sm:%s192] %v225
                %v227 = vld [vmem:[%s199 + $0xd0] sm:%s192]
                %228 = vst [vmem:[%s200 + $0x68] sm:%s192] %v227
                %v229 = vld [vmem:[%s199 + $0xd8] sm:%s192]
                %230 = vst [vmem:[%s200 + $0x70] sm:%s192] %v229
                %v231 = vld [vmem:[%s199 + $0xe0] sm:%s192]
                %232 = vst [vmem:[%s200 + $0x78] sm:%s192] %v231
                %v233 = vld [vmem:[%s199 + $0xe8] sm:%s192]
                %234 = vst [vmem:[%s200 + $0x80] sm:%s192] %v233
                %v235 = vld [vmem:[%s199 + $0xf0] sm:%s192]
                %236 = vst [vmem:[%s200 + $0x88] sm:%s192] %v235
                %v237 = vld [vmem:[%s199 + $0xf8] sm:%s192]
                %238 = vst [vmem:[%s200 + $0x90] sm:%s192] %v237
                %v239 = vld [vmem:[%s199 + $0x100] sm:%s192]
                %240 = vst [vmem:[%s200 + $0x98] sm:%s192] %v239
                %v241 = vld [vmem:[%s199 + $0x108] sm:%s192]
                %242 = vst [vmem:[%s200 + $0xa0] sm:%s192] %v241
                %v243 = vld [vmem:[%s199 + $0x110] sm:%s192]
                %244 = vst [vmem:[%s200 + $0xa8] sm:%s192] %v243
                %v245 = vld [vmem:[%s199 + $0x118] sm:%s192]
                %246 = vst [vmem:[%s200 + $0xb0] sm:%s192] %v245
                %v247 = vld [vmem:[%s199 + $0x120] sm:%s192]
                %248 = vst [vmem:[%s200 + $0xb8] sm:%s192] %v247
                %v249 = vld [vmem:[%s199 + $0x128] sm:%s192]
                %250 = vst [vmem:[%s200 + $0xc0] sm:%s192] %v249
                %v251 = vld [vmem:[%s199 + $0x130] sm:%s192]
                %252 = vst [vmem:[%s200 + $0xc8] sm:%s192] %v251
                %v253 = vld [vmem:[%s199 + $0x1a0] sm:%s192]
                %254 = vst [vmem:[%s200 + $0xd0] sm:%s192] %v253
                %v255 = vld [vmem:[%s199 + $0x1a8] sm:%s192]
                %256 = vst [vmem:[%s200 + $0xd8] sm:%s192] %v255
                %v257 = vld [vmem:[%s199 + $0x1b0] sm:%s192]
                %258 = vst [vmem:[%s200 + $0xe0] sm:%s192] %v257
                %v259 = vld [vmem:[%s199 + $0x1b8] sm:%s192]
                %260 = vst [vmem:[%s200 + $0xe8] sm:%s192] %v259
                %v261 = vld [vmem:[%s199 + $0x1c0] sm:%s192]
                %262 = vst [vmem:[%s200 + $0xf0] sm:%s192] %v261
                %v263 = vld [vmem:[%s199 + $0x1c8] sm:%s192]
                %264 = vst [vmem:[%s200 + $0xf8] sm:%s192] %v263
                %v265 = vld [vmem:[%s199 + $0x1d0] sm:%s192]
                %266 = vst [vmem:[%s200 + $0x100] sm:%s192] %v265
                %v267 = vld [vmem:[%s199 + $0x1d8] sm:%s192]
                %268 = vst [vmem:[%s200 + $0x108] sm:%s192] %v267
                %v269 = vld [vmem:[%s199 + $0x1e0] sm:%s192]
                %270 = vst [vmem:[%s200 + $0x110] sm:%s192] %v269
                %v271 = vld [vmem:[%s199 + $0x1e8] sm:%s192]
                %272 = vst [vmem:[%s200 + $0x118] sm:%s192] %v271
                %v273 = vld [vmem:[%s199 + $0x1f0] sm:%s192]
                %274 = vst [vmem:[%s200 + $0x120] sm:%s192] %v273
                %v275 = vld [vmem:[%s199 + $0x1f8] sm:%s192]
                %276 = vst [vmem:[%s200 + $0x128] sm:%s192] %v275
                %v277 = vld [vmem:[%s199 + $0x200] sm:%s192]
                %278 = vst [vmem:[%s200 + $0x130] sm:%s192] %v277
              $region49: #{tpu_custom_call.1} parent=43 // loop_footer
                %s198 = sadd.s32 1, %s194
              $region50: #{tpu_custom_call.1} parent=43 // loop_footer_branch
                %193 = sbr.rel target = $region46
              $region51: #{tpu_custom_call.1} parent=43 // loop_exit
                _
            $region44: #{tpu_custom_call.1} parent=35 // pred_fallthru
              _
          $region36: #{tpu_custom_call.1} parent=31 // pred_fallthru
            _
          %369 = vnop
        $region32: #{tpu_custom_call.1} parent=23 // pred_fallthru
          _
      $region24: #{tpu_custom_call.1} parent=5 // pred_fallthru
        _
      %p370 = scmp.le.s32.totalorder 1, %s11
      %p371 = scmp.lt.s32.totalorder %s11, 3
      %p372 = pnand %p370, %p371
      %p373 = pneg %p372
      // Predicated region
      $region67: #{tpu_custom_call.1} parent=5 // pred_check
        _
      $region68: #{tpu_custom_call.1} parent=5 // pred_check_branch
        %375 = sbr.rel (%p372) target = $region70
      $region69: #{tpu_custom_call.1} parent=5 // pred_region
        %s376 = ssub.s32 %s11, 1
        %s377 = sand.u32 %s50, 1
        %s378 = sand.u32 %s50, 1
        %s379 = smul.addr %s378, 312
        %s380 = scalar_lea.vmem [#allocation2], %s379
        // Predicated region
        $region71: #{tpu_custom_call.1} parent=69 // pred_check
          %p381 = pneg %p63
        $region72: #{tpu_custom_call.1} parent=69 // pred_check_branch
          %383 = sbr.rel (%p381) target = $region74
        $region73: #{tpu_custom_call.1} parent=69 // pred_region
          _
        $region74: #{tpu_custom_call.1} parent=69 // pred_fallthru
          _
        // Predicated region
        $region75: #{tpu_custom_call.1} parent=69 // pred_check
          %p384 = pneg %p84
        $region76: #{tpu_custom_call.1} parent=69 // pred_check_branch
          %386 = sbr.rel (%p384) target = $region78
        $region77: #{tpu_custom_call.1} parent=69 // pred_region
          %387 = dma.done [#allocation4], 32768
        $region78: #{tpu_custom_call.1} parent=69 // pred_fallthru
          _
        %s388 = smul.u32 13, %s16
        %p389 = scmp.lt.s32.totalorder %s388, 25
        %s390 = scalar_select %p389, %s388, 25
        %s391 = smul.addr %s390, 8
        %s392 = scalar_lea.vmem %s0, %s391
        %p393 = pneg %p37
        %p394 = pneg %p34
        %s395 = sand.u32 %s50, 1
        %s396 = sand.u32 %s50, 1
        %s397 = smul.addr %s396, 312
        %s398 = scalar_lea.vmem [#allocation2], %s397
        %p399 = pneg %p63
        %p400 = pneg %p60
        %p401 = pneg %p84
        %p402 = pneg %p81
        %p403 = pneg %p105
        %p404 = pneg %p102
        %p405 = pneg %p131
        %p406 = pneg %p128
        %s407 = smul.u32 13, %s16
        %p408 = scmp.lt.s32.totalorder %s407, 25
        %s409 = scalar_select %p408, %s407, 25
        %s410 = smul.addr %s409, 8
        %s411 = scalar_lea.vmem %s4, %s410
        %s412 = smul.u32 13, %s16
        %p413 = scmp.lt.s32.totalorder %s412, 25
        %s414 = scalar_select %p413, %s412, 25
        %s415 = smul.addr %s414, 8
        %s416 = scalar_lea.vmem %s0, %s415
        %s417 = smul.u32 13, %s16
        %s418 = smul.u32 13, %s16
        %s419 = smul.u32 13, %s16
        %p420 = scmp.lt.s32.totalorder %s419, 25
        %s421 = scalar_select %p420, %s419, 25
        %s422 = smul.addr %s421, 8
        %s423 = scalar_lea.vmem %s4, %s422
        %s424 = smul.u32 13, %s16
        %v425 = vld [vmem:[%s380] sm:$0xff]
        %v426 = vld [vmem:[%s380 + $0x8] sm:$0xff]
        %v427 = vld [vmem:[%s380 + $0x10] sm:$0xff]
        %v428 = vld [vmem:[%s380 + $0x18] sm:$0xff]
        %v429 = vld [vmem:[%s380 + $0x20] sm:$0xff]
        %v430 = vld [vmem:[%s380 + $0x28] sm:$0xff]
        %v431 = vld [vmem:[%s380 + $0x30] sm:$0xff]
        %v432 = vld [vmem:[%s380 + $0x38] sm:$0xff]
        %v433 = vld [vmem:[%s380 + $0x40] sm:$0xff]
        %v434 = vld [vmem:[%s380 + $0x48] sm:$0xff]
        %v435 = vld [vmem:[%s380 + $0x50] sm:$0xff]
        %v436 = vld [vmem:[%s380 + $0x58] sm:$0xff]
        %v437 = vld [vmem:[%s380 + $0x60] sm:$0xff]
        %s438 = scalar_lea.vmem %s380, 208 [#allocation2]
        %v439 = vld [vmem:[%s438] sm:$0xff]
        %v440 = vld [vmem:[%s438 + $0x8] sm:$0xff]
        %v441 = vld [vmem:[%s438 + $0x10] sm:$0xff]
        %v442 = vld [vmem:[%s438 + $0x18] sm:$0xff]
        %v443 = vld [vmem:[%s438 + $0x20] sm:$0xff]
        %v444 = vld [vmem:[%s438 + $0x28] sm:$0xff]
        %v445 = vld [vmem:[%s438 + $0x30] sm:$0xff]
        %v446 = vld [vmem:[%s438 + $0x38] sm:$0xff]
        %v447 = vld [vmem:[%s438 + $0x40] sm:$0xff]
        %v448 = vld [vmem:[%s438 + $0x48] sm:$0xff]
        %v449 = vld [vmem:[%s438 + $0x50] sm:$0xff]
        %v450 = vld [vmem:[%s438 + $0x58] sm:$0xff]
        %v451 = vld [vmem:[%s438 + $0x60] sm:$0xff]
        %v452 = vmul.f32 %v425, %v439
        %v453 = vmul.f32 %v426, %v440
        %v454 = vmul.f32 %v427, %v441
        %v455 = vmul.f32 %v428, %v442
        %v456 = vmul.f32 %v429, %v443
        %v457 = vmul.f32 %v430, %v444
        %v458 = vmul.f32 %v431, %v445
        %v459 = vmul.f32 %v432, %v446
        %v460 = vmul.f32 %v433, %v447
        %v461 = vmul.f32 %v434, %v448
        %v462 = vmul.f32 %v435, %v449
        %v463 = vmul.f32 %v436, %v450
        %v464 = vmul.f32 %v437, %v451
        %v465 = vld [vmem:[%s416] sm:$0xff]
        %v466 = vld [vmem:[%s416 + $0x8] sm:$0xff]
        %v467 = vld [vmem:[%s416 + $0x10] sm:$0xff]
        %v468 = vld [vmem:[%s416 + $0x18] sm:$0xff]
        %v469 = vld [vmem:[%s416 + $0x20] sm:$0xff]
        %v470 = vld [vmem:[%s416 + $0x28] sm:$0xff]
        %v471 = vld [vmem:[%s416 + $0x30] sm:$0xff]
        %v472 = vld [vmem:[%s416 + $0x38] sm:$0xff]
        %v473 = vld [vmem:[%s416 + $0x40] sm:$0xff]
        %v474 = vld [vmem:[%s416 + $0x48] sm:$0xff]
        %v475 = vld [vmem:[%s416 + $0x50] sm:$0xff]
        %v476 = vld [vmem:[%s416 + $0x58] sm:$0xff]
        %v477 = vld [vmem:[%s416 + $0x60] sm:$0xff]
        %v478 = vlaneseq
        %v479 = vand.u32 %v478, 127
        %v480 = vadd.s32 %v479, 128
        %481 = vset.pattern.permute.xlu0 0
        %482 = vperm.xlu0 %481, %v465
        %v483 = vpop.permute.xlu0 %482
        %484 = vset.pattern.permute.xlu0 0
        %485 = vperm.xlu0 %484, %v466
        %v486 = vpop.permute.xlu0 %485
        %487 = vset.pattern.permute.xlu0 0
        %488 = vperm.xlu0 %487, %v467
        %v489 = vpop.permute.xlu0 %488
        %490 = vset.pattern.permute.xlu0 0
        %491 = vperm.xlu0 %490, %v468
        %v492 = vpop.permute.xlu0 %491
        %493 = vset.pattern.permute.xlu0 0
        %494 = vperm.xlu0 %493, %v469
        %v495 = vpop.permute.xlu0 %494
        %496 = vset.pattern.permute.xlu0 0
        %497 = vperm.xlu0 %496, %v470
        %v498 = vpop.permute.xlu0 %497
        %499 = vset.pattern.permute.xlu0 0
        %500 = vperm.xlu0 %499, %v471
        %v501 = vpop.permute.xlu0 %500
        %502 = vset.pattern.permute.xlu0 0
        %503 = vperm.xlu0 %502, %v472
        %v504 = vpop.permute.xlu0 %503
        %505 = vset.pattern.permute.xlu0 0
        %506 = vperm.xlu0 %505, %v473
        %v507 = vpop.permute.xlu0 %506
        %508 = vset.pattern.permute.xlu0 0
        %509 = vperm.xlu0 %508, %v474
        %v510 = vpop.permute.xlu0 %509
        %511 = vset.pattern.permute.xlu0 0
        %512 = vperm.xlu0 %511, %v475
        %v513 = vpop.permute.xlu0 %512
        %514 = vset.pattern.permute.xlu0 0
        %515 = vperm.xlu0 %514, %v476
        %v516 = vpop.permute.xlu0 %515
        %517 = vset.pattern.permute.xlu0 0
        %518 = vperm.xlu0 %517, %v477
        %v519 = vpop.permute.xlu0 %518
        %vm520 = vcmp.eq.s32.totalorder %v483, %v479
        %vm521 = vcmp.eq.s32.totalorder %v483, %v480
        %vm522 = vcmp.eq.s32.totalorder %v486, %v479
        %vm523 = vcmp.eq.s32.totalorder %v486, %v480
        %vm524 = vcmp.eq.s32.totalorder %v489, %v479
        %vm525 = vcmp.eq.s32.totalorder %v489, %v480
        %vm526 = vcmp.eq.s32.totalorder %v492, %v479
        %vm527 = vcmp.eq.s32.totalorder %v492, %v480
        %vm528 = vcmp.eq.s32.totalorder %v495, %v479
        %vm529 = vcmp.eq.s32.totalorder %v495, %v480
        %vm530 = vcmp.eq.s32.totalorder %v498, %v479
        %vm531 = vcmp.eq.s32.totalorder %v498, %v480
        %vm532 = vcmp.eq.s32.totalorder %v501, %v479
        %vm533 = vcmp.eq.s32.totalorder %v501, %v480
        %vm534 = vcmp.eq.s32.totalorder %v504, %v479
        %vm535 = vcmp.eq.s32.totalorder %v504, %v480
        %vm536 = vcmp.eq.s32.totalorder %v507, %v479
        %vm537 = vcmp.eq.s32.totalorder %v507, %v480
        %vm538 = vcmp.eq.s32.totalorder %v510, %v479
        %vm539 = vcmp.eq.s32.totalorder %v510, %v480
        %vm540 = vcmp.eq.s32.totalorder %v513, %v479
        %vm541 = vcmp.eq.s32.totalorder %v513, %v480
        %vm542 = vcmp.eq.s32.totalorder %v516, %v479
        %vm543 = vcmp.eq.s32.totalorder %v516, %v480
        %vm544 = vcmp.eq.s32.totalorder %v519, %v479
        %vm545 = vcmp.eq.s32.totalorder %v519, %v480
        %v546 = vsel %vm520, 1, 0
        %v547 = vsel %vm521, 1, 0
        %v548 = vsel %vm522, 1, 0
        %v549 = vsel %vm523, 1, 0
        %v550 = vsel %vm524, 1, 0
        %v551 = vsel %vm525, 1, 0
        %v552 = vsel %vm526, 1, 0
        %v553 = vsel %vm527, 1, 0
        %v554 = vsel %vm528, 1, 0
        %v555 = vsel %vm529, 1, 0
        %v556 = vsel %vm530, 1, 0
        %v557 = vsel %vm531, 1, 0
        %v558 = vsel %vm532, 1, 0
        %v559 = vsel %vm533, 1, 0
        %v560 = vsel %vm534, 1, 0
        %v561 = vsel %vm535, 1, 0
        %v562 = vsel %vm536, 1, 0
        %v563 = vsel %vm537, 1, 0
        %v564 = vsel %vm538, 1, 0
        %v565 = vsel %vm539, 1, 0
        %v566 = vsel %vm540, 1, 0
        %v567 = vsel %vm541, 1, 0
        %v568 = vsel %vm542, 1, 0
        %v569 = vsel %vm543, 1, 0
        %v570 = vsel %vm544, 1, 0
        %v571 = vsel %vm545, 1, 0
        %v572 = vcvt.s32.f32 %v546
        %v573 = vcvt.s32.f32 %v547
        %v574 = vcvt.s32.f32 %v548
        %v575 = vcvt.s32.f32 %v549
        %v576 = vcvt.s32.f32 %v550
        %v577 = vcvt.s32.f32 %v551
        %v578 = vcvt.s32.f32 %v552
        %v579 = vcvt.s32.f32 %v553
        %v580 = vcvt.s32.f32 %v554
        %v581 = vcvt.s32.f32 %v555
        %v582 = vcvt.s32.f32 %v556
        %v583 = vcvt.s32.f32 %v557
        %v584 = vcvt.s32.f32 %v558
        %v585 = vcvt.s32.f32 %v559
        %v586 = vcvt.s32.f32 %v560
        %v587 = vcvt.s32.f32 %v561
        %v588 = vcvt.s32.f32 %v562
        %v589 = vcvt.s32.f32 %v563
        %v590 = vcvt.s32.f32 %v564
        %v591 = vcvt.s32.f32 %v565
        %v592 = vcvt.s32.f32 %v566
        %v593 = vcvt.s32.f32 %v567
        %v594 = vcvt.s32.f32 %v568
        %v595 = vcvt.s32.f32 %v569
        %v596 = vcvt.s32.f32 %v570
        %v597 = vcvt.s32.f32 %v571
        %v598 = vld [vmem:[#allocation3] sm:$0xff]
        %v599 = vld [vmem:[#allocation3 + $0x8] sm:$0xff]
        %v600 = vld [vmem:[#allocation3 + $0x10] sm:$0xff]
        %v601 = vld [vmem:[#allocation3 + $0x18] sm:$0xff]
        %v602 = vld [vmem:[#allocation3 + $0x20] sm:$0xff]
        %v603 = vld [vmem:[#allocation3 + $0x28] sm:$0xff]
        %v604 = vld [vmem:[#allocation3 + $0x30] sm:$0xff]
        %v605 = vld [vmem:[#allocation3 + $0x38] sm:$0xff]
        %v606 = vld [vmem:[#allocation3 + $0x40] sm:$0xff]
        %v607 = vld [vmem:[#allocation3 + $0x48] sm:$0xff]
        %v608 = vld [vmem:[#allocation3 + $0x50] sm:$0xff]
        %v609 = vld [vmem:[#allocation3 + $0x58] sm:$0xff]
        %v610 = vld [vmem:[#allocation3 + $0x60] sm:$0xff]
        %v611 = vld [vmem:[#allocation3 + $0x68] sm:$0xff]
        %v612 = vld [vmem:[#allocation3 + $0x70] sm:$0xff]
        %v613 = vld [vmem:[#allocation3 + $0x78] sm:$0xff]
        %v614 = vld [vmem:[#allocation3 + $0x80] sm:$0xff]
        %v615 = vld [vmem:[#allocation3 + $0x88] sm:$0xff]
        %v616 = vld [vmem:[#allocation3 + $0x90] sm:$0xff]
        %v617 = vld [vmem:[#allocation3 + $0x98] sm:$0xff]
        %v618 = vld [vmem:[#allocation3 + $0xa0] sm:$0xff]
        %v619 = vld [vmem:[#allocation3 + $0xa8] sm:$0xff]
        %v620 = vld [vmem:[#allocation3 + $0xb0] sm:$0xff]
        %v621 = vld [vmem:[#allocation3 + $0xb8] sm:$0xff]
        %v622 = vld [vmem:[#allocation3 + $0xc0] sm:$0xff]
        %v623 = vld [vmem:[#allocation3 + $0xc8] sm:$0xff]
        %v624 = vld [vmem:[#allocation3 + $0xd0] sm:$0xff]
        %v625 = vld [vmem:[#allocation3 + $0xd8] sm:$0xff]
        %v626 = vld [vmem:[#allocation3 + $0xe0] sm:$0xff]
        %v627 = vld [vmem:[#allocation3 + $0xe8] sm:$0xff]
        %v628 = vld [vmem:[#allocation3 + $0xf0] sm:$0xff]
        %v629 = vld [vmem:[#allocation3 + $0xf8] sm:$0xff]
        %v630 = vld [vmem:[#allocation3 + $0x100] sm:$0xff]
        %v631 = vld [vmem:[#allocation3 + $0x108] sm:$0xff]
        %v632 = vld [vmem:[#allocation3 + $0x110] sm:$0xff]
        %v633 = vld [vmem:[#allocation3 + $0x118] sm:$0xff]
        %v634 = vld [vmem:[#allocation3 + $0x120] sm:$0xff]
        %v635 = vld [vmem:[#allocation3 + $0x128] sm:$0xff]
        %v636 = vld [vmem:[#allocation3 + $0x130] sm:$0xff]
        %v637 = vld [vmem:[#allocation3 + $0x138] sm:$0xff]
        %v638 = vld [vmem:[#allocation3 + $0x140] sm:$0xff]
        %v639 = vld [vmem:[#allocation3 + $0x148] sm:$0xff]
        %v640 = vld [vmem:[#allocation3 + $0x150] sm:$0xff]
        %v641 = vld [vmem:[#allocation3 + $0x158] sm:$0xff]
        %v642 = vld [vmem:[#allocation3 + $0x160] sm:$0xff]
        %v643 = vld [vmem:[#allocation3 + $0x168] sm:$0xff]
        %v644 = vld [vmem:[#allocation3 + $0x170] sm:$0xff]
        %v645 = vld [vmem:[#allocation3 + $0x178] sm:$0xff]
        %v646 = vld [vmem:[#allocation3 + $0x180] sm:$0xff]
        %v647 = vld [vmem:[#allocation3 + $0x188] sm:$0xff]
        %v648 = vld [vmem:[#allocation3 + $0x190] sm:$0xff]
        %v649 = vld [vmem:[#allocation3 + $0x198] sm:$0xff]
        %v650 = vld [vmem:[#allocation3 + $0x1a0] sm:$0xff]
        %v651 = vld [vmem:[#allocation3 + $0x1a8] sm:$0xff]
        %v652 = vld [vmem:[#allocation3 + $0x1b0] sm:$0xff]
        %v653 = vld [vmem:[#allocation3 + $0x1b8] sm:$0xff]
        %v654 = vld [vmem:[#allocation3 + $0x1c0] sm:$0xff]
        %v655 = vld [vmem:[#allocation3 + $0x1c8] sm:$0xff]
        %v656 = vld [vmem:[#allocation3 + $0x1d0] sm:$0xff]
        %v657 = vld [vmem:[#allocation3 + $0x1d8] sm:$0xff]
        %v658 = vld [vmem:[#allocation3 + $0x1e0] sm:$0xff]
        %v659 = vld [vmem:[#allocation3 + $0x1e8] sm:$0xff]
        %v660 = vld [vmem:[#allocation3 + $0x1f0] sm:$0xff]
        %v661 = vld [vmem:[#allocation3 + $0x1f8] sm:$0xff]
        %v662 = vld [vmem:[#allocation3 + $0x200] sm:$0xff]
        %v663 = vld [vmem:[#allocation3 + $0x208] sm:$0xff]
        %v664 = vld [vmem:[#allocation3 + $0x210] sm:$0xff]
        %v665 = vld [vmem:[#allocation3 + $0x218] sm:$0xff]
        %v666 = vld [vmem:[#allocation3 + $0x220] sm:$0xff]
        %v667 = vld [vmem:[#allocation3 + $0x228] sm:$0xff]
        %v668 = vld [vmem:[#allocation3 + $0x230] sm:$0xff]
        %v669 = vld [vmem:[#allocation3 + $0x238] sm:$0xff]
        %v670 = vld [vmem:[#allocation3 + $0x240] sm:$0xff]
        %v671 = vld [vmem:[#allocation3 + $0x248] sm:$0xff]
        %v672 = vld [vmem:[#allocation3 + $0x250] sm:$0xff]
        %v673 = vld [vmem:[#allocation3 + $0x258] sm:$0xff]
        %v674 = vld [vmem:[#allocation3 + $0x260] sm:$0xff]
        %v675 = vld [vmem:[#allocation3 + $0x268] sm:$0xff]
        %v676 = vld [vmem:[#allocation3 + $0x270] sm:$0xff]
        %v677 = vld [vmem:[#allocation3 + $0x278] sm:$0xff]
        %v678 = vld [vmem:[#allocation3 + $0x280] sm:$0xff]
        %v679 = vld [vmem:[#allocation3 + $0x288] sm:$0xff]
        %v680 = vld [vmem:[#allocation3 + $0x290] sm:$0xff]
        %v681 = vld [vmem:[#allocation3 + $0x298] sm:$0xff]
        %v682 = vld [vmem:[#allocation3 + $0x2a0] sm:$0xff]
        %v683 = vld [vmem:[#allocation3 + $0x2a8] sm:$0xff]
        %v684 = vld [vmem:[#allocation3 + $0x2b0] sm:$0xff]
        %v685 = vld [vmem:[#allocation3 + $0x2b8] sm:$0xff]
        %v686 = vld [vmem:[#allocation3 + $0x2c0] sm:$0xff]
        %v687 = vld [vmem:[#allocation3 + $0x2c8] sm:$0xff]
        %v688 = vld [vmem:[#allocation3 + $0x2d0] sm:$0xff]
        %v689 = vld [vmem:[#allocation3 + $0x2d8] sm:$0xff]
        %v690 = vld [vmem:[#allocation3 + $0x2e0] sm:$0xff]
        %v691 = vld [vmem:[#allocation3 + $0x2e8] sm:$0xff]
        %v692 = vld [vmem:[#allocation3 + $0x2f0] sm:$0xff]
        %v693 = vld [vmem:[#allocation3 + $0x2f8] sm:$0xff]
        %v694 = vld [vmem:[#allocation3 + $0x300] sm:$0xff]
        %v695 = vld [vmem:[#allocation3 + $0x308] sm:$0xff]
        %v696 = vld [vmem:[#allocation3 + $0x310] sm:$0xff]
        %v697 = vld [vmem:[#allocation3 + $0x318] sm:$0xff]
        %v698 = vld [vmem:[#allocation3 + $0x320] sm:$0xff]
        %v699 = vld [vmem:[#allocation3 + $0x328] sm:$0xff]
        %v700 = vld [vmem:[#allocation3 + $0x330] sm:$0xff]
        %v701 = vld [vmem:[#allocation3 + $0x338] sm:$0xff]
        %v702 = vld [vmem:[#allocation3 + $0x340] sm:$0xff]
        %v703 = vld [vmem:[#allocation3 + $0x348] sm:$0xff]
        %v704 = vld [vmem:[#allocation3 + $0x350] sm:$0xff]
        %v705 = vld [vmem:[#allocation3 + $0x358] sm:$0xff]
        %v706 = vld [vmem:[#allocation3 + $0x360] sm:$0xff]
        %v707 = vld [vmem:[#allocation3 + $0x368] sm:$0xff]
        %v708 = vld [vmem:[#allocation3 + $0x370] sm:$0xff]
        %v709 = vld [vmem:[#allocation3 + $0x378] sm:$0xff]
        %v710 = vld [vmem:[#allocation3 + $0x380] sm:$0xff]
        %v711 = vld [vmem:[#allocation3 + $0x388] sm:$0xff]
        %v712 = vld [vmem:[#allocation3 + $0x390] sm:$0xff]
        %v713 = vld [vmem:[#allocation3 + $0x398] sm:$0xff]
        %v714 = vld [vmem:[#allocation3 + $0x3a0] sm:$0xff]
        %v715 = vld [vmem:[#allocation3 + $0x3a8] sm:$0xff]
        %v716 = vld [vmem:[#allocation3 + $0x3b0] sm:$0xff]
        %v717 = vld [vmem:[#allocation3 + $0x3b8] sm:$0xff]
        %v718 = vld [vmem:[#allocation3 + $0x3c0] sm:$0xff]
        %v719 = vld [vmem:[#allocation3 + $0x3c8] sm:$0xff]
        %v720 = vld [vmem:[#allocation3 + $0x3d0] sm:$0xff]
        %v721 = vld [vmem:[#allocation3 + $0x3d8] sm:$0xff]
        %v722 = vld [vmem:[#allocation3 + $0x3e0] sm:$0xff]
        %v723 = vld [vmem:[#allocation3 + $0x3e8] sm:$0xff]
        %v724 = vld [vmem:[#allocation3 + $0x3f0] sm:$0xff]
        %v725 = vld [vmem:[#allocation3 + $0x3f8] sm:$0xff]
        %v726 = vld [vmem:[#allocation3 + $0x400] sm:$0xff]
        %v727 = vld [vmem:[#allocation3 + $0x408] sm:$0xff]
        %v728 = vld [vmem:[#allocation3 + $0x410] sm:$0xff]
        %v729 = vld [vmem:[#allocation3 + $0x418] sm:$0xff]
        %v730 = vld [vmem:[#allocation3 + $0x420] sm:$0xff]
        %v731 = vld [vmem:[#allocation3 + $0x428] sm:$0xff]
        %v732 = vld [vmem:[#allocation3 + $0x430] sm:$0xff]
        %v733 = vld [vmem:[#allocation3 + $0x438] sm:$0xff]
        %v734 = vld [vmem:[#allocation3 + $0x440] sm:$0xff]
        %v735 = vld [vmem:[#allocation3 + $0x448] sm:$0xff]
        %v736 = vld [vmem:[#allocation3 + $0x450] sm:$0xff]
        %v737 = vld [vmem:[#allocation3 + $0x458] sm:$0xff]
        %v738 = vld [vmem:[#allocation3 + $0x460] sm:$0xff]
        %v739 = vld [vmem:[#allocation3 + $0x468] sm:$0xff]
        %v740 = vld [vmem:[#allocation3 + $0x470] sm:$0xff]
        %v741 = vld [vmem:[#allocation3 + $0x478] sm:$0xff]
        %v742 = vld [vmem:[#allocation3 + $0x480] sm:$0xff]
        %v743 = vld [vmem:[#allocation3 + $0x488] sm:$0xff]
        %v744 = vld [vmem:[#allocation3 + $0x490] sm:$0xff]
        %v745 = vld [vmem:[#allocation3 + $0x498] sm:$0xff]
        %v746 = vld [vmem:[#allocation3 + $0x4a0] sm:$0xff]
        %v747 = vld [vmem:[#allocation3 + $0x4a8] sm:$0xff]
        %v748 = vld [vmem:[#allocation3 + $0x4b0] sm:$0xff]
        %v749 = vld [vmem:[#allocation3 + $0x4b8] sm:$0xff]
        %v750 = vld [vmem:[#allocation3 + $0x4c0] sm:$0xff]
        %v751 = vld [vmem:[#allocation3 + $0x4c8] sm:$0xff]
        %v752 = vld [vmem:[#allocation3 + $0x4d0] sm:$0xff]
        %v753 = vld [vmem:[#allocation3 + $0x4d8] sm:$0xff]
        %v754 = vld [vmem:[#allocation3 + $0x4e0] sm:$0xff]
        %v755 = vld [vmem:[#allocation3 + $0x4e8] sm:$0xff]
        %v756 = vld [vmem:[#allocation3 + $0x4f0] sm:$0xff]
        %v757 = vld [vmem:[#allocation3 + $0x4f8] sm:$0xff]
        %v758 = vld [vmem:[#allocation3 + $0x500] sm:$0xff]
        %v759 = vld [vmem:[#allocation3 + $0x508] sm:$0xff]
        %v760 = vld [vmem:[#allocation3 + $0x510] sm:$0xff]
        %v761 = vld [vmem:[#allocation3 + $0x518] sm:$0xff]
        %v762 = vld [vmem:[#allocation3 + $0x520] sm:$0xff]
        %v763 = vld [vmem:[#allocation3 + $0x528] sm:$0xff]
        %v764 = vld [vmem:[#allocation3 + $0x530] sm:$0xff]
        %v765 = vld [vmem:[#allocation3 + $0x538] sm:$0xff]
        %v766 = vld [vmem:[#allocation3 + $0x540] sm:$0xff]
        %v767 = vld [vmem:[#allocation3 + $0x548] sm:$0xff]
        %v768 = vld [vmem:[#allocation3 + $0x550] sm:$0xff]
        %v769 = vld [vmem:[#allocation3 + $0x558] sm:$0xff]
        %v770 = vld [vmem:[#allocation3 + $0x560] sm:$0xff]
        %v771 = vld [vmem:[#allocation3 + $0x568] sm:$0xff]
        %v772 = vld [vmem:[#allocation3 + $0x570] sm:$0xff]
        %v773 = vld [vmem:[#allocation3 + $0x578] sm:$0xff]
        %v774 = vld [vmem:[#allocation3 + $0x580] sm:$0xff]
        %v775 = vld [vmem:[#allocation3 + $0x588] sm:$0xff]
        %v776 = vld [vmem:[#allocation3 + $0x590] sm:$0xff]
        %v777 = vld [vmem:[#allocation3 + $0x598] sm:$0xff]
        %v778 = vld [vmem:[#allocation3 + $0x5a0] sm:$0xff]
        %v779 = vld [vmem:[#allocation3 + $0x5a8] sm:$0xff]
        %v780 = vld [vmem:[#allocation3 + $0x5b0] sm:$0xff]
        %v781 = vld [vmem:[#allocation3 + $0x5b8] sm:$0xff]
        %v782 = vld [vmem:[#allocation3 + $0x5c0] sm:$0xff]
        %v783 = vld [vmem:[#allocation3 + $0x5c8] sm:$0xff]
        %v784 = vld [vmem:[#allocation3 + $0x5d0] sm:$0xff]
        %v785 = vld [vmem:[#allocation3 + $0x5d8] sm:$0xff]
        %v786 = vld [vmem:[#allocation3 + $0x5e0] sm:$0xff]
        %v787 = vld [vmem:[#allocation3 + $0x5e8] sm:$0xff]
        %v788 = vld [vmem:[#allocation3 + $0x5f0] sm:$0xff]
        %v789 = vld [vmem:[#allocation3 + $0x5f8] sm:$0xff]
        %v790 = vld [vmem:[#allocation3 + $0x600] sm:$0xff]
        %v791 = vld [vmem:[#allocation3 + $0x608] sm:$0xff]
        %v792 = vld [vmem:[#allocation3 + $0x610] sm:$0xff]
        %v793 = vld [vmem:[#allocation3 + $0x618] sm:$0xff]
        %v794 = vld [vmem:[#allocation3 + $0x620] sm:$0xff]
        %v795 = vld [vmem:[#allocation3 + $0x628] sm:$0xff]
        %v796 = vld [vmem:[#allocation3 + $0x630] sm:$0xff]
        %v797 = vld [vmem:[#allocation3 + $0x638] sm:$0xff]
        %v798 = vld [vmem:[#allocation3 + $0x640] sm:$0xff]
        %v799 = vld [vmem:[#allocation3 + $0x648] sm:$0xff]
        %v800 = vld [vmem:[#allocation3 + $0x650] sm:$0xff]
        %v801 = vld [vmem:[#allocation3 + $0x658] sm:$0xff]
        %v802 = vld [vmem:[#allocation3 + $0x660] sm:$0xff]
        %v803 = vld [vmem:[#allocation3 + $0x668] sm:$0xff]
        %v804 = vld [vmem:[#allocation3 + $0x670] sm:$0xff]
        %v805 = vld [vmem:[#allocation3 + $0x678] sm:$0xff]
        %v806 = vld [vmem:[#allocation3 + $0x680] sm:$0xff]
        %v807 = vld [vmem:[#allocation3 + $0x688] sm:$0xff]
        %v808 = vld [vmem:[#allocation3 + $0x690] sm:$0xff]
        %v809 = vld [vmem:[#allocation3 + $0x698] sm:$0xff]
        %v810 = vld [vmem:[#allocation3 + $0x6a0] sm:$0xff]
        %v811 = vld [vmem:[#allocation3 + $0x6a8] sm:$0xff]
        %v812 = vld [vmem:[#allocation3 + $0x6b0] sm:$0xff]
        %v813 = vld [vmem:[#allocation3 + $0x6b8] sm:$0xff]
        %v814 = vld [vmem:[#allocation3 + $0x6c0] sm:$0xff]
        %v815 = vld [vmem:[#allocation3 + $0x6c8] sm:$0xff]
        %v816 = vld [vmem:[#allocation3 + $0x6d0] sm:$0xff]
        %v817 = vld [vmem:[#allocation3 + $0x6d8] sm:$0xff]
        %v818 = vld [vmem:[#allocation3 + $0x6e0] sm:$0xff]
        %v819 = vld [vmem:[#allocation3 + $0x6e8] sm:$0xff]
        %v820 = vld [vmem:[#allocation3 + $0x6f0] sm:$0xff]
        %v821 = vld [vmem:[#allocation3 + $0x6f8] sm:$0xff]
        %v822 = vld [vmem:[#allocation3 + $0x700] sm:$0xff]
        %v823 = vld [vmem:[#allocation3 + $0x708] sm:$0xff]
        %v824 = vld [vmem:[#allocation3 + $0x710] sm:$0xff]
        %v825 = vld [vmem:[#allocation3 + $0x718] sm:$0xff]
        %v826 = vld [vmem:[#allocation3 + $0x720] sm:$0xff]
        %v827 = vld [vmem:[#allocation3 + $0x728] sm:$0xff]
        %v828 = vld [vmem:[#allocation3 + $0x730] sm:$0xff]
        %v829 = vld [vmem:[#allocation3 + $0x738] sm:$0xff]
        %v830 = vld [vmem:[#allocation3 + $0x740] sm:$0xff]
        %v831 = vld [vmem:[#allocation3 + $0x748] sm:$0xff]
        %v832 = vld [vmem:[#allocation3 + $0x750] sm:$0xff]
        %v833 = vld [vmem:[#allocation3 + $0x758] sm:$0xff]
        %v834 = vld [vmem:[#allocation3 + $0x760] sm:$0xff]
        %v835 = vld [vmem:[#allocation3 + $0x768] sm:$0xff]
        %v836 = vld [vmem:[#allocation3 + $0x770] sm:$0xff]
        %v837 = vld [vmem:[#allocation3 + $0x778] sm:$0xff]
        %v838 = vld [vmem:[#allocation3 + $0x780] sm:$0xff]
        %v839 = vld [vmem:[#allocation3 + $0x788] sm:$0xff]
        %v840 = vld [vmem:[#allocation3 + $0x790] sm:$0xff]
        %v841 = vld [vmem:[#allocation3 + $0x798] sm:$0xff]
        %v842 = vld [vmem:[#allocation3 + $0x7a0] sm:$0xff]
        %v843 = vld [vmem:[#allocation3 + $0x7a8] sm:$0xff]
        %v844 = vld [vmem:[#allocation3 + $0x7b0] sm:$0xff]
        %v845 = vld [vmem:[#allocation3 + $0x7b8] sm:$0xff]
        %v846 = vld [vmem:[#allocation3 + $0x7c0] sm:$0xff]
        %v847 = vld [vmem:[#allocation3 + $0x7c8] sm:$0xff]
        %v848 = vld [vmem:[#allocation3 + $0x7d0] sm:$0xff]
        %v849 = vld [vmem:[#allocation3 + $0x7d8] sm:$0xff]
        %v850 = vld [vmem:[#allocation3 + $0x7e0] sm:$0xff]
        %v851 = vld [vmem:[#allocation3 + $0x7e8] sm:$0xff]
        %v852 = vld [vmem:[#allocation3 + $0x7f0] sm:$0xff]
        %v853 = vld [vmem:[#allocation3 + $0x7f8] sm:$0xff]
        %854 = vmatprep.subr.mxu0 %v719
        %855 = vmatpush1.msra.mxu0 %v718
        %856 = vmatprep.subr.mxu0 %v711
        %857 = vmatpush1.msra.mxu0 %v710
        %858 = vmatprep.subr.mxu0 %v703
        %859 = vmatpush1.msra.mxu0 %v702
        %860 = vmatprep.subr.mxu0 %v695
        %861 = vmatpush1.msra.mxu0 %v694
        %862 = vmatprep.subr.mxu0 %v687
        %863 = vmatpush1.msra.mxu0 %v686
        %864 = vmatprep.subr.mxu0 %v679
        %865 = vmatpush1.msra.mxu0 %v678
        %866 = vmatprep.subr.mxu0 %v671
        %867 = vmatpush1.msra.mxu0 %v670
        %868 = vmatprep.subr.mxu0 %v663
        %869 = vmatpush1.msra.mxu0 %v662
        %870 = vmatprep.subr.mxu0 %v655
        %871 = vmatpush1.msra.mxu0 %v654
        %872 = vmatprep.subr.mxu0 %v647
        %873 = vmatpush1.msra.mxu0 %v646
        %874 = vmatprep.subr.mxu0 %v639
        %875 = vmatpush1.msra.mxu0 %v638
        %876 = vmatprep.subr.mxu0 %v631
        %877 = vmatpush1.msra.mxu0 %v630
        %878 = vmatprep.subr.mxu0 %v623
        %879 = vmatpush1.msra.mxu0 %v622
        %880 = vmatprep.subr.mxu0 %v615
        %881 = vmatpush1.msra.mxu0 %v614
        %882 = vmatprep.subr.mxu0 %v607
        %883 = vmatpush1.msra.mxu0 %v606
        %884 = vmatprep.subr.mxu0 %v599
        %885 = vmatpush1.msra.mxu0 %v598
        %886 = vmatprep.subr.mxu0 %v847
        %887 = vmatpush2.msra.mxu0 %v846
        %888 = vmatprep.subr.mxu0 %v839
        %889 = vmatpush2.msra.mxu0 %v838
        %890 = vmatprep.subr.mxu0 %v831
        %891 = vmatpush2.msra.mxu0 %v830
        %892 = vmatprep.subr.mxu0 %v823
        %893 = vmatpush2.msra.mxu0 %v822
        %894 = vmatprep.subr.mxu0 %v815
        %895 = vmatpush2.msra.mxu0 %v814
        %896 = vmatprep.subr.mxu0 %v807
        %897 = vmatpush2.msra.mxu0 %v806
        %898 = vmatprep.subr.mxu0 %v799
        %899 = vmatpush2.msra.mxu0 %v798
        %900 = vmatprep.subr.mxu0 %v791
        %901 = vmatpush2.msra.mxu0 %v790
        %902 = vmatprep.subr.mxu0 %v783
        %903 = vmatpush2.msra.mxu0 %v782
        %904 = vmatprep.subr.mxu0 %v775
        %905 = vmatpush2.msra.mxu0 %v774
        %906 = vmatprep.subr.mxu0 %v767
        %907 = vmatpush2.msra.mxu0 %v766
        %908 = vmatprep.subr.mxu0 %v759
        %909 = vmatpush2.msra.mxu0 %v758
        %910 = vmatprep.subr.mxu0 %v751
        %911 = vmatpush2.msra.mxu0 %v750
        %912 = vmatprep.subr.mxu0 %v743
        %913 = vmatpush2.msra.mxu0 %v742
        %914 = vmatprep.subr.mxu0 %v735
        %915 = vmatpush2.msra.mxu0 %v734
        %916 = vmatprep.subr.mxu0 %v727
        %917 = vmatpush2.msra.mxu0 %v726
        %918 = vmatprep.mubr.f32.mxu0 %v573
        %919 = vmatmul.mubr.f32.gmra.mxu0 %v572
        %v920 = vpop.f32.mrf.mxu0
        %v921 = vadd.f32 0.0, %v920
        %v922 = vpop.f32.mrf.mxu0
        %v923 = vadd.f32 0.0, %v922
        %924 = vmatprep.mubr.f32.mxu0 %v575
        %925 = vmatmul.mubr.f32.gmra.mxu0 %v574
        %v926 = vpop.f32.mrf.mxu0
        %v927 = vadd.f32 0.0, %v926
        %v928 = vpop.f32.mrf.mxu0
        %v929 = vadd.f32 0.0, %v928
        %930 = vmatprep.mubr.f32.mxu0 %v577
        %931 = vmatmul.mubr.f32.gmra.mxu0 %v576
        %v932 = vpop.f32.mrf.mxu0
        %v933 = vadd.f32 0.0, %v932
        %v934 = vpop.f32.mrf.mxu0
        %v935 = vadd.f32 0.0, %v934
        %936 = vmatprep.mubr.f32.mxu0 %v579
        %937 = vmatmul.mubr.f32.gmra.mxu0 %v578
        %v938 = vpop.f32.mrf.mxu0
        %v939 = vadd.f32 0.0, %v938
        %v940 = vpop.f32.mrf.mxu0
        %v941 = vadd.f32 0.0, %v940
        %942 = vmatprep.mubr.f32.mxu0 %v581
        %943 = vmatmul.mubr.f32.gmra.mxu0 %v580
        %v944 = vpop.f32.mrf.mxu0
        %v945 = vadd.f32 0.0, %v944
        %v946 = vpop.f32.mrf.mxu0
        %v947 = vadd.f32 0.0, %v946
        %948 = vmatprep.mubr.f32.mxu0 %v583
        %949 = vmatmul.mubr.f32.gmra.mxu0 %v582
        %v950 = vpop.f32.mrf.mxu0
        %v951 = vadd.f32 0.0, %v950
        %v952 = vpop.f32.mrf.mxu0
        %v953 = vadd.f32 0.0, %v952
        %954 = vmatprep.mubr.f32.mxu0 %v585
        %955 = vmatmul.mubr.f32.gmra.mxu0 %v584
        %v956 = vpop.f32.mrf.mxu0
        %v957 = vadd.f32 0.0, %v956
        %v958 = vpop.f32.mrf.mxu0
        %v959 = vadd.f32 0.0, %v958
        %960 = vmatprep.mubr.f32.mxu0 %v587
        %961 = vmatmul.mubr.f32.gmra.mxu0 %v586
        %v962 = vpop.f32.mrf.mxu0
        %v963 = vadd.f32 0.0, %v962
        %v964 = vpop.f32.mrf.mxu0
        %v965 = vadd.f32 0.0, %v964
        %966 = vmatprep.mubr.f32.mxu0 %v589
        %967 = vmatmul.mubr.f32.gmra.mxu0 %v588
        %v968 = vpop.f32.mrf.mxu0
        %v969 = vadd.f32 0.0, %v968
        %v970 = vpop.f32.mrf.mxu0
        %v971 = vadd.f32 0.0, %v970
        %972 = vmatprep.mubr.f32.mxu0 %v591
        %973 = vmatmul.mubr.f32.gmra.mxu0 %v590
        %v974 = vpop.f32.mrf.mxu0
        %v975 = vadd.f32 0.0, %v974
        %v976 = vpop.f32.mrf.mxu0
        %v977 = vadd.f32 0.0, %v976
        %978 = vmatprep.mubr.f32.mxu0 %v593
        %979 = vmatmul.mubr.f32.gmra.mxu0 %v592
        %v980 = vpop.f32.mrf.mxu0
        %v981 = vadd.f32 0.0, %v980
        %v982 = vpop.f32.mrf.mxu0
        %v983 = vadd.f32 0.0, %v982
        %984 = vmatprep.mubr.f32.mxu0 %v595
        %985 = vmatmul.mubr.f32.gmra.mxu0 %v594
        %v986 = vpop.f32.mrf.mxu0
        %v987 = vadd.f32 0.0, %v986
        %v988 = vpop.f32.mrf.mxu0
        %v989 = vadd.f32 0.0, %v988
        %990 = vmatprep.mubr.f32.mxu0 %v597
        %991 = vmatmul.mubr.f32.gmra.mxu0 %v596
        %v992 = vpop.f32.mrf.mxu0
        %v993 = vadd.f32 0.0, %v992
        %v994 = vpop.f32.mrf.mxu0
        %v995 = vadd.f32 0.0, %v994
        %996 = vdwg.mxu0
        %997 = vmatprep.subr.mxu0 %v721
        %998 = vmatpush1.msra.mxu0 %v720
        %999 = vmatprep.subr.mxu0 %v713
        %1000 = vmatpush1.msra.mxu0 %v712
        %1001 = vmatprep.subr.mxu0 %v705
        %1002 = vmatpush1.msra.mxu0 %v704
        %1003 = vmatprep.subr.mxu0 %v697
        %1004 = vmatpush1.msra.mxu0 %v696
        %1005 = vmatprep.subr.mxu0 %v689
        %1006 = vmatpush1.msra.mxu0 %v688
        %1007 = vmatprep.subr.mxu0 %v681
        %1008 = vmatpush1.msra.mxu0 %v680
        %1009 = vmatprep.subr.mxu0 %v673
        %1010 = vmatpush1.msra.mxu0 %v672
        %1011 = vmatprep.subr.mxu0 %v665
        %1012 = vmatpush1.msra.mxu0 %v664
        %1013 = vmatprep.subr.mxu0 %v657
        %1014 = vmatpush1.msra.mxu0 %v656
        %1015 = vmatprep.subr.mxu0 %v649
        %1016 = vmatpush1.msra.mxu0 %v648
        %1017 = vmatprep.subr.mxu0 %v641
        %1018 = vmatpush1.msra.mxu0 %v640
        %1019 = vmatprep.subr.mxu0 %v633
        %1020 = vmatpush1.msra.mxu0 %v632
        %1021 = vmatprep.subr.mxu0 %v625
        %1022 = vmatpush1.msra.mxu0 %v624
        %1023 = vmatprep.subr.mxu0 %v617
        %1024 = vmatpush1.msra.mxu0 %v616
        %1025 = vmatprep.subr.mxu0 %v609
        %1026 = vmatpush1.msra.mxu0 %v608
        %1027 = vmatprep.subr.mxu0 %v601
        %1028 = vmatpush1.msra.mxu0 %v600
        %1029 = vmatprep.subr.mxu0 %v849
        %1030 = vmatpush2.msra.mxu0 %v848
        %1031 = vmatprep.subr.mxu0 %v841
        %1032 = vmatpush2.msra.mxu0 %v840
        %1033 = vmatprep.subr.mxu0 %v833
        %1034 = vmatpush2.msra.mxu0 %v832
        %1035 = vmatprep.subr.mxu0 %v825
        %1036 = vmatpush2.msra.mxu0 %v824
        %1037 = vmatprep.subr.mxu0 %v817
        %1038 = vmatpush2.msra.mxu0 %v816
        %1039 = vmatprep.subr.mxu0 %v809
        %1040 = vmatpush2.msra.mxu0 %v808
        %1041 = vmatprep.subr.mxu0 %v801
        %1042 = vmatpush2.msra.mxu0 %v800
        %1043 = vmatprep.subr.mxu0 %v793
        %1044 = vmatpush2.msra.mxu0 %v792
        %1045 = vmatprep.subr.mxu0 %v785
        %1046 = vmatpush2.msra.mxu0 %v784
        %1047 = vmatprep.subr.mxu0 %v777
        %1048 = vmatpush2.msra.mxu0 %v776
        %1049 = vmatprep.subr.mxu0 %v769
        %1050 = vmatpush2.msra.mxu0 %v768
        %1051 = vmatprep.subr.mxu0 %v761
        %1052 = vmatpush2.msra.mxu0 %v760
        %1053 = vmatprep.subr.mxu0 %v753
        %1054 = vmatpush2.msra.mxu0 %v752
        %1055 = vmatprep.subr.mxu0 %v745
        %1056 = vmatpush2.msra.mxu0 %v744
        %1057 = vmatprep.subr.mxu0 %v737
        %1058 = vmatpush2.msra.mxu0 %v736
        %1059 = vmatprep.subr.mxu0 %v729
        %1060 = vmatpush2.msra.mxu0 %v728
        %1061 = vmatprep.mubr.f32.mxu0 %v573
        %1062 = vmatmul.mubr.f32.gmra.mxu0 %v572
        %v1063 = vpop.f32.mrf.mxu0
        %v1064 = vadd.f32 0.0, %v1063
        %v1065 = vpop.f32.mrf.mxu0
        %v1066 = vadd.f32 0.0, %v1065
        %1067 = vmatprep.mubr.f32.mxu0 %v575
        %1068 = vmatmul.mubr.f32.gmra.mxu0 %v574
        %v1069 = vpop.f32.mrf.mxu0
        %v1070 = vadd.f32 0.0, %v1069
        %v1071 = vpop.f32.mrf.mxu0
        %v1072 = vadd.f32 0.0, %v1071
        %1073 = vmatprep.mubr.f32.mxu0 %v577
        %1074 = vmatmul.mubr.f32.gmra.mxu0 %v576
        %v1075 = vpop.f32.mrf.mxu0
        %v1076 = vadd.f32 0.0, %v1075
        %v1077 = vpop.f32.mrf.mxu0
        %v1078 = vadd.f32 0.0, %v1077
        %1079 = vmatprep.mubr.f32.mxu0 %v579
        %1080 = vmatmul.mubr.f32.gmra.mxu0 %v578
        %v1081 = vpop.f32.mrf.mxu0
        %v1082 = vadd.f32 0.0, %v1081
        %v1083 = vpop.f32.mrf.mxu0
        %v1084 = vadd.f32 0.0, %v1083
        %1085 = vmatprep.mubr.f32.mxu0 %v581
        %1086 = vmatmul.mubr.f32.gmra.mxu0 %v580
        %v1087 = vpop.f32.mrf.mxu0
        %v1088 = vadd.f32 0.0, %v1087
        %v1089 = vpop.f32.mrf.mxu0
        %v1090 = vadd.f32 0.0, %v1089
        %1091 = vmatprep.mubr.f32.mxu0 %v583
        %1092 = vmatmul.mubr.f32.gmra.mxu0 %v582
        %v1093 = vpop.f32.mrf.mxu0
        %v1094 = vadd.f32 0.0, %v1093
        %v1095 = vpop.f32.mrf.mxu0
        %v1096 = vadd.f32 0.0, %v1095
        %1097 = vmatprep.mubr.f32.mxu0 %v585
        %1098 = vmatmul.mubr.f32.gmra.mxu0 %v584
        %v1099 = vpop.f32.mrf.mxu0
        %v1100 = vadd.f32 0.0, %v1099
        %v1101 = vpop.f32.mrf.mxu0
        %v1102 = vadd.f32 0.0, %v1101
        %1103 = vmatprep.mubr.f32.mxu0 %v587
        %1104 = vmatmul.mubr.f32.gmra.mxu0 %v586
        %v1105 = vpop.f32.mrf.mxu0
        %v1106 = vadd.f32 0.0, %v1105
        %v1107 = vpop.f32.mrf.mxu0
        %v1108 = vadd.f32 0.0, %v1107
        %1109 = vmatprep.mubr.f32.mxu0 %v589
        %1110 = vmatmul.mubr.f32.gmra.mxu0 %v588
        %v1111 = vpop.f32.mrf.mxu0
        %v1112 = vadd.f32 0.0, %v1111
        %v1113 = vpop.f32.mrf.mxu0
        %v1114 = vadd.f32 0.0, %v1113
        %1115 = vmatprep.mubr.f32.mxu0 %v591
        %1116 = vmatmul.mubr.f32.gmra.mxu0 %v590
        %v1117 = vpop.f32.mrf.mxu0
        %v1118 = vadd.f32 0.0, %v1117
        %v1119 = vpop.f32.mrf.mxu0
        %v1120 = vadd.f32 0.0, %v1119
        %1121 = vmatprep.mubr.f32.mxu0 %v593
        %1122 = vmatmul.mubr.f32.gmra.mxu0 %v592
        %v1123 = vpop.f32.mrf.mxu0
        %v1124 = vadd.f32 0.0, %v1123
        %v1125 = vpop.f32.mrf.mxu0
        %v1126 = vadd.f32 0.0, %v1125
        %1127 = vmatprep.mubr.f32.mxu0 %v595
        %1128 = vmatmul.mubr.f32.gmra.mxu0 %v594
        %v1129 = vpop.f32.mrf.mxu0
        %v1130 = vadd.f32 0.0, %v1129
        %v1131 = vpop.f32.mrf.mxu0
        %v1132 = vadd.f32 0.0, %v1131
        %1133 = vmatprep.mubr.f32.mxu0 %v597
        %1134 = vmatmul.mubr.f32.gmra.mxu0 %v596
        %v1135 = vpop.f32.mrf.mxu0
        %v1136 = vadd.f32 0.0, %v1135
        %v1137 = vpop.f32.mrf.mxu0
        %v1138 = vadd.f32 0.0, %v1137
        %1139 = vdwg.mxu0
        %1140 = vmatprep.subr.mxu0 %v723
        %1141 = vmatpush1.msra.mxu0 %v722
        %1142 = vmatprep.subr.mxu0 %v715
        %1143 = vmatpush1.msra.mxu0 %v714
        %1144 = vmatprep.subr.mxu0 %v707
        %1145 = vmatpush1.msra.mxu0 %v706
        %1146 = vmatprep.subr.mxu0 %v699
        %1147 = vmatpush1.msra.mxu0 %v698
        %1148 = vmatprep.subr.mxu0 %v691
        %1149 = vmatpush1.msra.mxu0 %v690
        %1150 = vmatprep.subr.mxu0 %v683
        %1151 = vmatpush1.msra.mxu0 %v682
        %1152 = vmatprep.subr.mxu0 %v675
        %1153 = vmatpush1.msra.mxu0 %v674
        %1154 = vmatprep.subr.mxu0 %v667
        %1155 = vmatpush1.msra.mxu0 %v666
        %1156 = vmatprep.subr.mxu0 %v659
        %1157 = vmatpush1.msra.mxu0 %v658
        %1158 = vmatprep.subr.mxu0 %v651
        %1159 = vmatpush1.msra.mxu0 %v650
        %1160 = vmatprep.subr.mxu0 %v643
        %1161 = vmatpush1.msra.mxu0 %v642
        %1162 = vmatprep.subr.mxu0 %v635
        %1163 = vmatpush1.msra.mxu0 %v634
        %1164 = vmatprep.subr.mxu0 %v627
        %1165 = vmatpush1.msra.mxu0 %v626
        %1166 = vmatprep.subr.mxu0 %v619
        %1167 = vmatpush1.msra.mxu0 %v618
        %1168 = vmatprep.subr.mxu0 %v611
        %1169 = vmatpush1.msra.mxu0 %v610
        %1170 = vmatprep.subr.mxu0 %v603
        %1171 = vmatpush1.msra.mxu0 %v602
        %1172 = vmatprep.subr.mxu0 %v851
        %1173 = vmatpush2.msra.mxu0 %v850
        %1174 = vmatprep.subr.mxu0 %v843
        %1175 = vmatpush2.msra.mxu0 %v842
        %1176 = vmatprep.subr.mxu0 %v835
        %1177 = vmatpush2.msra.mxu0 %v834
        %1178 = vmatprep.subr.mxu0 %v827
        %1179 = vmatpush2.msra.mxu0 %v826
        %1180 = vmatprep.subr.mxu0 %v819
        %1181 = vmatpush2.msra.mxu0 %v818
        %1182 = vmatprep.subr.mxu0 %v811
        %1183 = vmatpush2.msra.mxu0 %v810
        %1184 = vmatprep.subr.mxu0 %v803
        %1185 = vmatpush2.msra.mxu0 %v802
        %1186 = vmatprep.subr.mxu0 %v795
        %1187 = vmatpush2.msra.mxu0 %v794
        %1188 = vmatprep.subr.mxu0 %v787
        %1189 = vmatpush2.msra.mxu0 %v786
        %1190 = vmatprep.subr.mxu0 %v779
        %1191 = vmatpush2.msra.mxu0 %v778
        %1192 = vmatprep.subr.mxu0 %v771
        %1193 = vmatpush2.msra.mxu0 %v770
        %1194 = vmatprep.subr.mxu0 %v763
        %1195 = vmatpush2.msra.mxu0 %v762
        %1196 = vmatprep.subr.mxu0 %v755
        %1197 = vmatpush2.msra.mxu0 %v754
        %1198 = vmatprep.subr.mxu0 %v747
        %1199 = vmatpush2.msra.mxu0 %v746
        %1200 = vmatprep.subr.mxu0 %v739
        %1201 = vmatpush2.msra.mxu0 %v738
        %1202 = vmatprep.subr.mxu0 %v731
        %1203 = vmatpush2.msra.mxu0 %v730
        %1204 = vmatprep.mubr.f32.mxu0 %v573
        %1205 = vmatmul.mubr.f32.gmra.mxu0 %v572
        %v1206 = vpop.f32.mrf.mxu0
        %v1207 = vadd.f32 0.0, %v1206
        %v1208 = vpop.f32.mrf.mxu0
        %v1209 = vadd.f32 0.0, %v1208
        %1210 = vmatprep.mubr.f32.mxu0 %v575
        %1211 = vmatmul.mubr.f32.gmra.mxu0 %v574
        %v1212 = vpop.f32.mrf.mxu0
        %v1213 = vadd.f32 0.0, %v1212
        %v1214 = vpop.f32.mrf.mxu0
        %v1215 = vadd.f32 0.0, %v1214
        %1216 = vmatprep.mubr.f32.mxu0 %v577
        %1217 = vmatmul.mubr.f32.gmra.mxu0 %v576
        %v1218 = vpop.f32.mrf.mxu0
        %v1219 = vadd.f32 0.0, %v1218
        %v1220 = vpop.f32.mrf.mxu0
        %v1221 = vadd.f32 0.0, %v1220
        %1222 = vmatprep.mubr.f32.mxu0 %v579
        %1223 = vmatmul.mubr.f32.gmra.mxu0 %v578
        %v1224 = vpop.f32.mrf.mxu0
        %v1225 = vadd.f32 0.0, %v1224
        %v1226 = vpop.f32.mrf.mxu0
        %v1227 = vadd.f32 0.0, %v1226
        %1228 = vmatprep.mubr.f32.mxu0 %v581
        %1229 = vmatmul.mubr.f32.gmra.mxu0 %v580
        %v1230 = vpop.f32.mrf.mxu0
        %v1231 = vadd.f32 0.0, %v1230
        %v1232 = vpop.f32.mrf.mxu0
        %v1233 = vadd.f32 0.0, %v1232
        %1234 = vmatprep.mubr.f32.mxu0 %v583
        %1235 = vmatmul.mubr.f32.gmra.mxu0 %v582
        %v1236 = vpop.f32.mrf.mxu0
        %v1237 = vadd.f32 0.0, %v1236
        %v1238 = vpop.f32.mrf.mxu0
        %v1239 = vadd.f32 0.0, %v1238
        %1240 = vmatprep.mubr.f32.mxu0 %v585
        %1241 = vmatmul.mubr.f32.gmra.mxu0 %v584
        %v1242 = vpop.f32.mrf.mxu0
        %v1243 = vadd.f32 0.0, %v1242
        %v1244 = vpop.f32.mrf.mxu0
        %v1245 = vadd.f32 0.0, %v1244
        %1246 = vmatprep.mubr.f32.mxu0 %v587
        %1247 = vmatmul.mubr.f32.gmra.mxu0 %v586
        %v1248 = vpop.f32.mrf.mxu0
        %v1249 = vadd.f32 0.0, %v1248
        %v1250 = vpop.f32.mrf.mxu0
        %v1251 = vadd.f32 0.0, %v1250
        %1252 = vmatprep.mubr.f32.mxu0 %v589
        %1253 = vmatmul.mubr.f32.gmra.mxu0 %v588
        %v1254 = vpop.f32.mrf.mxu0
        %v1255 = vadd.f32 0.0, %v1254
        %v1256 = vpop.f32.mrf.mxu0
        %v1257 = vadd.f32 0.0, %v1256
        %1258 = vmatprep.mubr.f32.mxu0 %v591
        %1259 = vmatmul.mubr.f32.gmra.mxu0 %v590
        %v1260 = vpop.f32.mrf.mxu0
        %v1261 = vadd.f32 0.0, %v1260
        %v1262 = vpop.f32.mrf.mxu0
        %v1263 = vadd.f32 0.0, %v1262
        %1264 = vmatprep.mubr.f32.mxu0 %v593
        %1265 = vmatmul.mubr.f32.gmra.mxu0 %v592
        %v1266 = vpop.f32.mrf.mxu0
        %v1267 = vadd.f32 0.0, %v1266
        %v1268 = vpop.f32.mrf.mxu0
        %v1269 = vadd.f32 0.0, %v1268
        %1270 = vmatprep.mubr.f32.mxu0 %v595
        %1271 = vmatmul.mubr.f32.gmra.mxu0 %v594
        %v1272 = vpop.f32.mrf.mxu0
        %v1273 = vadd.f32 0.0, %v1272
        %v1274 = vpop.f32.mrf.mxu0
        %v1275 = vadd.f32 0.0, %v1274
        %1276 = vmatprep.mubr.f32.mxu0 %v597
        %1277 = vmatmul.mubr.f32.gmra.mxu0 %v596
        %v1278 = vpop.f32.mrf.mxu0
        %v1279 = vadd.f32 0.0, %v1278
        %v1280 = vpop.f32.mrf.mxu0
        %v1281 = vadd.f32 0.0, %v1280
        %1282 = vdwg.mxu0
        %1283 = vmatprep.subr.mxu0 %v725
        %1284 = vmatpush1.msra.mxu0 %v724
        %1285 = vmatprep.subr.mxu0 %v717
        %1286 = vmatpush1.msra.mxu0 %v716
        %1287 = vmatprep.subr.mxu0 %v709
        %1288 = vmatpush1.msra.mxu0 %v708
        %1289 = vmatprep.subr.mxu0 %v701
        %1290 = vmatpush1.msra.mxu0 %v700
        %1291 = vmatprep.subr.mxu0 %v693
        %1292 = vmatpush1.msra.mxu0 %v692
        %1293 = vmatprep.subr.mxu0 %v685
        %1294 = vmatpush1.msra.mxu0 %v684
        %1295 = vmatprep.subr.mxu0 %v677
        %1296 = vmatpush1.msra.mxu0 %v676
        %1297 = vmatprep.subr.mxu0 %v669
        %1298 = vmatpush1.msra.mxu0 %v668
        %1299 = vmatprep.subr.mxu0 %v661
        %1300 = vmatpush1.msra.mxu0 %v660
        %1301 = vmatprep.subr.mxu0 %v653
        %1302 = vmatpush1.msra.mxu0 %v652
        %1303 = vmatprep.subr.mxu0 %v645
        %1304 = vmatpush1.msra.mxu0 %v644
        %1305 = vmatprep.subr.mxu0 %v637
        %1306 = vmatpush1.msra.mxu0 %v636
        %1307 = vmatprep.subr.mxu0 %v629
        %1308 = vmatpush1.msra.mxu0 %v628
        %1309 = vmatprep.subr.mxu0 %v621
        %1310 = vmatpush1.msra.mxu0 %v620
        %1311 = vmatprep.subr.mxu0 %v613
        %1312 = vmatpush1.msra.mxu0 %v612
        %1313 = vmatprep.subr.mxu0 %v605
        %1314 = vmatpush1.msra.mxu0 %v604
        %1315 = vmatprep.subr.mxu0 %v853
        %1316 = vmatpush2.msra.mxu0 %v852
        %1317 = vmatprep.subr.mxu0 %v845
        %1318 = vmatpush2.msra.mxu0 %v844
        %1319 = vmatprep.subr.mxu0 %v837
        %1320 = vmatpush2.msra.mxu0 %v836
        %1321 = vmatprep.subr.mxu0 %v829
        %1322 = vmatpush2.msra.mxu0 %v828
        %1323 = vmatprep.subr.mxu0 %v821
        %1324 = vmatpush2.msra.mxu0 %v820
        %1325 = vmatprep.subr.mxu0 %v813
        %1326 = vmatpush2.msra.mxu0 %v812
        %1327 = vmatprep.subr.mxu0 %v805
        %1328 = vmatpush2.msra.mxu0 %v804
        %1329 = vmatprep.subr.mxu0 %v797
        %1330 = vmatpush2.msra.mxu0 %v796
        %1331 = vmatprep.subr.mxu0 %v789
        %1332 = vmatpush2.msra.mxu0 %v788
        %1333 = vmatprep.subr.mxu0 %v781
        %1334 = vmatpush2.msra.mxu0 %v780
        %1335 = vmatprep.subr.mxu0 %v773
        %1336 = vmatpush2.msra.mxu0 %v772
        %1337 = vmatprep.subr.mxu0 %v765
        %1338 = vmatpush2.msra.mxu0 %v764
        %1339 = vmatprep.subr.mxu0 %v757
        %1340 = vmatpush2.msra.mxu0 %v756
        %1341 = vmatprep.subr.mxu0 %v749
        %1342 = vmatpush2.msra.mxu0 %v748
        %1343 = vmatprep.subr.mxu0 %v741
        %1344 = vmatpush2.msra.mxu0 %v740
        %1345 = vmatprep.subr.mxu0 %v733
        %1346 = vmatpush2.msra.mxu0 %v732
        %1347 = vmatprep.mubr.f32.mxu0 %v573
        %1348 = vmatmul.mubr.f32.gmra.mxu0 %v572
        %v1349 = vpop.f32.mrf.mxu0
        %v1350 = vadd.f32 0.0, %v1349
        %v1351 = vpop.f32.mrf.mxu0
        %v1352 = vadd.f32 0.0, %v1351
        %1353 = vmatprep.mubr.f32.mxu0 %v575
        %1354 = vmatmul.mubr.f32.gmra.mxu0 %v574
        %v1355 = vpop.f32.mrf.mxu0
        %v1356 = vadd.f32 0.0, %v1355
        %v1357 = vpop.f32.mrf.mxu0
        %v1358 = vadd.f32 0.0, %v1357
        %1359 = vmatprep.mubr.f32.mxu0 %v577
        %1360 = vmatmul.mubr.f32.gmra.mxu0 %v576
        %v1361 = vpop.f32.mrf.mxu0
        %v1362 = vadd.f32 0.0, %v1361
        %v1363 = vpop.f32.mrf.mxu0
        %v1364 = vadd.f32 0.0, %v1363
        %1365 = vmatprep.mubr.f32.mxu0 %v579
        %1366 = vmatmul.mubr.f32.gmra.mxu0 %v578
        %v1367 = vpop.f32.mrf.mxu0
        %v1368 = vadd.f32 0.0, %v1367
        %v1369 = vpop.f32.mrf.mxu0
        %v1370 = vadd.f32 0.0, %v1369
        %1371 = vmatprep.mubr.f32.mxu0 %v581
        %1372 = vmatmul.mubr.f32.gmra.mxu0 %v580
        %v1373 = vpop.f32.mrf.mxu0
        %v1374 = vadd.f32 0.0, %v1373
        %v1375 = vpop.f32.mrf.mxu0
        %v1376 = vadd.f32 0.0, %v1375
        %1377 = vmatprep.mubr.f32.mxu0 %v583
        %1378 = vmatmul.mubr.f32.gmra.mxu0 %v582
        %v1379 = vpop.f32.mrf.mxu0
        %v1380 = vadd.f32 0.0, %v1379
        %v1381 = vpop.f32.mrf.mxu0
        %v1382 = vadd.f32 0.0, %v1381
        %1383 = vmatprep.mubr.f32.mxu0 %v585
        %1384 = vmatmul.mubr.f32.gmra.mxu0 %v584
        %v1385 = vpop.f32.mrf.mxu0
        %v1386 = vadd.f32 0.0, %v1385
        %v1387 = vpop.f32.mrf.mxu0
        %v1388 = vadd.f32 0.0, %v1387
        %1389 = vmatprep.mubr.f32.mxu0 %v587
        %1390 = vmatmul.mubr.f32.gmra.mxu0 %v586
        %v1391 = vpop.f32.mrf.mxu0
        %v1392 = vadd.f32 0.0, %v1391
        %v1393 = vpop.f32.mrf.mxu0
        %v1394 = vadd.f32 0.0, %v1393
        %1395 = vmatprep.mubr.f32.mxu0 %v589
        %1396 = vmatmul.mubr.f32.gmra.mxu0 %v588
        %v1397 = vpop.f32.mrf.mxu0
        %v1398 = vadd.f32 0.0, %v1397
        %v1399 = vpop.f32.mrf.mxu0
        %v1400 = vadd.f32 0.0, %v1399
        %1401 = vmatprep.mubr.f32.mxu0 %v591
        %1402 = vmatmul.mubr.f32.gmra.mxu0 %v590
        %v1403 = vpop.f32.mrf.mxu0
        %v1404 = vadd.f32 0.0, %v1403
        %v1405 = vpop.f32.mrf.mxu0
        %v1406 = vadd.f32 0.0, %v1405
        %1407 = vmatprep.mubr.f32.mxu0 %v593
        %1408 = vmatmul.mubr.f32.gmra.mxu0 %v592
        %v1409 = vpop.f32.mrf.mxu0
        %v1410 = vadd.f32 0.0, %v1409
        %v1411 = vpop.f32.mrf.mxu0
        %v1412 = vadd.f32 0.0, %v1411
        %1413 = vmatprep.mubr.f32.mxu0 %v595
        %1414 = vmatmul.mubr.f32.gmra.mxu0 %v594
        %v1415 = vpop.f32.mrf.mxu0
        %v1416 = vadd.f32 0.0, %v1415
        %v1417 = vpop.f32.mrf.mxu0
        %v1418 = vadd.f32 0.0, %v1417
        %1419 = vmatprep.mubr.f32.mxu0 %v597
        %1420 = vmatmul.mubr.f32.gmra.mxu0 %v596
        %v1421 = vpop.f32.mrf.mxu0
        %v1422 = vadd.f32 0.0, %v1421
        %v1423 = vpop.f32.mrf.mxu0
        %v1424 = vadd.f32 0.0, %v1423
        %1425 = vdwg.mxu0
        %v1426 = vld [vmem:[%s3] sm:$0xff]
        %v1427 = vld [vmem:[%s3 + $0x8] sm:$0xff]
        %v1428 = vld [vmem:[%s3 + $0x10] sm:$0xff]
        %v1429 = vld [vmem:[%s3 + $0x18] sm:$0xff]
        %v1430 = vld [vmem:[%s3 + $0x20] sm:$0xff]
        %v1431 = vld [vmem:[%s3 + $0x28] sm:$0xff]
        %v1432 = vld [vmem:[%s3 + $0x30] sm:$0xff]
        %v1433 = vld [vmem:[%s3 + $0x38] sm:$0xff]
        %v1434 = vld [vmem:[%s3 + $0x40] sm:$0xff]
        %v1435 = vld [vmem:[%s3 + $0x48] sm:$0xff]
        %v1436 = vld [vmem:[%s3 + $0x50] sm:$0xff]
        %v1437 = vld [vmem:[%s3 + $0x58] sm:$0xff]
        %v1438 = vld [vmem:[%s3 + $0x60] sm:$0xff]
        %v1439 = vld [vmem:[%s3 + $0x68] sm:$0xff]
        %v1440 = vld [vmem:[%s3 + $0x70] sm:$0xff]
        %v1441 = vld [vmem:[%s3 + $0x78] sm:$0xff]
        %v1442 = vld [vmem:[%s3 + $0x80] sm:$0xff]
        %v1443 = vld [vmem:[%s3 + $0x88] sm:$0xff]
        %v1444 = vld [vmem:[%s3 + $0x90] sm:$0xff]
        %v1445 = vld [vmem:[%s3 + $0x98] sm:$0xff]
        %v1446 = vld [vmem:[%s3 + $0xa0] sm:$0xff]
        %v1447 = vld [vmem:[%s3 + $0xa8] sm:$0xff]
        %v1448 = vld [vmem:[%s3 + $0xb0] sm:$0xff]
        %v1449 = vld [vmem:[%s3 + $0xb8] sm:$0xff]
        %v1450 = vld [vmem:[%s3 + $0xc0] sm:$0xff]
        %v1451 = vld [vmem:[%s3 + $0xc8] sm:$0xff]
        %v1452 = vld [vmem:[%s3 + $0xd0] sm:$0xff]
        %v1453 = vld [vmem:[%s3 + $0xd8] sm:$0xff]
        %v1454 = vld [vmem:[%s3 + $0xe0] sm:$0xff]
        %v1455 = vld [vmem:[%s3 + $0xe8] sm:$0xff]
        %v1456 = vld [vmem:[%s3 + $0xf0] sm:$0xff]
        %v1457 = vld [vmem:[%s3 + $0xf8] sm:$0xff]
        %1459 = vset.pattern.permute.xlu0 0
        %1460 = vperm.xlu0 %1459, %v452
        %v1461 = vpop.permute.xlu0 %1460
        %1464 = vset.pattern.permute.xlu0 0
        %1465 = vperm.xlu0 %1464, %v453
        %v1466 = vpop.permute.xlu0 %1465
        %1469 = vset.pattern.permute.xlu0 0
        %1470 = vperm.xlu0 %1469, %v454
        %v1471 = vpop.permute.xlu0 %1470
        %1474 = vset.pattern.permute.xlu0 0
        %1475 = vperm.xlu0 %1474, %v455
        %v1476 = vpop.permute.xlu0 %1475
        %1479 = vset.pattern.permute.xlu0 0
        %1480 = vperm.xlu0 %1479, %v456
        %v1481 = vpop.permute.xlu0 %1480
        %1484 = vset.pattern.permute.xlu0 0
        %1485 = vperm.xlu0 %1484, %v457
        %v1486 = vpop.permute.xlu0 %1485
        %1489 = vset.pattern.permute.xlu0 0
        %1490 = vperm.xlu0 %1489, %v458
        %v1491 = vpop.permute.xlu0 %1490
        %1494 = vset.pattern.permute.xlu0 0
        %1495 = vperm.xlu0 %1494, %v459
        %v1496 = vpop.permute.xlu0 %1495
        %1499 = vset.pattern.permute.xlu0 0
        %1500 = vperm.xlu0 %1499, %v460
        %v1501 = vpop.permute.xlu0 %1500
        %1504 = vset.pattern.permute.xlu0 0
        %1505 = vperm.xlu0 %1504, %v461
        %v1506 = vpop.permute.xlu0 %1505
        %1509 = vset.pattern.permute.xlu0 0
        %1510 = vperm.xlu0 %1509, %v462
        %v1511 = vpop.permute.xlu0 %1510
        %1514 = vset.pattern.permute.xlu0 0
        %1515 = vperm.xlu0 %1514, %v463
        %v1516 = vpop.permute.xlu0 %1515
        %1519 = vset.pattern.permute.xlu0 0
        %1520 = vperm.xlu0 %1519, %v464
        %v1521 = vpop.permute.xlu0 %1520
        %v1523 = vmul.f32 %v1461, %v921
        %v1524 = vmul.f32 %v1466, %v927
        %v1525 = vmul.f32 %v1471, %v933
        %v1526 = vmul.f32 %v1476, %v939
        %v1527 = vmul.f32 %v1481, %v945
        %v1528 = vmul.f32 %v1486, %v951
        %v1529 = vmul.f32 %v1491, %v957
        %v1530 = vmul.f32 %v1496, %v963
        %v1531 = vmul.f32 %v1501, %v969
        %v1532 = vmul.f32 %v1506, %v975
        %v1533 = vmul.f32 %v1511, %v981
        %v1534 = vmul.f32 %v1516, %v987
        %v1535 = vmul.f32 %v1521, %v993
        %1536 = vmatprep.subr.mxu0 0.0
        %1537 = vmatpush1.msra.mxu0 %v1441
        %1538 = vmatprep.subr.mxu0 0.0
        %1539 = vmatpush1.msra.mxu0 %v1440
        %1540 = vmatprep.subr.mxu0 0.0
        %1541 = vmatpush1.msra.mxu0 %v1439
        %1542 = vmatprep.subr.mxu0 0.0
        %1543 = vmatpush1.msra.mxu0 %v1438
        %1544 = vmatprep.subr.mxu0 0.0
        %1545 = vmatpush1.msra.mxu0 %v1437
        %1546 = vmatprep.subr.mxu0 0.0
        %1547 = vmatpush1.msra.mxu0 %v1436
        %1548 = vmatprep.subr.mxu0 0.0
        %1549 = vmatpush1.msra.mxu0 %v1435
        %1550 = vmatprep.subr.mxu0 0.0
        %1551 = vmatpush1.msra.mxu0 %v1434
        %1552 = vmatprep.subr.mxu0 0.0
        %1553 = vmatpush1.msra.mxu0 %v1433
        %1554 = vmatprep.subr.mxu0 0.0
        %1555 = vmatpush1.msra.mxu0 %v1432
        %1556 = vmatprep.subr.mxu0 0.0
        %1557 = vmatpush1.msra.mxu0 %v1431
        %1558 = vmatprep.subr.mxu0 0.0
        %1559 = vmatpush1.msra.mxu0 %v1430
        %1560 = vmatprep.subr.mxu0 0.0
        %1561 = vmatpush1.msra.mxu0 %v1429
        %1562 = vmatprep.subr.mxu0 0.0
        %1563 = vmatpush1.msra.mxu0 %v1428
        %1564 = vmatprep.subr.mxu0 0.0
        %1565 = vmatpush1.msra.mxu0 %v1427
        %1566 = vmatprep.subr.mxu0 0.0
        %1567 = vmatpush1.msra.mxu0 %v1426
        %1568 = vmatprep.subr.mxu0 0.0
        %1569 = vmatpush2.msra.mxu0 %v1457
        %1570 = vmatprep.subr.mxu0 0.0
        %1571 = vmatpush2.msra.mxu0 %v1456
        %1572 = vmatprep.subr.mxu0 0.0
        %1573 = vmatpush2.msra.mxu0 %v1455
        %1574 = vmatprep.subr.mxu0 0.0
        %1575 = vmatpush2.msra.mxu0 %v1454
        %1576 = vmatprep.subr.mxu0 0.0
        %1577 = vmatpush2.msra.mxu0 %v1453
        %1578 = vmatprep.subr.mxu0 0.0
        %1579 = vmatpush2.msra.mxu0 %v1452
        %1580 = vmatprep.subr.mxu0 0.0
        %1581 = vmatpush2.msra.mxu0 %v1451
        %1582 = vmatprep.subr.mxu0 0.0
        %1583 = vmatpush2.msra.mxu0 %v1450
        %1584 = vmatprep.subr.mxu0 0.0
        %1585 = vmatpush2.msra.mxu0 %v1449
        %1586 = vmatprep.subr.mxu0 0.0
        %1587 = vmatpush2.msra.mxu0 %v1448
        %1588 = vmatprep.subr.mxu0 0.0
        %1589 = vmatpush2.msra.mxu0 %v1447
        %1590 = vmatprep.subr.mxu0 0.0
        %1591 = vmatpush2.msra.mxu0 %v1446
        %1592 = vmatprep.subr.mxu0 0.0
        %1593 = vmatpush2.msra.mxu0 %v1445
        %1594 = vmatprep.subr.mxu0 0.0
        %1595 = vmatpush2.msra.mxu0 %v1444
        %1596 = vmatprep.subr.mxu0 0.0
        %1597 = vmatpush2.msra.mxu0 %v1443
        %1598 = vmatprep.subr.mxu0 0.0
        %1599 = vmatpush2.msra.mxu0 %v1442
        %1600 = vmatprep.mubr.f32.mxu0 %v573
        %1601 = vmatmul.mubr.f32.gmra.mxu0 %v572
        %v1602 = vpop.f32.mrf.mxu0
        %v1603 = vadd.f32 %v1523, %v1602
        %v1604 = vpop.f32.mrf.mxu0
        %1605 = vmatprep.mubr.f32.mxu0 %v575
        %1606 = vmatmul.mubr.f32.gmra.mxu0 %v574
        %v1607 = vpop.f32.mrf.mxu0
        %v1608 = vadd.f32 %v1524, %v1607
        %v1609 = vpop.f32.mrf.mxu0
        %1610 = vmatprep.mubr.f32.mxu0 %v577
        %1611 = vmatmul.mubr.f32.gmra.mxu0 %v576
        %v1612 = vpop.f32.mrf.mxu0
        %v1613 = vadd.f32 %v1525, %v1612
        %v1614 = vpop.f32.mrf.mxu0
        %1615 = vmatprep.mubr.f32.mxu0 %v579
        %1616 = vmatmul.mubr.f32.gmra.mxu0 %v578
        %v1617 = vpop.f32.mrf.mxu0
        %v1618 = vadd.f32 %v1526, %v1617
        %v1619 = vpop.f32.mrf.mxu0
        %1620 = vmatprep.mubr.f32.mxu0 %v581
        %1621 = vmatmul.mubr.f32.gmra.mxu0 %v580
        %v1622 = vpop.f32.mrf.mxu0
        %v1623 = vadd.f32 %v1527, %v1622
        %v1624 = vpop.f32.mrf.mxu0
        %1625 = vmatprep.mubr.f32.mxu0 %v583
        %1626 = vmatmul.mubr.f32.gmra.mxu0 %v582
        %v1627 = vpop.f32.mrf.mxu0
        %v1628 = vadd.f32 %v1528, %v1627
        %v1629 = vpop.f32.mrf.mxu0
        %1630 = vmatprep.mubr.f32.mxu0 %v585
        %1631 = vmatmul.mubr.f32.gmra.mxu0 %v584
        %v1632 = vpop.f32.mrf.mxu0
        %v1633 = vadd.f32 %v1529, %v1632
        %v1634 = vpop.f32.mrf.mxu0
        %1635 = vmatprep.mubr.f32.mxu0 %v587
        %1636 = vmatmul.mubr.f32.gmra.mxu0 %v586
        %v1637 = vpop.f32.mrf.mxu0
        %v1638 = vadd.f32 %v1530, %v1637
        %v1639 = vpop.f32.mrf.mxu0
        %1640 = vmatprep.mubr.f32.mxu0 %v589
        %1641 = vmatmul.mubr.f32.gmra.mxu0 %v588
        %v1642 = vpop.f32.mrf.mxu0
        %v1643 = vadd.f32 %v1531, %v1642
        %v1644 = vpop.f32.mrf.mxu0
        %1645 = vmatprep.mubr.f32.mxu0 %v591
        %1646 = vmatmul.mubr.f32.gmra.mxu0 %v590
        %v1647 = vpop.f32.mrf.mxu0
        %v1648 = vadd.f32 %v1532, %v1647
        %v1649 = vpop.f32.mrf.mxu0
        %1650 = vmatprep.mubr.f32.mxu0 %v593
        %1651 = vmatmul.mubr.f32.gmra.mxu0 %v592
        %v1652 = vpop.f32.mrf.mxu0
        %v1653 = vadd.f32 %v1533, %v1652
        %v1654 = vpop.f32.mrf.mxu0
        %1655 = vmatprep.mubr.f32.mxu0 %v595
        %1656 = vmatmul.mubr.f32.gmra.mxu0 %v594
        %v1657 = vpop.f32.mrf.mxu0
        %v1658 = vadd.f32 %v1534, %v1657
        %v1659 = vpop.f32.mrf.mxu0
        %1660 = vmatprep.mubr.f32.mxu0 %v597
        %1661 = vmatmul.mubr.f32.gmra.mxu0 %v596
        %v1662 = vpop.f32.mrf.mxu0
        %v1663 = vadd.f32 %v1535, %v1662
        %v1664 = vpop.f32.mrf.mxu0
        %1665 = vdwg.mxu0
        %1666 = vset.pattern.permute.xlu0 1
        %1667 = vperm.xlu0 %1666, %v452
        %v1668 = vpop.permute.xlu0 %1667
        %1670 = vset.pattern.permute.xlu0 1
        %1671 = vperm.xlu0 %1670, %v453
        %v1672 = vpop.permute.xlu0 %1671
        %1674 = vset.pattern.permute.xlu0 1
        %1675 = vperm.xlu0 %1674, %v454
        %v1676 = vpop.permute.xlu0 %1675
        %1678 = vset.pattern.permute.xlu0 1
        %1679 = vperm.xlu0 %1678, %v455
        %v1680 = vpop.permute.xlu0 %1679
        %1682 = vset.pattern.permute.xlu0 1
        %1683 = vperm.xlu0 %1682, %v456
        %v1684 = vpop.permute.xlu0 %1683
        %1686 = vset.pattern.permute.xlu0 1
        %1687 = vperm.xlu0 %1686, %v457
        %v1688 = vpop.permute.xlu0 %1687
        %1690 = vset.pattern.permute.xlu0 1
        %1691 = vperm.xlu0 %1690, %v458
        %v1692 = vpop.permute.xlu0 %1691
        %1694 = vset.pattern.permute.xlu0 1
        %1695 = vperm.xlu0 %1694, %v459
        %v1696 = vpop.permute.xlu0 %1695
        %1698 = vset.pattern.permute.xlu0 1
        %1699 = vperm.xlu0 %1698, %v460
        %v1700 = vpop.permute.xlu0 %1699
        %1702 = vset.pattern.permute.xlu0 1
        %1703 = vperm.xlu0 %1702, %v461
        %v1704 = vpop.permute.xlu0 %1703
        %1706 = vset.pattern.permute.xlu0 1
        %1707 = vperm.xlu0 %1706, %v462
        %v1708 = vpop.permute.xlu0 %1707
        %1710 = vset.pattern.permute.xlu0 1
        %1711 = vperm.xlu0 %1710, %v463
        %v1712 = vpop.permute.xlu0 %1711
        %1714 = vset.pattern.permute.xlu0 1
        %1715 = vperm.xlu0 %1714, %v464
        %v1716 = vpop.permute.xlu0 %1715
        %v1718 = vmul.f32 %v1668, %v921
        %v1719 = vmul.f32 %v1672, %v927
        %v1720 = vmul.f32 %v1676, %v933
        %v1721 = vmul.f32 %v1680, %v939
        %v1722 = vmul.f32 %v1684, %v945
        %v1723 = vmul.f32 %v1688, %v951
        %v1724 = vmul.f32 %v1692, %v957
        %v1725 = vmul.f32 %v1696, %v963
        %v1726 = vmul.f32 %v1700, %v969
        %v1727 = vmul.f32 %v1704, %v975
        %v1728 = vmul.f32 %v1708, %v981
        %v1729 = vmul.f32 %v1712, %v987
        %v1730 = vmul.f32 %v1716, %v993
        %1744 = vrot.lane.b32.xlu0 %v1718, 96
        %v1745 = vpop.permute.xlu0 %1744
        %1746 = vrot.lane.b32.xlu0 %v1719, 96
        %v1747 = vpop.permute.xlu0 %1746
        %1748 = vrot.lane.b32.xlu0 %v1720, 96
        %v1749 = vpop.permute.xlu0 %1748
        %1750 = vrot.lane.b32.xlu0 %v1721, 96
        %v1751 = vpop.permute.xlu0 %1750
        %1752 = vrot.lane.b32.xlu0 %v1722, 96
        %v1753 = vpop.permute.xlu0 %1752
        %1754 = vrot.lane.b32.xlu0 %v1723, 96
        %v1755 = vpop.permute.xlu0 %1754
        %1756 = vrot.lane.b32.xlu0 %v1724, 96
        %v1757 = vpop.permute.xlu0 %1756
        %1758 = vrot.lane.b32.xlu0 %v1725, 96
        %v1759 = vpop.permute.xlu0 %1758
        %1760 = vrot.lane.b32.xlu0 %v1726, 96
        %v1761 = vpop.permute.xlu0 %1760
        %1762 = vrot.lane.b32.xlu0 %v1727, 96
        %v1763 = vpop.permute.xlu0 %1762
        %1764 = vrot.lane.b32.xlu0 %v1728, 96
        %v1765 = vpop.permute.xlu0 %1764
        %1766 = vrot.lane.b32.xlu0 %v1729, 96
        %v1767 = vpop.permute.xlu0 %1766
        %1768 = vrot.lane.b32.xlu0 %v1730, 96
        %v1769 = vpop.permute.xlu0 %1768
        %v1783 = vadd.f32 %v1603, %v1745
        %v1784 = vadd.f32 %v1608, %v1747
        %v1785 = vadd.f32 %v1613, %v1749
        %v1786 = vadd.f32 %v1618, %v1751
        %v1787 = vadd.f32 %v1623, %v1753
        %v1788 = vadd.f32 %v1628, %v1755
        %v1789 = vadd.f32 %v1633, %v1757
        %v1790 = vadd.f32 %v1638, %v1759
        %v1791 = vadd.f32 %v1643, %v1761
        %v1792 = vadd.f32 %v1648, %v1763
        %v1793 = vadd.f32 %v1653, %v1765
        %v1794 = vadd.f32 %v1658, %v1767
        %v1795 = vadd.f32 %v1663, %v1769
        %1796 = vset.pattern.permute.xlu0 2
        %1797 = vperm.xlu0 %1796, %v452
        %v1798 = vpop.permute.xlu0 %1797
        %1800 = vset.pattern.permute.xlu0 2
        %1801 = vperm.xlu0 %1800, %v453
        %v1802 = vpop.permute.xlu0 %1801
        %1804 = vset.pattern.permute.xlu0 2
        %1805 = vperm.xlu0 %1804, %v454
        %v1806 = vpop.permute.xlu0 %1805
        %1808 = vset.pattern.permute.xlu0 2
        %1809 = vperm.xlu0 %1808, %v455
        %v1810 = vpop.permute.xlu0 %1809
        %1812 = vset.pattern.permute.xlu0 2
        %1813 = vperm.xlu0 %1812, %v456
        %v1814 = vpop.permute.xlu0 %1813
        %1816 = vset.pattern.permute.xlu0 2
        %1817 = vperm.xlu0 %1816, %v457
        %v1818 = vpop.permute.xlu0 %1817
        %1820 = vset.pattern.permute.xlu0 2
        %1821 = vperm.xlu0 %1820, %v458
        %v1822 = vpop.permute.xlu0 %1821
        %1824 = vset.pattern.permute.xlu0 2
        %1825 = vperm.xlu0 %1824, %v459
        %v1826 = vpop.permute.xlu0 %1825
        %1828 = vset.pattern.permute.xlu0 2
        %1829 = vperm.xlu0 %1828, %v460
        %v1830 = vpop.permute.xlu0 %1829
        %1832 = vset.pattern.permute.xlu0 2
        %1833 = vperm.xlu0 %1832, %v461
        %v1834 = vpop.permute.xlu0 %1833
        %1836 = vset.pattern.permute.xlu0 2
        %1837 = vperm.xlu0 %1836, %v462
        %v1838 = vpop.permute.xlu0 %1837
        %1840 = vset.pattern.permute.xlu0 2
        %1841 = vperm.xlu0 %1840, %v463
        %v1842 = vpop.permute.xlu0 %1841
        %1844 = vset.pattern.permute.xlu0 2
        %1845 = vperm.xlu0 %1844, %v464
        %v1846 = vpop.permute.xlu0 %1845
        %v1848 = vmul.f32 %v1798, %v921
        %v1849 = vmul.f32 %v1802, %v927
        %v1850 = vmul.f32 %v1806, %v933
        %v1851 = vmul.f32 %v1810, %v939
        %v1852 = vmul.f32 %v1814, %v945
        %v1853 = vmul.f32 %v1818, %v951
        %v1854 = vmul.f32 %v1822, %v957
        %v1855 = vmul.f32 %v1826, %v963
        %v1856 = vmul.f32 %v1830, %v969
        %v1857 = vmul.f32 %v1834, %v975
        %v1858 = vmul.f32 %v1838, %v981
        %v1859 = vmul.f32 %v1842, %v987
        %v1860 = vmul.f32 %v1846, %v993
        %1874 = vrot.lane.b32.xlu0 %v1848, 64
        %v1875 = vpop.permute.xlu0 %1874
        %1876 = vrot.lane.b32.xlu0 %v1849, 64
        %v1877 = vpop.permute.xlu0 %1876
        %1878 = vrot.lane.b32.xlu0 %v1850, 64
        %v1879 = vpop.permute.xlu0 %1878
        %1880 = vrot.lane.b32.xlu0 %v1851, 64
        %v1881 = vpop.permute.xlu0 %1880
        %1882 = vrot.lane.b32.xlu0 %v1852, 64
        %v1883 = vpop.permute.xlu0 %1882
        %1884 = vrot.lane.b32.xlu0 %v1853, 64
        %v1885 = vpop.permute.xlu0 %1884
        %1886 = vrot.lane.b32.xlu0 %v1854, 64
        %v1887 = vpop.permute.xlu0 %1886
        %1888 = vrot.lane.b32.xlu0 %v1855, 64
        %v1889 = vpop.permute.xlu0 %1888
        %1890 = vrot.lane.b32.xlu0 %v1856, 64
        %v1891 = vpop.permute.xlu0 %1890
        %1892 = vrot.lane.b32.xlu0 %v1857, 64
        %v1893 = vpop.permute.xlu0 %1892
        %1894 = vrot.lane.b32.xlu0 %v1858, 64
        %v1895 = vpop.permute.xlu0 %1894
        %1896 = vrot.lane.b32.xlu0 %v1859, 64
        %v1897 = vpop.permute.xlu0 %1896
        %1898 = vrot.lane.b32.xlu0 %v1860, 64
        %v1899 = vpop.permute.xlu0 %1898
        %v1913 = vadd.f32 %v1783, %v1875
        %v1914 = vadd.f32 %v1784, %v1877
        %v1915 = vadd.f32 %v1785, %v1879
        %v1916 = vadd.f32 %v1786, %v1881
        %v1917 = vadd.f32 %v1787, %v1883
        %v1918 = vadd.f32 %v1788, %v1885
        %v1919 = vadd.f32 %v1789, %v1887
        %v1920 = vadd.f32 %v1790, %v1889
        %v1921 = vadd.f32 %v1791, %v1891
        %v1922 = vadd.f32 %v1792, %v1893
        %v1923 = vadd.f32 %v1793, %v1895
        %v1924 = vadd.f32 %v1794, %v1897
        %v1925 = vadd.f32 %v1795, %v1899
        %1926 = vset.pattern.permute.xlu0 3
        %1927 = vperm.xlu0 %1926, %v452
        %v1928 = vpop.permute.xlu0 %1927
        %1930 = vset.pattern.permute.xlu0 3
        %1931 = vperm.xlu0 %1930, %v453
        %v1932 = vpop.permute.xlu0 %1931
        %1934 = vset.pattern.permute.xlu0 3
        %1935 = vperm.xlu0 %1934, %v454
        %v1936 = vpop.permute.xlu0 %1935
        %1938 = vset.pattern.permute.xlu0 3
        %1939 = vperm.xlu0 %1938, %v455
        %v1940 = vpop.permute.xlu0 %1939
        %1942 = vset.pattern.permute.xlu0 3
        %1943 = vperm.xlu0 %1942, %v456
        %v1944 = vpop.permute.xlu0 %1943
        %1946 = vset.pattern.permute.xlu0 3
        %1947 = vperm.xlu0 %1946, %v457
        %v1948 = vpop.permute.xlu0 %1947
        %1950 = vset.pattern.permute.xlu0 3
        %1951 = vperm.xlu0 %1950, %v458
        %v1952 = vpop.permute.xlu0 %1951
        %1954 = vset.pattern.permute.xlu0 3
        %1955 = vperm.xlu0 %1954, %v459
        %v1956 = vpop.permute.xlu0 %1955
        %1958 = vset.pattern.permute.xlu0 3
        %1959 = vperm.xlu0 %1958, %v460
        %v1960 = vpop.permute.xlu0 %1959
        %1962 = vset.pattern.permute.xlu0 3
        %1963 = vperm.xlu0 %1962, %v461
        %v1964 = vpop.permute.xlu0 %1963
        %1966 = vset.pattern.permute.xlu0 3
        %1967 = vperm.xlu0 %1966, %v462
        %v1968 = vpop.permute.xlu0 %1967
        %1970 = vset.pattern.permute.xlu0 3
        %1971 = vperm.xlu0 %1970, %v463
        %v1972 = vpop.permute.xlu0 %1971
        %1974 = vset.pattern.permute.xlu0 3
        %1975 = vperm.xlu0 %1974, %v464
        %v1976 = vpop.permute.xlu0 %1975
        %v1978 = vmul.f32 %v1928, %v921
        %v1979 = vmul.f32 %v1932, %v927
        %v1980 = vmul.f32 %v1936, %v933
        %v1981 = vmul.f32 %v1940, %v939
        %v1982 = vmul.f32 %v1944, %v945
        %v1983 = vmul.f32 %v1948, %v951
        %v1984 = vmul.f32 %v1952, %v957
        %v1985 = vmul.f32 %v1956, %v963
        %v1986 = vmul.f32 %v1960, %v969
        %v1987 = vmul.f32 %v1964, %v975
        %v1988 = vmul.f32 %v1968, %v981
        %v1989 = vmul.f32 %v1972, %v987
        %v1990 = vmul.f32 %v1976, %v993
        %2004 = vrot.lane.b32.xlu0 %v1978, 32
        %v2005 = vpop.permute.xlu0 %2004
        %2006 = vrot.lane.b32.xlu0 %v1979, 32
        %v2007 = vpop.permute.xlu0 %2006
        %2008 = vrot.lane.b32.xlu0 %v1980, 32
        %v2009 = vpop.permute.xlu0 %2008
        %2010 = vrot.lane.b32.xlu0 %v1981, 32
        %v2011 = vpop.permute.xlu0 %2010
        %2012 = vrot.lane.b32.xlu0 %v1982, 32
        %v2013 = vpop.permute.xlu0 %2012
        %2014 = vrot.lane.b32.xlu0 %v1983, 32
        %v2015 = vpop.permute.xlu0 %2014
        %2016 = vrot.lane.b32.xlu0 %v1984, 32
        %v2017 = vpop.permute.xlu0 %2016
        %2018 = vrot.lane.b32.xlu0 %v1985, 32
        %v2019 = vpop.permute.xlu0 %2018
        %2020 = vrot.lane.b32.xlu0 %v1986, 32
        %v2021 = vpop.permute.xlu0 %2020
        %2022 = vrot.lane.b32.xlu0 %v1987, 32
        %v2023 = vpop.permute.xlu0 %2022
        %2024 = vrot.lane.b32.xlu0 %v1988, 32
        %v2025 = vpop.permute.xlu0 %2024
        %2026 = vrot.lane.b32.xlu0 %v1989, 32
        %v2027 = vpop.permute.xlu0 %2026
        %2028 = vrot.lane.b32.xlu0 %v1990, 32
        %v2029 = vpop.permute.xlu0 %2028
        %v2043 = vadd.f32 %v1913, %v2005
        %v2044 = vadd.f32 %v1914, %v2007
        %v2045 = vadd.f32 %v1915, %v2009
        %v2046 = vadd.f32 %v1916, %v2011
        %v2047 = vadd.f32 %v1917, %v2013
        %v2048 = vadd.f32 %v1918, %v2015
        %v2049 = vadd.f32 %v1919, %v2017
        %v2050 = vadd.f32 %v1920, %v2019
        %v2051 = vadd.f32 %v1921, %v2021
        %v2052 = vadd.f32 %v1922, %v2023
        %v2053 = vadd.f32 %v1923, %v2025
        %v2054 = vadd.f32 %v1924, %v2027
        %v2055 = vadd.f32 %v1925, %v2029
        %2056 = vset.pattern.permute.xlu0 4
        %2057 = vperm.xlu0 %2056, %v452
        %v2058 = vpop.permute.xlu0 %2057
        %2060 = vset.pattern.permute.xlu0 4
        %2061 = vperm.xlu0 %2060, %v453
        %v2062 = vpop.permute.xlu0 %2061
        %2064 = vset.pattern.permute.xlu0 4
        %2065 = vperm.xlu0 %2064, %v454
        %v2066 = vpop.permute.xlu0 %2065
        %2068 = vset.pattern.permute.xlu0 4
        %2069 = vperm.xlu0 %2068, %v455
        %v2070 = vpop.permute.xlu0 %2069
        %2072 = vset.pattern.permute.xlu0 4
        %2073 = vperm.xlu0 %2072, %v456
        %v2074 = vpop.permute.xlu0 %2073
        %2076 = vset.pattern.permute.xlu0 4
        %2077 = vperm.xlu0 %2076, %v457
        %v2078 = vpop.permute.xlu0 %2077
        %2080 = vset.pattern.permute.xlu0 4
        %2081 = vperm.xlu0 %2080, %v458
        %v2082 = vpop.permute.xlu0 %2081
        %2084 = vset.pattern.permute.xlu0 4
        %2085 = vperm.xlu0 %2084, %v459
        %v2086 = vpop.permute.xlu0 %2085
        %2088 = vset.pattern.permute.xlu0 4
        %2089 = vperm.xlu0 %2088, %v460
        %v2090 = vpop.permute.xlu0 %2089
        %2092 = vset.pattern.permute.xlu0 4
        %2093 = vperm.xlu0 %2092, %v461
        %v2094 = vpop.permute.xlu0 %2093
        %2096 = vset.pattern.permute.xlu0 4
        %2097 = vperm.xlu0 %2096, %v462
        %v2098 = vpop.permute.xlu0 %2097
        %2100 = vset.pattern.permute.xlu0 4
        %2101 = vperm.xlu0 %2100, %v463
        %v2102 = vpop.permute.xlu0 %2101
        %2104 = vset.pattern.permute.xlu0 4
        %2105 = vperm.xlu0 %2104, %v464
        %v2106 = vpop.permute.xlu0 %2105
        %v2108 = vmul.f32 %v2058, %v923
        %v2109 = vmul.f32 %v2062, %v929
        %v2110 = vmul.f32 %v2066, %v935
        %v2111 = vmul.f32 %v2070, %v941
        %v2112 = vmul.f32 %v2074, %v947
        %v2113 = vmul.f32 %v2078, %v953
        %v2114 = vmul.f32 %v2082, %v959
        %v2115 = vmul.f32 %v2086, %v965
        %v2116 = vmul.f32 %v2090, %v971
        %v2117 = vmul.f32 %v2094, %v977
        %v2118 = vmul.f32 %v2098, %v983
        %v2119 = vmul.f32 %v2102, %v989
        %v2120 = vmul.f32 %v2106, %v995
        %v2121 = vadd.f32 %v2043, %v2108
        %v2122 = vadd.f32 %v2044, %v2109
        %v2123 = vadd.f32 %v2045, %v2110
        %v2124 = vadd.f32 %v2046, %v2111
        %v2125 = vadd.f32 %v2047, %v2112
        %v2126 = vadd.f32 %v2048, %v2113
        %v2127 = vadd.f32 %v2049, %v2114
        %v2128 = vadd.f32 %v2050, %v2115
        %v2129 = vadd.f32 %v2051, %v2116
        %v2130 = vadd.f32 %v2052, %v2117
        %v2131 = vadd.f32 %v2053, %v2118
        %v2132 = vadd.f32 %v2054, %v2119
        %v2133 = vadd.f32 %v2055, %v2120
        %2134 = vset.pattern.permute.xlu0 5
        %2135 = vperm.xlu0 %2134, %v452
        %v2136 = vpop.permute.xlu0 %2135
        %2138 = vset.pattern.permute.xlu0 5
        %2139 = vperm.xlu0 %2138, %v453
        %v2140 = vpop.permute.xlu0 %2139
        %2142 = vset.pattern.permute.xlu0 5
        %2143 = vperm.xlu0 %2142, %v454
        %v2144 = vpop.permute.xlu0 %2143
        %2146 = vset.pattern.permute.xlu0 5
        %2147 = vperm.xlu0 %2146, %v455
        %v2148 = vpop.permute.xlu0 %2147
        %2150 = vset.pattern.permute.xlu0 5
        %2151 = vperm.xlu0 %2150, %v456
        %v2152 = vpop.permute.xlu0 %2151
        %2154 = vset.pattern.permute.xlu0 5
        %2155 = vperm.xlu0 %2154, %v457
        %v2156 = vpop.permute.xlu0 %2155
        %2158 = vset.pattern.permute.xlu0 5
        %2159 = vperm.xlu0 %2158, %v458
        %v2160 = vpop.permute.xlu0 %2159
        %2162 = vset.pattern.permute.xlu0 5
        %2163 = vperm.xlu0 %2162, %v459
        %v2164 = vpop.permute.xlu0 %2163
        %2166 = vset.pattern.permute.xlu0 5
        %2167 = vperm.xlu0 %2166, %v460
        %v2168 = vpop.permute.xlu0 %2167
        %2170 = vset.pattern.permute.xlu0 5
        %2171 = vperm.xlu0 %2170, %v461
        %v2172 = vpop.permute.xlu0 %2171
        %2174 = vset.pattern.permute.xlu0 5
        %2175 = vperm.xlu0 %2174, %v462
        %v2176 = vpop.permute.xlu0 %2175
        %2178 = vset.pattern.permute.xlu0 5
        %2179 = vperm.xlu0 %2178, %v463
        %v2180 = vpop.permute.xlu0 %2179
        %2182 = vset.pattern.permute.xlu0 5
        %2183 = vperm.xlu0 %2182, %v464
        %v2184 = vpop.permute.xlu0 %2183
        %v2186 = vmul.f32 %v2136, %v923
        %v2187 = vmul.f32 %v2140, %v929
        %v2188 = vmul.f32 %v2144, %v935
        %v2189 = vmul.f32 %v2148, %v941
        %v2190 = vmul.f32 %v2152, %v947
        %v2191 = vmul.f32 %v2156, %v953
        %v2192 = vmul.f32 %v2160, %v959
        %v2193 = vmul.f32 %v2164, %v965
        %v2194 = vmul.f32 %v2168, %v971
        %v2195 = vmul.f32 %v2172, %v977
        %v2196 = vmul.f32 %v2176, %v983
        %v2197 = vmul.f32 %v2180, %v989
        %v2198 = vmul.f32 %v2184, %v995
        %2212 = vrot.lane.b32.xlu0 %v2186, 96
        %v2213 = vpop.permute.xlu0 %2212
        %2214 = vrot.lane.b32.xlu0 %v2187, 96
        %v2215 = vpop.permute.xlu0 %2214
        %2216 = vrot.lane.b32.xlu0 %v2188, 96
        %v2217 = vpop.permute.xlu0 %2216
        %2218 = vrot.lane.b32.xlu0 %v2189, 96
        %v2219 = vpop.permute.xlu0 %2218
        %2220 = vrot.lane.b32.xlu0 %v2190, 96
        %v2221 = vpop.permute.xlu0 %2220
        %2222 = vrot.lane.b32.xlu0 %v2191, 96
        %v2223 = vpop.permute.xlu0 %2222
        %2224 = vrot.lane.b32.xlu0 %v2192, 96
        %v2225 = vpop.permute.xlu0 %2224
        %2226 = vrot.lane.b32.xlu0 %v2193, 96
        %v2227 = vpop.permute.xlu0 %2226
        %2228 = vrot.lane.b32.xlu0 %v2194, 96
        %v2229 = vpop.permute.xlu0 %2228
        %2230 = vrot.lane.b32.xlu0 %v2195, 96
        %v2231 = vpop.permute.xlu0 %2230
        %2232 = vrot.lane.b32.xlu0 %v2196, 96
        %v2233 = vpop.permute.xlu0 %2232
        %2234 = vrot.lane.b32.xlu0 %v2197, 96
        %v2235 = vpop.permute.xlu0 %2234
        %2236 = vrot.lane.b32.xlu0 %v2198, 96
        %v2237 = vpop.permute.xlu0 %2236
        %v2251 = vadd.f32 %v2121, %v2213
        %v2252 = vadd.f32 %v2122, %v2215
        %v2253 = vadd.f32 %v2123, %v2217
        %v2254 = vadd.f32 %v2124, %v2219
        %v2255 = vadd.f32 %v2125, %v2221
        %v2256 = vadd.f32 %v2126, %v2223
        %v2257 = vadd.f32 %v2127, %v2225
        %v2258 = vadd.f32 %v2128, %v2227
        %v2259 = vadd.f32 %v2129, %v2229
        %v2260 = vadd.f32 %v2130, %v2231
        %v2261 = vadd.f32 %v2131, %v2233
        %v2262 = vadd.f32 %v2132, %v2235
        %v2263 = vadd.f32 %v2133, %v2237
        %2264 = vset.pattern.permute.xlu0 6
        %2265 = vperm.xlu0 %2264, %v452
        %v2266 = vpop.permute.xlu0 %2265
        %2268 = vset.pattern.permute.xlu0 6
        %2269 = vperm.xlu0 %2268, %v453
        %v2270 = vpop.permute.xlu0 %2269
        %2272 = vset.pattern.permute.xlu0 6
        %2273 = vperm.xlu0 %2272, %v454
        %v2274 = vpop.permute.xlu0 %2273
        %2276 = vset.pattern.permute.xlu0 6
        %2277 = vperm.xlu0 %2276, %v455
        %v2278 = vpop.permute.xlu0 %2277
        %2280 = vset.pattern.permute.xlu0 6
        %2281 = vperm.xlu0 %2280, %v456
        %v2282 = vpop.permute.xlu0 %2281
        %2284 = vset.pattern.permute.xlu0 6
        %2285 = vperm.xlu0 %2284, %v457
        %v2286 = vpop.permute.xlu0 %2285
        %2288 = vset.pattern.permute.xlu0 6
        %2289 = vperm.xlu0 %2288, %v458
        %v2290 = vpop.permute.xlu0 %2289
        %2292 = vset.pattern.permute.xlu0 6
        %2293 = vperm.xlu0 %2292, %v459
        %v2294 = vpop.permute.xlu0 %2293
        %2296 = vset.pattern.permute.xlu0 6
        %2297 = vperm.xlu0 %2296, %v460
        %v2298 = vpop.permute.xlu0 %2297
        %2300 = vset.pattern.permute.xlu0 6
        %2301 = vperm.xlu0 %2300, %v461
        %v2302 = vpop.permute.xlu0 %2301
        %2304 = vset.pattern.permute.xlu0 6
        %2305 = vperm.xlu0 %2304, %v462
        %v2306 = vpop.permute.xlu0 %2305
        %2308 = vset.pattern.permute.xlu0 6
        %2309 = vperm.xlu0 %2308, %v463
        %v2310 = vpop.permute.xlu0 %2309
        %2312 = vset.pattern.permute.xlu0 6
        %2313 = vperm.xlu0 %2312, %v464
        %v2314 = vpop.permute.xlu0 %2313
        %v2316 = vmul.f32 %v2266, %v923
        %v2317 = vmul.f32 %v2270, %v929
        %v2318 = vmul.f32 %v2274, %v935
        %v2319 = vmul.f32 %v2278, %v941
        %v2320 = vmul.f32 %v2282, %v947
        %v2321 = vmul.f32 %v2286, %v953
        %v2322 = vmul.f32 %v2290, %v959
        %v2323 = vmul.f32 %v2294, %v965
        %v2324 = vmul.f32 %v2298, %v971
        %v2325 = vmul.f32 %v2302, %v977
        %v2326 = vmul.f32 %v2306, %v983
        %v2327 = vmul.f32 %v2310, %v989
        %v2328 = vmul.f32 %v2314, %v995
        %2342 = vrot.lane.b32.xlu0 %v2316, 64
        %v2343 = vpop.permute.xlu0 %2342
        %2344 = vrot.lane.b32.xlu0 %v2317, 64
        %v2345 = vpop.permute.xlu0 %2344
        %2346 = vrot.lane.b32.xlu0 %v2318, 64
        %v2347 = vpop.permute.xlu0 %2346
        %2348 = vrot.lane.b32.xlu0 %v2319, 64
        %v2349 = vpop.permute.xlu0 %2348
        %2350 = vrot.lane.b32.xlu0 %v2320, 64
        %v2351 = vpop.permute.xlu0 %2350
        %2352 = vrot.lane.b32.xlu0 %v2321, 64
        %v2353 = vpop.permute.xlu0 %2352
        %2354 = vrot.lane.b32.xlu0 %v2322, 64
        %v2355 = vpop.permute.xlu0 %2354
        %2356 = vrot.lane.b32.xlu0 %v2323, 64
        %v2357 = vpop.permute.xlu0 %2356
        %2358 = vrot.lane.b32.xlu0 %v2324, 64
        %v2359 = vpop.permute.xlu0 %2358
        %2360 = vrot.lane.b32.xlu0 %v2325, 64
        %v2361 = vpop.permute.xlu0 %2360
        %2362 = vrot.lane.b32.xlu0 %v2326, 64
        %v2363 = vpop.permute.xlu0 %2362
        %2364 = vrot.lane.b32.xlu0 %v2327, 64
        %v2365 = vpop.permute.xlu0 %2364
        %2366 = vrot.lane.b32.xlu0 %v2328, 64
        %v2367 = vpop.permute.xlu0 %2366
        %v2381 = vadd.f32 %v2251, %v2343
        %v2382 = vadd.f32 %v2252, %v2345
        %v2383 = vadd.f32 %v2253, %v2347
        %v2384 = vadd.f32 %v2254, %v2349
        %v2385 = vadd.f32 %v2255, %v2351
        %v2386 = vadd.f32 %v2256, %v2353
        %v2387 = vadd.f32 %v2257, %v2355
        %v2388 = vadd.f32 %v2258, %v2357
        %v2389 = vadd.f32 %v2259, %v2359
        %v2390 = vadd.f32 %v2260, %v2361
        %v2391 = vadd.f32 %v2261, %v2363
        %v2392 = vadd.f32 %v2262, %v2365
        %v2393 = vadd.f32 %v2263, %v2367
        %2394 = vset.pattern.permute.xlu0 7
        %2395 = vperm.xlu0 %2394, %v452
        %v2396 = vpop.permute.xlu0 %2395
        %2398 = vset.pattern.permute.xlu0 7
        %2399 = vperm.xlu0 %2398, %v453
        %v2400 = vpop.permute.xlu0 %2399
        %2402 = vset.pattern.permute.xlu0 7
        %2403 = vperm.xlu0 %2402, %v454
        %v2404 = vpop.permute.xlu0 %2403
        %2406 = vset.pattern.permute.xlu0 7
        %2407 = vperm.xlu0 %2406, %v455
        %v2408 = vpop.permute.xlu0 %2407
        %2410 = vset.pattern.permute.xlu0 7
        %2411 = vperm.xlu0 %2410, %v456
        %v2412 = vpop.permute.xlu0 %2411
        %2414 = vset.pattern.permute.xlu0 7
        %2415 = vperm.xlu0 %2414, %v457
        %v2416 = vpop.permute.xlu0 %2415
        %2418 = vset.pattern.permute.xlu0 7
        %2419 = vperm.xlu0 %2418, %v458
        %v2420 = vpop.permute.xlu0 %2419
        %2422 = vset.pattern.permute.xlu0 7
        %2423 = vperm.xlu0 %2422, %v459
        %v2424 = vpop.permute.xlu0 %2423
        %2426 = vset.pattern.permute.xlu0 7
        %2427 = vperm.xlu0 %2426, %v460
        %v2428 = vpop.permute.xlu0 %2427
        %2430 = vset.pattern.permute.xlu0 7
        %2431 = vperm.xlu0 %2430, %v461
        %v2432 = vpop.permute.xlu0 %2431
        %2434 = vset.pattern.permute.xlu0 7
        %2435 = vperm.xlu0 %2434, %v462
        %v2436 = vpop.permute.xlu0 %2435
        %2438 = vset.pattern.permute.xlu0 7
        %2439 = vperm.xlu0 %2438, %v463
        %v2440 = vpop.permute.xlu0 %2439
        %2442 = vset.pattern.permute.xlu0 7
        %2443 = vperm.xlu0 %2442, %v464
        %v2444 = vpop.permute.xlu0 %2443
        %v2446 = vmul.f32 %v2396, %v923
        %v2447 = vmul.f32 %v2400, %v929
        %v2448 = vmul.f32 %v2404, %v935
        %v2449 = vmul.f32 %v2408, %v941
        %v2450 = vmul.f32 %v2412, %v947
        %v2451 = vmul.f32 %v2416, %v953
        %v2452 = vmul.f32 %v2420, %v959
        %v2453 = vmul.f32 %v2424, %v965
        %v2454 = vmul.f32 %v2428, %v971
        %v2455 = vmul.f32 %v2432, %v977
        %v2456 = vmul.f32 %v2436, %v983
        %v2457 = vmul.f32 %v2440, %v989
        %v2458 = vmul.f32 %v2444, %v995
        %2472 = vrot.lane.b32.xlu0 %v2446, 32
        %v2473 = vpop.permute.xlu0 %2472
        %2474 = vrot.lane.b32.xlu0 %v2447, 32
        %v2475 = vpop.permute.xlu0 %2474
        %2476 = vrot.lane.b32.xlu0 %v2448, 32
        %v2477 = vpop.permute.xlu0 %2476
        %2478 = vrot.lane.b32.xlu0 %v2449, 32
        %v2479 = vpop.permute.xlu0 %2478
        %2480 = vrot.lane.b32.xlu0 %v2450, 32
        %v2481 = vpop.permute.xlu0 %2480
        %2482 = vrot.lane.b32.xlu0 %v2451, 32
        %v2483 = vpop.permute.xlu0 %2482
        %2484 = vrot.lane.b32.xlu0 %v2452, 32
        %v2485 = vpop.permute.xlu0 %2484
        %2486 = vrot.lane.b32.xlu0 %v2453, 32
        %v2487 = vpop.permute.xlu0 %2486
        %2488 = vrot.lane.b32.xlu0 %v2454, 32
        %v2489 = vpop.permute.xlu0 %2488
        %2490 = vrot.lane.b32.xlu0 %v2455, 32
        %v2491 = vpop.permute.xlu0 %2490
        %2492 = vrot.lane.b32.xlu0 %v2456, 32
        %v2493 = vpop.permute.xlu0 %2492
        %2494 = vrot.lane.b32.xlu0 %v2457, 32
        %v2495 = vpop.permute.xlu0 %2494
        %2496 = vrot.lane.b32.xlu0 %v2458, 32
        %v2497 = vpop.permute.xlu0 %2496
        %v2511 = vadd.f32 %v2381, %v2473
        %v2512 = vadd.f32 %v2382, %v2475
        %v2513 = vadd.f32 %v2383, %v2477
        %v2514 = vadd.f32 %v2384, %v2479
        %v2515 = vadd.f32 %v2385, %v2481
        %v2516 = vadd.f32 %v2386, %v2483
        %v2517 = vadd.f32 %v2387, %v2485
        %v2518 = vadd.f32 %v2388, %v2487
        %v2519 = vadd.f32 %v2389, %v2489
        %v2520 = vadd.f32 %v2390, %v2491
        %v2521 = vadd.f32 %v2391, %v2493
        %v2522 = vadd.f32 %v2392, %v2495
        %v2523 = vadd.f32 %v2393, %v2497
        %2524 = vset.pattern.permute.xlu0 8
        %2525 = vperm.xlu0 %2524, %v452
        %v2526 = vpop.permute.xlu0 %2525
        %2528 = vset.pattern.permute.xlu0 8
        %2529 = vperm.xlu0 %2528, %v453
        %v2530 = vpop.permute.xlu0 %2529
        %2532 = vset.pattern.permute.xlu0 8
        %2533 = vperm.xlu0 %2532, %v454
        %v2534 = vpop.permute.xlu0 %2533
        %2536 = vset.pattern.permute.xlu0 8
        %2537 = vperm.xlu0 %2536, %v455
        %v2538 = vpop.permute.xlu0 %2537
        %2540 = vset.pattern.permute.xlu0 8
        %2541 = vperm.xlu0 %2540, %v456
        %v2542 = vpop.permute.xlu0 %2541
        %2544 = vset.pattern.permute.xlu0 8
        %2545 = vperm.xlu0 %2544, %v457
        %v2546 = vpop.permute.xlu0 %2545
        %2548 = vset.pattern.permute.xlu0 8
        %2549 = vperm.xlu0 %2548, %v458
        %v2550 = vpop.permute.xlu0 %2549
        %2552 = vset.pattern.permute.xlu0 8
        %2553 = vperm.xlu0 %2552, %v459
        %v2554 = vpop.permute.xlu0 %2553
        %2556 = vset.pattern.permute.xlu0 8
        %2557 = vperm.xlu0 %2556, %v460
        %v2558 = vpop.permute.xlu0 %2557
        %2560 = vset.pattern.permute.xlu0 8
        %2561 = vperm.xlu0 %2560, %v461
        %v2562 = vpop.permute.xlu0 %2561
        %2564 = vset.pattern.permute.xlu0 8
        %2565 = vperm.xlu0 %2564, %v462
        %v2566 = vpop.permute.xlu0 %2565
        %2568 = vset.pattern.permute.xlu0 8
        %2569 = vperm.xlu0 %2568, %v463
        %v2570 = vpop.permute.xlu0 %2569
        %2572 = vset.pattern.permute.xlu0 8
        %2573 = vperm.xlu0 %2572, %v464
        %v2574 = vpop.permute.xlu0 %2573
        %v2576 = vmul.f32 %v2526, %v1064
        %v2577 = vmul.f32 %v2530, %v1070
        %v2578 = vmul.f32 %v2534, %v1076
        %v2579 = vmul.f32 %v2538, %v1082
        %v2580 = vmul.f32 %v2542, %v1088
        %v2581 = vmul.f32 %v2546, %v1094
        %v2582 = vmul.f32 %v2550, %v1100
        %v2583 = vmul.f32 %v2554, %v1106
        %v2584 = vmul.f32 %v2558, %v1112
        %v2585 = vmul.f32 %v2562, %v1118
        %v2586 = vmul.f32 %v2566, %v1124
        %v2587 = vmul.f32 %v2570, %v1130
        %v2588 = vmul.f32 %v2574, %v1136
        %v2589 = vadd.f32 %v2511, %v2576
        %v2590 = vadd.f32 %v2512, %v2577
        %v2591 = vadd.f32 %v2513, %v2578
        %v2592 = vadd.f32 %v2514, %v2579
        %v2593 = vadd.f32 %v2515, %v2580
        %v2594 = vadd.f32 %v2516, %v2581
        %v2595 = vadd.f32 %v2517, %v2582
        %v2596 = vadd.f32 %v2518, %v2583
        %v2597 = vadd.f32 %v2519, %v2584
        %v2598 = vadd.f32 %v2520, %v2585
        %v2599 = vadd.f32 %v2521, %v2586
        %v2600 = vadd.f32 %v2522, %v2587
        %v2601 = vadd.f32 %v2523, %v2588
        %2602 = vset.pattern.permute.xlu0 9
        %2603 = vperm.xlu0 %2602, %v452
        %v2604 = vpop.permute.xlu0 %2603
        %2606 = vset.pattern.permute.xlu0 9
        %2607 = vperm.xlu0 %2606, %v453
        %v2608 = vpop.permute.xlu0 %2607
        %2610 = vset.pattern.permute.xlu0 9
        %2611 = vperm.xlu0 %2610, %v454
        %v2612 = vpop.permute.xlu0 %2611
        %2614 = vset.pattern.permute.xlu0 9
        %2615 = vperm.xlu0 %2614, %v455
        %v2616 = vpop.permute.xlu0 %2615
        %2618 = vset.pattern.permute.xlu0 9
        %2619 = vperm.xlu0 %2618, %v456
        %v2620 = vpop.permute.xlu0 %2619
        %2622 = vset.pattern.permute.xlu0 9
        %2623 = vperm.xlu0 %2622, %v457
        %v2624 = vpop.permute.xlu0 %2623
        %2626 = vset.pattern.permute.xlu0 9
        %2627 = vperm.xlu0 %2626, %v458
        %v2628 = vpop.permute.xlu0 %2627
        %2630 = vset.pattern.permute.xlu0 9
        %2631 = vperm.xlu0 %2630, %v459
        %v2632 = vpop.permute.xlu0 %2631
        %2634 = vset.pattern.permute.xlu0 9
        %2635 = vperm.xlu0 %2634, %v460
        %v2636 = vpop.permute.xlu0 %2635
        %2638 = vset.pattern.permute.xlu0 9
        %2639 = vperm.xlu0 %2638, %v461
        %v2640 = vpop.permute.xlu0 %2639
        %2642 = vset.pattern.permute.xlu0 9
        %2643 = vperm.xlu0 %2642, %v462
        %v2644 = vpop.permute.xlu0 %2643
        %2646 = vset.pattern.permute.xlu0 9
        %2647 = vperm.xlu0 %2646, %v463
        %v2648 = vpop.permute.xlu0 %2647
        %2650 = vset.pattern.permute.xlu0 9
        %2651 = vperm.xlu0 %2650, %v464
        %v2652 = vpop.permute.xlu0 %2651
        %v2654 = vmul.f32 %v2604, %v1064
        %v2655 = vmul.f32 %v2608, %v1070
        %v2656 = vmul.f32 %v2612, %v1076
        %v2657 = vmul.f32 %v2616, %v1082
        %v2658 = vmul.f32 %v2620, %v1088
        %v2659 = vmul.f32 %v2624, %v1094
        %v2660 = vmul.f32 %v2628, %v1100
        %v2661 = vmul.f32 %v2632, %v1106
        %v2662 = vmul.f32 %v2636, %v1112
        %v2663 = vmul.f32 %v2640, %v1118
        %v2664 = vmul.f32 %v2644, %v1124
        %v2665 = vmul.f32 %v2648, %v1130
        %v2666 = vmul.f32 %v2652, %v1136
        %2680 = vrot.lane.b32.xlu0 %v2654, 96
        %v2681 = vpop.permute.xlu0 %2680
        %2682 = vrot.lane.b32.xlu0 %v2655, 96
        %v2683 = vpop.permute.xlu0 %2682
        %2684 = vrot.lane.b32.xlu0 %v2656, 96
        %v2685 = vpop.permute.xlu0 %2684
        %2686 = vrot.lane.b32.xlu0 %v2657, 96
        %v2687 = vpop.permute.xlu0 %2686
        %2688 = vrot.lane.b32.xlu0 %v2658, 96
        %v2689 = vpop.permute.xlu0 %2688
        %2690 = vrot.lane.b32.xlu0 %v2659, 96
        %v2691 = vpop.permute.xlu0 %2690
        %2692 = vrot.lane.b32.xlu0 %v2660, 96
        %v2693 = vpop.permute.xlu0 %2692
        %2694 = vrot.lane.b32.xlu0 %v2661, 96
        %v2695 = vpop.permute.xlu0 %2694
        %2696 = vrot.lane.b32.xlu0 %v2662, 96
        %v2697 = vpop.permute.xlu0 %2696
        %2698 = vrot.lane.b32.xlu0 %v2663, 96
        %v2699 = vpop.permute.xlu0 %2698
        %2700 = vrot.lane.b32.xlu0 %v2664, 96
        %v2701 = vpop.permute.xlu0 %2700
        %2702 = vrot.lane.b32.xlu0 %v2665, 96
        %v2703 = vpop.permute.xlu0 %2702
        %2704 = vrot.lane.b32.xlu0 %v2666, 96
        %v2705 = vpop.permute.xlu0 %2704
        %v2719 = vadd.f32 %v2589, %v2681
        %v2720 = vadd.f32 %v2590, %v2683
        %v2721 = vadd.f32 %v2591, %v2685
        %v2722 = vadd.f32 %v2592, %v2687
        %v2723 = vadd.f32 %v2593, %v2689
        %v2724 = vadd.f32 %v2594, %v2691
        %v2725 = vadd.f32 %v2595, %v2693
        %v2726 = vadd.f32 %v2596, %v2695
        %v2727 = vadd.f32 %v2597, %v2697
        %v2728 = vadd.f32 %v2598, %v2699
        %v2729 = vadd.f32 %v2599, %v2701
        %v2730 = vadd.f32 %v2600, %v2703
        %v2731 = vadd.f32 %v2601, %v2705
        %2732 = vset.pattern.permute.xlu0 10
        %2733 = vperm.xlu0 %2732, %v452
        %v2734 = vpop.permute.xlu0 %2733
        %2736 = vset.pattern.permute.xlu0 10
        %2737 = vperm.xlu0 %2736, %v453
        %v2738 = vpop.permute.xlu0 %2737
        %2740 = vset.pattern.permute.xlu0 10
        %2741 = vperm.xlu0 %2740, %v454
        %v2742 = vpop.permute.xlu0 %2741
        %2744 = vset.pattern.permute.xlu0 10
        %2745 = vperm.xlu0 %2744, %v455
        %v2746 = vpop.permute.xlu0 %2745
        %2748 = vset.pattern.permute.xlu0 10
        %2749 = vperm.xlu0 %2748, %v456
        %v2750 = vpop.permute.xlu0 %2749
        %2752 = vset.pattern.permute.xlu0 10
        %2753 = vperm.xlu0 %2752, %v457
        %v2754 = vpop.permute.xlu0 %2753
        %2756 = vset.pattern.permute.xlu0 10
        %2757 = vperm.xlu0 %2756, %v458
        %v2758 = vpop.permute.xlu0 %2757
        %2760 = vset.pattern.permute.xlu0 10
        %2761 = vperm.xlu0 %2760, %v459
        %v2762 = vpop.permute.xlu0 %2761
        %2764 = vset.pattern.permute.xlu0 10
        %2765 = vperm.xlu0 %2764, %v460
        %v2766 = vpop.permute.xlu0 %2765
        %2768 = vset.pattern.permute.xlu0 10
        %2769 = vperm.xlu0 %2768, %v461
        %v2770 = vpop.permute.xlu0 %2769
        %2772 = vset.pattern.permute.xlu0 10
        %2773 = vperm.xlu0 %2772, %v462
        %v2774 = vpop.permute.xlu0 %2773
        %2776 = vset.pattern.permute.xlu0 10
        %2777 = vperm.xlu0 %2776, %v463
        %v2778 = vpop.permute.xlu0 %2777
        %2780 = vset.pattern.permute.xlu0 10
        %2781 = vperm.xlu0 %2780, %v464
        %v2782 = vpop.permute.xlu0 %2781
        %v2784 = vmul.f32 %v2734, %v1064
        %v2785 = vmul.f32 %v2738, %v1070
        %v2786 = vmul.f32 %v2742, %v1076
        %v2787 = vmul.f32 %v2746, %v1082
        %v2788 = vmul.f32 %v2750, %v1088
        %v2789 = vmul.f32 %v2754, %v1094
        %v2790 = vmul.f32 %v2758, %v1100
        %v2791 = vmul.f32 %v2762, %v1106
        %v2792 = vmul.f32 %v2766, %v1112
        %v2793 = vmul.f32 %v2770, %v1118
        %v2794 = vmul.f32 %v2774, %v1124
        %v2795 = vmul.f32 %v2778, %v1130
        %v2796 = vmul.f32 %v2782, %v1136
        %2810 = vrot.lane.b32.xlu0 %v2784, 64
        %v2811 = vpop.permute.xlu0 %2810
        %2812 = vrot.lane.b32.xlu0 %v2785, 64
        %v2813 = vpop.permute.xlu0 %2812
        %2814 = vrot.lane.b32.xlu0 %v2786, 64
        %v2815 = vpop.permute.xlu0 %2814
        %2816 = vrot.lane.b32.xlu0 %v2787, 64
        %v2817 = vpop.permute.xlu0 %2816
        %2818 = vrot.lane.b32.xlu0 %v2788, 64
        %v2819 = vpop.permute.xlu0 %2818
        %2820 = vrot.lane.b32.xlu0 %v2789, 64
        %v2821 = vpop.permute.xlu0 %2820
        %2822 = vrot.lane.b32.xlu0 %v2790, 64
        %v2823 = vpop.permute.xlu0 %2822
        %2824 = vrot.lane.b32.xlu0 %v2791, 64
        %v2825 = vpop.permute.xlu0 %2824
        %2826 = vrot.lane.b32.xlu0 %v2792, 64
        %v2827 = vpop.permute.xlu0 %2826
        %2828 = vrot.lane.b32.xlu0 %v2793, 64
        %v2829 = vpop.permute.xlu0 %2828
        %2830 = vrot.lane.b32.xlu0 %v2794, 64
        %v2831 = vpop.permute.xlu0 %2830
        %2832 = vrot.lane.b32.xlu0 %v2795, 64
        %v2833 = vpop.permute.xlu0 %2832
        %2834 = vrot.lane.b32.xlu0 %v2796, 64
        %v2835 = vpop.permute.xlu0 %2834
        %v2849 = vadd.f32 %v2719, %v2811
        %v2850 = vadd.f32 %v2720, %v2813
        %v2851 = vadd.f32 %v2721, %v2815
        %v2852 = vadd.f32 %v2722, %v2817
        %v2853 = vadd.f32 %v2723, %v2819
        %v2854 = vadd.f32 %v2724, %v2821
        %v2855 = vadd.f32 %v2725, %v2823
        %v2856 = vadd.f32 %v2726, %v2825
        %v2857 = vadd.f32 %v2727, %v2827
        %v2858 = vadd.f32 %v2728, %v2829
        %v2859 = vadd.f32 %v2729, %v2831
        %v2860 = vadd.f32 %v2730, %v2833
        %v2861 = vadd.f32 %v2731, %v2835
        %2862 = vset.pattern.permute.xlu0 11
        %2863 = vperm.xlu0 %2862, %v452
        %v2864 = vpop.permute.xlu0 %2863
        %2866 = vset.pattern.permute.xlu0 11
        %2867 = vperm.xlu0 %2866, %v453
        %v2868 = vpop.permute.xlu0 %2867
        %2870 = vset.pattern.permute.xlu0 11
        %2871 = vperm.xlu0 %2870, %v454
        %v2872 = vpop.permute.xlu0 %2871
        %2874 = vset.pattern.permute.xlu0 11
        %2875 = vperm.xlu0 %2874, %v455
        %v2876 = vpop.permute.xlu0 %2875
        %2878 = vset.pattern.permute.xlu0 11
        %2879 = vperm.xlu0 %2878, %v456
        %v2880 = vpop.permute.xlu0 %2879
        %2882 = vset.pattern.permute.xlu0 11
        %2883 = vperm.xlu0 %2882, %v457
        %v2884 = vpop.permute.xlu0 %2883
        %2886 = vset.pattern.permute.xlu0 11
        %2887 = vperm.xlu0 %2886, %v458
        %v2888 = vpop.permute.xlu0 %2887
        %2890 = vset.pattern.permute.xlu0 11
        %2891 = vperm.xlu0 %2890, %v459
        %v2892 = vpop.permute.xlu0 %2891
        %2894 = vset.pattern.permute.xlu0 11
        %2895 = vperm.xlu0 %2894, %v460
        %v2896 = vpop.permute.xlu0 %2895
        %2898 = vset.pattern.permute.xlu0 11
        %2899 = vperm.xlu0 %2898, %v461
        %v2900 = vpop.permute.xlu0 %2899
        %2902 = vset.pattern.permute.xlu0 11
        %2903 = vperm.xlu0 %2902, %v462
        %v2904 = vpop.permute.xlu0 %2903
        %2906 = vset.pattern.permute.xlu0 11
        %2907 = vperm.xlu0 %2906, %v463
        %v2908 = vpop.permute.xlu0 %2907
        %2910 = vset.pattern.permute.xlu0 11
        %2911 = vperm.xlu0 %2910, %v464
        %v2912 = vpop.permute.xlu0 %2911
        %v2914 = vmul.f32 %v2864, %v1064
        %v2915 = vmul.f32 %v2868, %v1070
        %v2916 = vmul.f32 %v2872, %v1076
        %v2917 = vmul.f32 %v2876, %v1082
        %v2918 = vmul.f32 %v2880, %v1088
        %v2919 = vmul.f32 %v2884, %v1094
        %v2920 = vmul.f32 %v2888, %v1100
        %v2921 = vmul.f32 %v2892, %v1106
        %v2922 = vmul.f32 %v2896, %v1112
        %v2923 = vmul.f32 %v2900, %v1118
        %v2924 = vmul.f32 %v2904, %v1124
        %v2925 = vmul.f32 %v2908, %v1130
        %v2926 = vmul.f32 %v2912, %v1136
        %2940 = vrot.lane.b32.xlu0 %v2914, 32
        %v2941 = vpop.permute.xlu0 %2940
        %2942 = vrot.lane.b32.xlu0 %v2915, 32
        %v2943 = vpop.permute.xlu0 %2942
        %2944 = vrot.lane.b32.xlu0 %v2916, 32
        %v2945 = vpop.permute.xlu0 %2944
        %2946 = vrot.lane.b32.xlu0 %v2917, 32
        %v2947 = vpop.permute.xlu0 %2946
        %2948 = vrot.lane.b32.xlu0 %v2918, 32
        %v2949 = vpop.permute.xlu0 %2948
        %2950 = vrot.lane.b32.xlu0 %v2919, 32
        %v2951 = vpop.permute.xlu0 %2950
        %2952 = vrot.lane.b32.xlu0 %v2920, 32
        %v2953 = vpop.permute.xlu0 %2952
        %2954 = vrot.lane.b32.xlu0 %v2921, 32
        %v2955 = vpop.permute.xlu0 %2954
        %2956 = vrot.lane.b32.xlu0 %v2922, 32
        %v2957 = vpop.permute.xlu0 %2956
        %2958 = vrot.lane.b32.xlu0 %v2923, 32
        %v2959 = vpop.permute.xlu0 %2958
        %2960 = vrot.lane.b32.xlu0 %v2924, 32
        %v2961 = vpop.permute.xlu0 %2960
        %2962 = vrot.lane.b32.xlu0 %v2925, 32
        %v2963 = vpop.permute.xlu0 %2962
        %2964 = vrot.lane.b32.xlu0 %v2926, 32
        %v2965 = vpop.permute.xlu0 %2964
        %v2979 = vadd.f32 %v2849, %v2941
        %v2980 = vadd.f32 %v2850, %v2943
        %v2981 = vadd.f32 %v2851, %v2945
        %v2982 = vadd.f32 %v2852, %v2947
        %v2983 = vadd.f32 %v2853, %v2949
        %v2984 = vadd.f32 %v2854, %v2951
        %v2985 = vadd.f32 %v2855, %v2953
        %v2986 = vadd.f32 %v2856, %v2955
        %v2987 = vadd.f32 %v2857, %v2957
        %v2988 = vadd.f32 %v2858, %v2959
        %v2989 = vadd.f32 %v2859, %v2961
        %v2990 = vadd.f32 %v2860, %v2963
        %v2991 = vadd.f32 %v2861, %v2965
        %2992 = vset.pattern.permute.xlu0 12
        %2993 = vperm.xlu0 %2992, %v452
        %v2994 = vpop.permute.xlu0 %2993
        %2996 = vset.pattern.permute.xlu0 12
        %2997 = vperm.xlu0 %2996, %v453
        %v2998 = vpop.permute.xlu0 %2997
        %3000 = vset.pattern.permute.xlu0 12
        %3001 = vperm.xlu0 %3000, %v454
        %v3002 = vpop.permute.xlu0 %3001
        %3004 = vset.pattern.permute.xlu0 12
        %3005 = vperm.xlu0 %3004, %v455
        %v3006 = vpop.permute.xlu0 %3005
        %3008 = vset.pattern.permute.xlu0 12
        %3009 = vperm.xlu0 %3008, %v456
        %v3010 = vpop.permute.xlu0 %3009
        %3012 = vset.pattern.permute.xlu0 12
        %3013 = vperm.xlu0 %3012, %v457
        %v3014 = vpop.permute.xlu0 %3013
        %3016 = vset.pattern.permute.xlu0 12
        %3017 = vperm.xlu0 %3016, %v458
        %v3018 = vpop.permute.xlu0 %3017
        %3020 = vset.pattern.permute.xlu0 12
        %3021 = vperm.xlu0 %3020, %v459
        %v3022 = vpop.permute.xlu0 %3021
        %3024 = vset.pattern.permute.xlu0 12
        %3025 = vperm.xlu0 %3024, %v460
        %v3026 = vpop.permute.xlu0 %3025
        %3028 = vset.pattern.permute.xlu0 12
        %3029 = vperm.xlu0 %3028, %v461
        %v3030 = vpop.permute.xlu0 %3029
        %3032 = vset.pattern.permute.xlu0 12
        %3033 = vperm.xlu0 %3032, %v462
        %v3034 = vpop.permute.xlu0 %3033
        %3036 = vset.pattern.permute.xlu0 12
        %3037 = vperm.xlu0 %3036, %v463
        %v3038 = vpop.permute.xlu0 %3037
        %3040 = vset.pattern.permute.xlu0 12
        %3041 = vperm.xlu0 %3040, %v464
        %v3042 = vpop.permute.xlu0 %3041
        %v3044 = vmul.f32 %v2994, %v1066
        %v3045 = vmul.f32 %v2998, %v1072
        %v3046 = vmul.f32 %v3002, %v1078
        %v3047 = vmul.f32 %v3006, %v1084
        %v3048 = vmul.f32 %v3010, %v1090
        %v3049 = vmul.f32 %v3014, %v1096
        %v3050 = vmul.f32 %v3018, %v1102
        %v3051 = vmul.f32 %v3022, %v1108
        %v3052 = vmul.f32 %v3026, %v1114
        %v3053 = vmul.f32 %v3030, %v1120
        %v3054 = vmul.f32 %v3034, %v1126
        %v3055 = vmul.f32 %v3038, %v1132
        %v3056 = vmul.f32 %v3042, %v1138
        %v3057 = vadd.f32 %v2979, %v3044
        %v3058 = vadd.f32 %v2980, %v3045
        %v3059 = vadd.f32 %v2981, %v3046
        %v3060 = vadd.f32 %v2982, %v3047
        %v3061 = vadd.f32 %v2983, %v3048
        %v3062 = vadd.f32 %v2984, %v3049
        %v3063 = vadd.f32 %v2985, %v3050
        %v3064 = vadd.f32 %v2986, %v3051
        %v3065 = vadd.f32 %v2987, %v3052
        %v3066 = vadd.f32 %v2988, %v3053
        %v3067 = vadd.f32 %v2989, %v3054
        %v3068 = vadd.f32 %v2990, %v3055
        %v3069 = vadd.f32 %v2991, %v3056
        %3070 = vset.pattern.permute.xlu0 13
        %3071 = vperm.xlu0 %3070, %v452
        %v3072 = vpop.permute.xlu0 %3071
        %3074 = vset.pattern.permute.xlu0 13
        %3075 = vperm.xlu0 %3074, %v453
        %v3076 = vpop.permute.xlu0 %3075
        %3078 = vset.pattern.permute.xlu0 13
        %3079 = vperm.xlu0 %3078, %v454
        %v3080 = vpop.permute.xlu0 %3079
        %3082 = vset.pattern.permute.xlu0 13
        %3083 = vperm.xlu0 %3082, %v455
        %v3084 = vpop.permute.xlu0 %3083
        %3086 = vset.pattern.permute.xlu0 13
        %3087 = vperm.xlu0 %3086, %v456
        %v3088 = vpop.permute.xlu0 %3087
        %3090 = vset.pattern.permute.xlu0 13
        %3091 = vperm.xlu0 %3090, %v457
        %v3092 = vpop.permute.xlu0 %3091
        %3094 = vset.pattern.permute.xlu0 13
        %3095 = vperm.xlu0 %3094, %v458
        %v3096 = vpop.permute.xlu0 %3095
        %3098 = vset.pattern.permute.xlu0 13
        %3099 = vperm.xlu0 %3098, %v459
        %v3100 = vpop.permute.xlu0 %3099
        %3102 = vset.pattern.permute.xlu0 13
        %3103 = vperm.xlu0 %3102, %v460
        %v3104 = vpop.permute.xlu0 %3103
        %3106 = vset.pattern.permute.xlu0 13
        %3107 = vperm.xlu0 %3106, %v461
        %v3108 = vpop.permute.xlu0 %3107
        %3110 = vset.pattern.permute.xlu0 13
        %3111 = vperm.xlu0 %3110, %v462
        %v3112 = vpop.permute.xlu0 %3111
        %3114 = vset.pattern.permute.xlu0 13
        %3115 = vperm.xlu0 %3114, %v463
        %v3116 = vpop.permute.xlu0 %3115
        %3118 = vset.pattern.permute.xlu0 13
        %3119 = vperm.xlu0 %3118, %v464
        %v3120 = vpop.permute.xlu0 %3119
        %v3122 = vmul.f32 %v3072, %v1066
        %v3123 = vmul.f32 %v3076, %v1072
        %v3124 = vmul.f32 %v3080, %v1078
        %v3125 = vmul.f32 %v3084, %v1084
        %v3126 = vmul.f32 %v3088, %v1090
        %v3127 = vmul.f32 %v3092, %v1096
        %v3128 = vmul.f32 %v3096, %v1102
        %v3129 = vmul.f32 %v3100, %v1108
        %v3130 = vmul.f32 %v3104, %v1114
        %v3131 = vmul.f32 %v3108, %v1120
        %v3132 = vmul.f32 %v3112, %v1126
        %v3133 = vmul.f32 %v3116, %v1132
        %v3134 = vmul.f32 %v3120, %v1138
        %3148 = vrot.lane.b32.xlu0 %v3122, 96
        %v3149 = vpop.permute.xlu0 %3148
        %3150 = vrot.lane.b32.xlu0 %v3123, 96
        %v3151 = vpop.permute.xlu0 %3150
        %3152 = vrot.lane.b32.xlu0 %v3124, 96
        %v3153 = vpop.permute.xlu0 %3152
        %3154 = vrot.lane.b32.xlu0 %v3125, 96
        %v3155 = vpop.permute.xlu0 %3154
        %3156 = vrot.lane.b32.xlu0 %v3126, 96
        %v3157 = vpop.permute.xlu0 %3156
        %3158 = vrot.lane.b32.xlu0 %v3127, 96
        %v3159 = vpop.permute.xlu0 %3158
        %3160 = vrot.lane.b32.xlu0 %v3128, 96
        %v3161 = vpop.permute.xlu0 %3160
        %3162 = vrot.lane.b32.xlu0 %v3129, 96
        %v3163 = vpop.permute.xlu0 %3162
        %3164 = vrot.lane.b32.xlu0 %v3130, 96
        %v3165 = vpop.permute.xlu0 %3164
        %3166 = vrot.lane.b32.xlu0 %v3131, 96
        %v3167 = vpop.permute.xlu0 %3166
        %3168 = vrot.lane.b32.xlu0 %v3132, 96
        %v3169 = vpop.permute.xlu0 %3168
        %3170 = vrot.lane.b32.xlu0 %v3133, 96
        %v3171 = vpop.permute.xlu0 %3170
        %3172 = vrot.lane.b32.xlu0 %v3134, 96
        %v3173 = vpop.permute.xlu0 %3172
        %v3187 = vadd.f32 %v3057, %v3149
        %v3188 = vadd.f32 %v3058, %v3151
        %v3189 = vadd.f32 %v3059, %v3153
        %v3190 = vadd.f32 %v3060, %v3155
        %v3191 = vadd.f32 %v3061, %v3157
        %v3192 = vadd.f32 %v3062, %v3159
        %v3193 = vadd.f32 %v3063, %v3161
        %v3194 = vadd.f32 %v3064, %v3163
        %v3195 = vadd.f32 %v3065, %v3165
        %v3196 = vadd.f32 %v3066, %v3167
        %v3197 = vadd.f32 %v3067, %v3169
        %v3198 = vadd.f32 %v3068, %v3171
        %v3199 = vadd.f32 %v3069, %v3173
        %3200 = vset.pattern.permute.xlu0 14
        %3201 = vperm.xlu0 %3200, %v452
        %v3202 = vpop.permute.xlu0 %3201
        %3204 = vset.pattern.permute.xlu0 14
        %3205 = vperm.xlu0 %3204, %v453
        %v3206 = vpop.permute.xlu0 %3205
        %3208 = vset.pattern.permute.xlu0 14
        %3209 = vperm.xlu0 %3208, %v454
        %v3210 = vpop.permute.xlu0 %3209
        %3212 = vset.pattern.permute.xlu0 14
        %3213 = vperm.xlu0 %3212, %v455
        %v3214 = vpop.permute.xlu0 %3213
        %3216 = vset.pattern.permute.xlu0 14
        %3217 = vperm.xlu0 %3216, %v456
        %v3218 = vpop.permute.xlu0 %3217
        %3220 = vset.pattern.permute.xlu0 14
        %3221 = vperm.xlu0 %3220, %v457
        %v3222 = vpop.permute.xlu0 %3221
        %3224 = vset.pattern.permute.xlu0 14
        %3225 = vperm.xlu0 %3224, %v458
        %v3226 = vpop.permute.xlu0 %3225
        %3228 = vset.pattern.permute.xlu0 14
        %3229 = vperm.xlu0 %3228, %v459
        %v3230 = vpop.permute.xlu0 %3229
        %3232 = vset.pattern.permute.xlu0 14
        %3233 = vperm.xlu0 %3232, %v460
        %v3234 = vpop.permute.xlu0 %3233
        %3236 = vset.pattern.permute.xlu0 14
        %3237 = vperm.xlu0 %3236, %v461
        %v3238 = vpop.permute.xlu0 %3237
        %3240 = vset.pattern.permute.xlu0 14
        %3241 = vperm.xlu0 %3240, %v462
        %v3242 = vpop.permute.xlu0 %3241
        %3244 = vset.pattern.permute.xlu0 14
        %3245 = vperm.xlu0 %3244, %v463
        %v3246 = vpop.permute.xlu0 %3245
        %3248 = vset.pattern.permute.xlu0 14
        %3249 = vperm.xlu0 %3248, %v464
        %v3250 = vpop.permute.xlu0 %3249
        %v3252 = vmul.f32 %v3202, %v1066
        %v3253 = vmul.f32 %v3206, %v1072
        %v3254 = vmul.f32 %v3210, %v1078
        %v3255 = vmul.f32 %v3214, %v1084
        %v3256 = vmul.f32 %v3218, %v1090
        %v3257 = vmul.f32 %v3222, %v1096
        %v3258 = vmul.f32 %v3226, %v1102
        %v3259 = vmul.f32 %v3230, %v1108
        %v3260 = vmul.f32 %v3234, %v1114
        %v3261 = vmul.f32 %v3238, %v1120
        %v3262 = vmul.f32 %v3242, %v1126
        %v3263 = vmul.f32 %v3246, %v1132
        %v3264 = vmul.f32 %v3250, %v1138
        %3278 = vrot.lane.b32.xlu0 %v3252, 64
        %v3279 = vpop.permute.xlu0 %3278
        %3280 = vrot.lane.b32.xlu0 %v3253, 64
        %v3281 = vpop.permute.xlu0 %3280
        %3282 = vrot.lane.b32.xlu0 %v3254, 64
        %v3283 = vpop.permute.xlu0 %3282
        %3284 = vrot.lane.b32.xlu0 %v3255, 64
        %v3285 = vpop.permute.xlu0 %3284
        %3286 = vrot.lane.b32.xlu0 %v3256, 64
        %v3287 = vpop.permute.xlu0 %3286
        %3288 = vrot.lane.b32.xlu0 %v3257, 64
        %v3289 = vpop.permute.xlu0 %3288
        %3290 = vrot.lane.b32.xlu0 %v3258, 64
        %v3291 = vpop.permute.xlu0 %3290
        %3292 = vrot.lane.b32.xlu0 %v3259, 64
        %v3293 = vpop.permute.xlu0 %3292
        %3294 = vrot.lane.b32.xlu0 %v3260, 64
        %v3295 = vpop.permute.xlu0 %3294
        %3296 = vrot.lane.b32.xlu0 %v3261, 64
        %v3297 = vpop.permute.xlu0 %3296
        %3298 = vrot.lane.b32.xlu0 %v3262, 64
        %v3299 = vpop.permute.xlu0 %3298
        %3300 = vrot.lane.b32.xlu0 %v3263, 64
        %v3301 = vpop.permute.xlu0 %3300
        %3302 = vrot.lane.b32.xlu0 %v3264, 64
        %v3303 = vpop.permute.xlu0 %3302
        %v3317 = vadd.f32 %v3187, %v3279
        %v3318 = vadd.f32 %v3188, %v3281
        %v3319 = vadd.f32 %v3189, %v3283
        %v3320 = vadd.f32 %v3190, %v3285
        %v3321 = vadd.f32 %v3191, %v3287
        %v3322 = vadd.f32 %v3192, %v3289
        %v3323 = vadd.f32 %v3193, %v3291
        %v3324 = vadd.f32 %v3194, %v3293
        %v3325 = vadd.f32 %v3195, %v3295
        %v3326 = vadd.f32 %v3196, %v3297
        %v3327 = vadd.f32 %v3197, %v3299
        %v3328 = vadd.f32 %v3198, %v3301
        %v3329 = vadd.f32 %v3199, %v3303
        %3330 = vset.pattern.permute.xlu0 15
        %3331 = vperm.xlu0 %3330, %v452
        %v3332 = vpop.permute.xlu0 %3331
        %3334 = vset.pattern.permute.xlu0 15
        %3335 = vperm.xlu0 %3334, %v453
        %v3336 = vpop.permute.xlu0 %3335
        %3338 = vset.pattern.permute.xlu0 15
        %3339 = vperm.xlu0 %3338, %v454
        %v3340 = vpop.permute.xlu0 %3339
        %3342 = vset.pattern.permute.xlu0 15
        %3343 = vperm.xlu0 %3342, %v455
        %v3344 = vpop.permute.xlu0 %3343
        %3346 = vset.pattern.permute.xlu0 15
        %3347 = vperm.xlu0 %3346, %v456
        %v3348 = vpop.permute.xlu0 %3347
        %3350 = vset.pattern.permute.xlu0 15
        %3351 = vperm.xlu0 %3350, %v457
        %v3352 = vpop.permute.xlu0 %3351
        %3354 = vset.pattern.permute.xlu0 15
        %3355 = vperm.xlu0 %3354, %v458
        %v3356 = vpop.permute.xlu0 %3355
        %3358 = vset.pattern.permute.xlu0 15
        %3359 = vperm.xlu0 %3358, %v459
        %v3360 = vpop.permute.xlu0 %3359
        %3362 = vset.pattern.permute.xlu0 15
        %3363 = vperm.xlu0 %3362, %v460
        %v3364 = vpop.permute.xlu0 %3363
        %3366 = vset.pattern.permute.xlu0 15
        %3367 = vperm.xlu0 %3366, %v461
        %v3368 = vpop.permute.xlu0 %3367
        %3370 = vset.pattern.permute.xlu0 15
        %3371 = vperm.xlu0 %3370, %v462
        %v3372 = vpop.permute.xlu0 %3371
        %3374 = vset.pattern.permute.xlu0 15
        %3375 = vperm.xlu0 %3374, %v463
        %v3376 = vpop.permute.xlu0 %3375
        %3378 = vset.pattern.permute.xlu0 15
        %3379 = vperm.xlu0 %3378, %v464
        %v3380 = vpop.permute.xlu0 %3379
        %v3382 = vmul.f32 %v3332, %v1066
        %v3383 = vmul.f32 %v3336, %v1072
        %v3384 = vmul.f32 %v3340, %v1078
        %v3385 = vmul.f32 %v3344, %v1084
        %v3386 = vmul.f32 %v3348, %v1090
        %v3387 = vmul.f32 %v3352, %v1096
        %v3388 = vmul.f32 %v3356, %v1102
        %v3389 = vmul.f32 %v3360, %v1108
        %v3390 = vmul.f32 %v3364, %v1114
        %v3391 = vmul.f32 %v3368, %v1120
        %v3392 = vmul.f32 %v3372, %v1126
        %v3393 = vmul.f32 %v3376, %v1132
        %v3394 = vmul.f32 %v3380, %v1138
        %3408 = vrot.lane.b32.xlu0 %v3382, 32
        %v3409 = vpop.permute.xlu0 %3408
        %3410 = vrot.lane.b32.xlu0 %v3383, 32
        %v3411 = vpop.permute.xlu0 %3410
        %3412 = vrot.lane.b32.xlu0 %v3384, 32
        %v3413 = vpop.permute.xlu0 %3412
        %3414 = vrot.lane.b32.xlu0 %v3385, 32
        %v3415 = vpop.permute.xlu0 %3414
        %3416 = vrot.lane.b32.xlu0 %v3386, 32
        %v3417 = vpop.permute.xlu0 %3416
        %3418 = vrot.lane.b32.xlu0 %v3387, 32
        %v3419 = vpop.permute.xlu0 %3418
        %3420 = vrot.lane.b32.xlu0 %v3388, 32
        %v3421 = vpop.permute.xlu0 %3420
        %3422 = vrot.lane.b32.xlu0 %v3389, 32
        %v3423 = vpop.permute.xlu0 %3422
        %3424 = vrot.lane.b32.xlu0 %v3390, 32
        %v3425 = vpop.permute.xlu0 %3424
        %3426 = vrot.lane.b32.xlu0 %v3391, 32
        %v3427 = vpop.permute.xlu0 %3426
        %3428 = vrot.lane.b32.xlu0 %v3392, 32
        %v3429 = vpop.permute.xlu0 %3428
        %3430 = vrot.lane.b32.xlu0 %v3393, 32
        %v3431 = vpop.permute.xlu0 %3430
        %3432 = vrot.lane.b32.xlu0 %v3394, 32
        %v3433 = vpop.permute.xlu0 %3432
        %v3447 = vadd.f32 %v3317, %v3409
        %v3448 = vadd.f32 %v3318, %v3411
        %v3449 = vadd.f32 %v3319, %v3413
        %v3450 = vadd.f32 %v3320, %v3415
        %v3451 = vadd.f32 %v3321, %v3417
        %v3452 = vadd.f32 %v3322, %v3419
        %v3453 = vadd.f32 %v3323, %v3421
        %v3454 = vadd.f32 %v3324, %v3423
        %v3455 = vadd.f32 %v3325, %v3425
        %v3456 = vadd.f32 %v3326, %v3427
        %v3457 = vadd.f32 %v3327, %v3429
        %v3458 = vadd.f32 %v3328, %v3431
        %v3459 = vadd.f32 %v3329, %v3433
        %3460 = vset.pattern.permute.xlu0 16
        %3461 = vperm.xlu0 %3460, %v452
        %v3462 = vpop.permute.xlu0 %3461
        %3464 = vset.pattern.permute.xlu0 16
        %3465 = vperm.xlu0 %3464, %v453
        %v3466 = vpop.permute.xlu0 %3465
        %3468 = vset.pattern.permute.xlu0 16
        %3469 = vperm.xlu0 %3468, %v454
        %v3470 = vpop.permute.xlu0 %3469
        %3472 = vset.pattern.permute.xlu0 16
        %3473 = vperm.xlu0 %3472, %v455
        %v3474 = vpop.permute.xlu0 %3473
        %3476 = vset.pattern.permute.xlu0 16
        %3477 = vperm.xlu0 %3476, %v456
        %v3478 = vpop.permute.xlu0 %3477
        %3480 = vset.pattern.permute.xlu0 16
        %3481 = vperm.xlu0 %3480, %v457
        %v3482 = vpop.permute.xlu0 %3481
        %3484 = vset.pattern.permute.xlu0 16
        %3485 = vperm.xlu0 %3484, %v458
        %v3486 = vpop.permute.xlu0 %3485
        %3488 = vset.pattern.permute.xlu0 16
        %3489 = vperm.xlu0 %3488, %v459
        %v3490 = vpop.permute.xlu0 %3489
        %3492 = vset.pattern.permute.xlu0 16
        %3493 = vperm.xlu0 %3492, %v460
        %v3494 = vpop.permute.xlu0 %3493
        %3496 = vset.pattern.permute.xlu0 16
        %3497 = vperm.xlu0 %3496, %v461
        %v3498 = vpop.permute.xlu0 %3497
        %3500 = vset.pattern.permute.xlu0 16
        %3501 = vperm.xlu0 %3500, %v462
        %v3502 = vpop.permute.xlu0 %3501
        %3504 = vset.pattern.permute.xlu0 16
        %3505 = vperm.xlu0 %3504, %v463
        %v3506 = vpop.permute.xlu0 %3505
        %3508 = vset.pattern.permute.xlu0 16
        %3509 = vperm.xlu0 %3508, %v464
        %v3510 = vpop.permute.xlu0 %3509
        %v3512 = vmul.f32 %v3462, %v1207
        %v3513 = vmul.f32 %v3466, %v1213
        %v3514 = vmul.f32 %v3470, %v1219
        %v3515 = vmul.f32 %v3474, %v1225
        %v3516 = vmul.f32 %v3478, %v1231
        %v3517 = vmul.f32 %v3482, %v1237
        %v3518 = vmul.f32 %v3486, %v1243
        %v3519 = vmul.f32 %v3490, %v1249
        %v3520 = vmul.f32 %v3494, %v1255
        %v3521 = vmul.f32 %v3498, %v1261
        %v3522 = vmul.f32 %v3502, %v1267
        %v3523 = vmul.f32 %v3506, %v1273
        %v3524 = vmul.f32 %v3510, %v1279
        %v3525 = vadd.f32 %v3447, %v3512
        %v3526 = vadd.f32 %v3448, %v3513
        %v3527 = vadd.f32 %v3449, %v3514
        %v3528 = vadd.f32 %v3450, %v3515
        %v3529 = vadd.f32 %v3451, %v3516
        %v3530 = vadd.f32 %v3452, %v3517
        %v3531 = vadd.f32 %v3453, %v3518
        %v3532 = vadd.f32 %v3454, %v3519
        %v3533 = vadd.f32 %v3455, %v3520
        %v3534 = vadd.f32 %v3456, %v3521
        %v3535 = vadd.f32 %v3457, %v3522
        %v3536 = vadd.f32 %v3458, %v3523
        %v3537 = vadd.f32 %v3459, %v3524
        %3538 = vset.pattern.permute.xlu0 17
        %3539 = vperm.xlu0 %3538, %v452
        %v3540 = vpop.permute.xlu0 %3539
        %3542 = vset.pattern.permute.xlu0 17
        %3543 = vperm.xlu0 %3542, %v453
        %v3544 = vpop.permute.xlu0 %3543
        %3546 = vset.pattern.permute.xlu0 17
        %3547 = vperm.xlu0 %3546, %v454
        %v3548 = vpop.permute.xlu0 %3547
        %3550 = vset.pattern.permute.xlu0 17
        %3551 = vperm.xlu0 %3550, %v455
        %v3552 = vpop.permute.xlu0 %3551
        %3554 = vset.pattern.permute.xlu0 17
        %3555 = vperm.xlu0 %3554, %v456
        %v3556 = vpop.permute.xlu0 %3555
        %3558 = vset.pattern.permute.xlu0 17
        %3559 = vperm.xlu0 %3558, %v457
        %v3560 = vpop.permute.xlu0 %3559
        %3562 = vset.pattern.permute.xlu0 17
        %3563 = vperm.xlu0 %3562, %v458
        %v3564 = vpop.permute.xlu0 %3563
        %3566 = vset.pattern.permute.xlu0 17
        %3567 = vperm.xlu0 %3566, %v459
        %v3568 = vpop.permute.xlu0 %3567
        %3570 = vset.pattern.permute.xlu0 17
        %3571 = vperm.xlu0 %3570, %v460
        %v3572 = vpop.permute.xlu0 %3571
        %3574 = vset.pattern.permute.xlu0 17
        %3575 = vperm.xlu0 %3574, %v461
        %v3576 = vpop.permute.xlu0 %3575
        %3578 = vset.pattern.permute.xlu0 17
        %3579 = vperm.xlu0 %3578, %v462
        %v3580 = vpop.permute.xlu0 %3579
        %3582 = vset.pattern.permute.xlu0 17
        %3583 = vperm.xlu0 %3582, %v463
        %v3584 = vpop.permute.xlu0 %3583
        %3586 = vset.pattern.permute.xlu0 17
        %3587 = vperm.xlu0 %3586, %v464
        %v3588 = vpop.permute.xlu0 %3587
        %v3590 = vmul.f32 %v3540, %v1207
        %v3591 = vmul.f32 %v3544, %v1213
        %v3592 = vmul.f32 %v3548, %v1219
        %v3593 = vmul.f32 %v3552, %v1225
        %v3594 = vmul.f32 %v3556, %v1231
        %v3595 = vmul.f32 %v3560, %v1237
        %v3596 = vmul.f32 %v3564, %v1243
        %v3597 = vmul.f32 %v3568, %v1249
        %v3598 = vmul.f32 %v3572, %v1255
        %v3599 = vmul.f32 %v3576, %v1261
        %v3600 = vmul.f32 %v3580, %v1267
        %v3601 = vmul.f32 %v3584, %v1273
        %v3602 = vmul.f32 %v3588, %v1279
        %3616 = vrot.lane.b32.xlu0 %v3590, 96
        %v3617 = vpop.permute.xlu0 %3616
        %3618 = vrot.lane.b32.xlu0 %v3591, 96
        %v3619 = vpop.permute.xlu0 %3618
        %3620 = vrot.lane.b32.xlu0 %v3592, 96
        %v3621 = vpop.permute.xlu0 %3620
        %3622 = vrot.lane.b32.xlu0 %v3593, 96
        %v3623 = vpop.permute.xlu0 %3622
        %3624 = vrot.lane.b32.xlu0 %v3594, 96
        %v3625 = vpop.permute.xlu0 %3624
        %3626 = vrot.lane.b32.xlu0 %v3595, 96
        %v3627 = vpop.permute.xlu0 %3626
        %3628 = vrot.lane.b32.xlu0 %v3596, 96
        %v3629 = vpop.permute.xlu0 %3628
        %3630 = vrot.lane.b32.xlu0 %v3597, 96
        %v3631 = vpop.permute.xlu0 %3630
        %3632 = vrot.lane.b32.xlu0 %v3598, 96
        %v3633 = vpop.permute.xlu0 %3632
        %3634 = vrot.lane.b32.xlu0 %v3599, 96
        %v3635 = vpop.permute.xlu0 %3634
        %3636 = vrot.lane.b32.xlu0 %v3600, 96
        %v3637 = vpop.permute.xlu0 %3636
        %3638 = vrot.lane.b32.xlu0 %v3601, 96
        %v3639 = vpop.permute.xlu0 %3638
        %3640 = vrot.lane.b32.xlu0 %v3602, 96
        %v3641 = vpop.permute.xlu0 %3640
        %v3655 = vadd.f32 %v3525, %v3617
        %v3656 = vadd.f32 %v3526, %v3619
        %v3657 = vadd.f32 %v3527, %v3621
        %v3658 = vadd.f32 %v3528, %v3623
        %v3659 = vadd.f32 %v3529, %v3625
        %v3660 = vadd.f32 %v3530, %v3627
        %v3661 = vadd.f32 %v3531, %v3629
        %v3662 = vadd.f32 %v3532, %v3631
        %v3663 = vadd.f32 %v3533, %v3633
        %v3664 = vadd.f32 %v3534, %v3635
        %v3665 = vadd.f32 %v3535, %v3637
        %v3666 = vadd.f32 %v3536, %v3639
        %v3667 = vadd.f32 %v3537, %v3641
        %3668 = vset.pattern.permute.xlu0 18
        %3669 = vperm.xlu0 %3668, %v452
        %v3670 = vpop.permute.xlu0 %3669
        %3672 = vset.pattern.permute.xlu0 18
        %3673 = vperm.xlu0 %3672, %v453
        %v3674 = vpop.permute.xlu0 %3673
        %3676 = vset.pattern.permute.xlu0 18
        %3677 = vperm.xlu0 %3676, %v454
        %v3678 = vpop.permute.xlu0 %3677
        %3680 = vset.pattern.permute.xlu0 18
        %3681 = vperm.xlu0 %3680, %v455
        %v3682 = vpop.permute.xlu0 %3681
        %3684 = vset.pattern.permute.xlu0 18
        %3685 = vperm.xlu0 %3684, %v456
        %v3686 = vpop.permute.xlu0 %3685
        %3688 = vset.pattern.permute.xlu0 18
        %3689 = vperm.xlu0 %3688, %v457
        %v3690 = vpop.permute.xlu0 %3689
        %3692 = vset.pattern.permute.xlu0 18
        %3693 = vperm.xlu0 %3692, %v458
        %v3694 = vpop.permute.xlu0 %3693
        %3696 = vset.pattern.permute.xlu0 18
        %3697 = vperm.xlu0 %3696, %v459
        %v3698 = vpop.permute.xlu0 %3697
        %3700 = vset.pattern.permute.xlu0 18
        %3701 = vperm.xlu0 %3700, %v460
        %v3702 = vpop.permute.xlu0 %3701
        %3704 = vset.pattern.permute.xlu0 18
        %3705 = vperm.xlu0 %3704, %v461
        %v3706 = vpop.permute.xlu0 %3705
        %3708 = vset.pattern.permute.xlu0 18
        %3709 = vperm.xlu0 %3708, %v462
        %v3710 = vpop.permute.xlu0 %3709
        %3712 = vset.pattern.permute.xlu0 18
        %3713 = vperm.xlu0 %3712, %v463
        %v3714 = vpop.permute.xlu0 %3713
        %3716 = vset.pattern.permute.xlu0 18
        %3717 = vperm.xlu0 %3716, %v464
        %v3718 = vpop.permute.xlu0 %3717
        %v3720 = vmul.f32 %v3670, %v1207
        %v3721 = vmul.f32 %v3674, %v1213
        %v3722 = vmul.f32 %v3678, %v1219
        %v3723 = vmul.f32 %v3682, %v1225
        %v3724 = vmul.f32 %v3686, %v1231
        %v3725 = vmul.f32 %v3690, %v1237
        %v3726 = vmul.f32 %v3694, %v1243
        %v3727 = vmul.f32 %v3698, %v1249
        %v3728 = vmul.f32 %v3702, %v1255
        %v3729 = vmul.f32 %v3706, %v1261
        %v3730 = vmul.f32 %v3710, %v1267
        %v3731 = vmul.f32 %v3714, %v1273
        %v3732 = vmul.f32 %v3718, %v1279
        %3746 = vrot.lane.b32.xlu0 %v3720, 64
        %v3747 = vpop.permute.xlu0 %3746
        %3748 = vrot.lane.b32.xlu0 %v3721, 64
        %v3749 = vpop.permute.xlu0 %3748
        %3750 = vrot.lane.b32.xlu0 %v3722, 64
        %v3751 = vpop.permute.xlu0 %3750
        %3752 = vrot.lane.b32.xlu0 %v3723, 64
        %v3753 = vpop.permute.xlu0 %3752
        %3754 = vrot.lane.b32.xlu0 %v3724, 64
        %v3755 = vpop.permute.xlu0 %3754
        %3756 = vrot.lane.b32.xlu0 %v3725, 64
        %v3757 = vpop.permute.xlu0 %3756
        %3758 = vrot.lane.b32.xlu0 %v3726, 64
        %v3759 = vpop.permute.xlu0 %3758
        %3760 = vrot.lane.b32.xlu0 %v3727, 64
        %v3761 = vpop.permute.xlu0 %3760
        %3762 = vrot.lane.b32.xlu0 %v3728, 64
        %v3763 = vpop.permute.xlu0 %3762
        %3764 = vrot.lane.b32.xlu0 %v3729, 64
        %v3765 = vpop.permute.xlu0 %3764
        %3766 = vrot.lane.b32.xlu0 %v3730, 64
        %v3767 = vpop.permute.xlu0 %3766
        %3768 = vrot.lane.b32.xlu0 %v3731, 64
        %v3769 = vpop.permute.xlu0 %3768
        %3770 = vrot.lane.b32.xlu0 %v3732, 64
        %v3771 = vpop.permute.xlu0 %3770
        %v3785 = vadd.f32 %v3655, %v3747
        %v3786 = vadd.f32 %v3656, %v3749
        %v3787 = vadd.f32 %v3657, %v3751
        %v3788 = vadd.f32 %v3658, %v3753
        %v3789 = vadd.f32 %v3659, %v3755
        %v3790 = vadd.f32 %v3660, %v3757
        %v3791 = vadd.f32 %v3661, %v3759
        %v3792 = vadd.f32 %v3662, %v3761
        %v3793 = vadd.f32 %v3663, %v3763
        %v3794 = vadd.f32 %v3664, %v3765
        %v3795 = vadd.f32 %v3665, %v3767
        %v3796 = vadd.f32 %v3666, %v3769
        %v3797 = vadd.f32 %v3667, %v3771
        %3798 = vset.pattern.permute.xlu0 19
        %3799 = vperm.xlu0 %3798, %v452
        %v3800 = vpop.permute.xlu0 %3799
        %3802 = vset.pattern.permute.xlu0 19
        %3803 = vperm.xlu0 %3802, %v453
        %v3804 = vpop.permute.xlu0 %3803
        %3806 = vset.pattern.permute.xlu0 19
        %3807 = vperm.xlu0 %3806, %v454
        %v3808 = vpop.permute.xlu0 %3807
        %3810 = vset.pattern.permute.xlu0 19
        %3811 = vperm.xlu0 %3810, %v455
        %v3812 = vpop.permute.xlu0 %3811
        %3814 = vset.pattern.permute.xlu0 19
        %3815 = vperm.xlu0 %3814, %v456
        %v3816 = vpop.permute.xlu0 %3815
        %3818 = vset.pattern.permute.xlu0 19
        %3819 = vperm.xlu0 %3818, %v457
        %v3820 = vpop.permute.xlu0 %3819
        %3822 = vset.pattern.permute.xlu0 19
        %3823 = vperm.xlu0 %3822, %v458
        %v3824 = vpop.permute.xlu0 %3823
        %3826 = vset.pattern.permute.xlu0 19
        %3827 = vperm.xlu0 %3826, %v459
        %v3828 = vpop.permute.xlu0 %3827
        %3830 = vset.pattern.permute.xlu0 19
        %3831 = vperm.xlu0 %3830, %v460
        %v3832 = vpop.permute.xlu0 %3831
        %3834 = vset.pattern.permute.xlu0 19
        %3835 = vperm.xlu0 %3834, %v461
        %v3836 = vpop.permute.xlu0 %3835
        %3838 = vset.pattern.permute.xlu0 19
        %3839 = vperm.xlu0 %3838, %v462
        %v3840 = vpop.permute.xlu0 %3839
        %3842 = vset.pattern.permute.xlu0 19
        %3843 = vperm.xlu0 %3842, %v463
        %v3844 = vpop.permute.xlu0 %3843
        %3846 = vset.pattern.permute.xlu0 19
        %3847 = vperm.xlu0 %3846, %v464
        %v3848 = vpop.permute.xlu0 %3847
        %v3850 = vmul.f32 %v3800, %v1207
        %v3851 = vmul.f32 %v3804, %v1213
        %v3852 = vmul.f32 %v3808, %v1219
        %v3853 = vmul.f32 %v3812, %v1225
        %v3854 = vmul.f32 %v3816, %v1231
        %v3855 = vmul.f32 %v3820, %v1237
        %v3856 = vmul.f32 %v3824, %v1243
        %v3857 = vmul.f32 %v3828, %v1249
        %v3858 = vmul.f32 %v3832, %v1255
        %v3859 = vmul.f32 %v3836, %v1261
        %v3860 = vmul.f32 %v3840, %v1267
        %v3861 = vmul.f32 %v3844, %v1273
        %v3862 = vmul.f32 %v3848, %v1279
        %3876 = vrot.lane.b32.xlu0 %v3850, 32
        %v3877 = vpop.permute.xlu0 %3876
        %3878 = vrot.lane.b32.xlu0 %v3851, 32
        %v3879 = vpop.permute.xlu0 %3878
        %3880 = vrot.lane.b32.xlu0 %v3852, 32
        %v3881 = vpop.permute.xlu0 %3880
        %3882 = vrot.lane.b32.xlu0 %v3853, 32
        %v3883 = vpop.permute.xlu0 %3882
        %3884 = vrot.lane.b32.xlu0 %v3854, 32
        %v3885 = vpop.permute.xlu0 %3884
        %3886 = vrot.lane.b32.xlu0 %v3855, 32
        %v3887 = vpop.permute.xlu0 %3886
        %3888 = vrot.lane.b32.xlu0 %v3856, 32
        %v3889 = vpop.permute.xlu0 %3888
        %3890 = vrot.lane.b32.xlu0 %v3857, 32
        %v3891 = vpop.permute.xlu0 %3890
        %3892 = vrot.lane.b32.xlu0 %v3858, 32
        %v3893 = vpop.permute.xlu0 %3892
        %3894 = vrot.lane.b32.xlu0 %v3859, 32
        %v3895 = vpop.permute.xlu0 %3894
        %3896 = vrot.lane.b32.xlu0 %v3860, 32
        %v3897 = vpop.permute.xlu0 %3896
        %3898 = vrot.lane.b32.xlu0 %v3861, 32
        %v3899 = vpop.permute.xlu0 %3898
        %3900 = vrot.lane.b32.xlu0 %v3862, 32
        %v3901 = vpop.permute.xlu0 %3900
        %v3915 = vadd.f32 %v3785, %v3877
        %v3916 = vadd.f32 %v3786, %v3879
        %v3917 = vadd.f32 %v3787, %v3881
        %v3918 = vadd.f32 %v3788, %v3883
        %v3919 = vadd.f32 %v3789, %v3885
        %v3920 = vadd.f32 %v3790, %v3887
        %v3921 = vadd.f32 %v3791, %v3889
        %v3922 = vadd.f32 %v3792, %v3891
        %v3923 = vadd.f32 %v3793, %v3893
        %v3924 = vadd.f32 %v3794, %v3895
        %v3925 = vadd.f32 %v3795, %v3897
        %v3926 = vadd.f32 %v3796, %v3899
        %v3927 = vadd.f32 %v3797, %v3901
        %3928 = vset.pattern.permute.xlu0 20
        %3929 = vperm.xlu0 %3928, %v452
        %v3930 = vpop.permute.xlu0 %3929
        %3932 = vset.pattern.permute.xlu0 20
        %3933 = vperm.xlu0 %3932, %v453
        %v3934 = vpop.permute.xlu0 %3933
        %3936 = vset.pattern.permute.xlu0 20
        %3937 = vperm.xlu0 %3936, %v454
        %v3938 = vpop.permute.xlu0 %3937
        %3940 = vset.pattern.permute.xlu0 20
        %3941 = vperm.xlu0 %3940, %v455
        %v3942 = vpop.permute.xlu0 %3941
        %3944 = vset.pattern.permute.xlu0 20
        %3945 = vperm.xlu0 %3944, %v456
        %v3946 = vpop.permute.xlu0 %3945
        %3948 = vset.pattern.permute.xlu0 20
        %3949 = vperm.xlu0 %3948, %v457
        %v3950 = vpop.permute.xlu0 %3949
        %3952 = vset.pattern.permute.xlu0 20
        %3953 = vperm.xlu0 %3952, %v458
        %v3954 = vpop.permute.xlu0 %3953
        %3956 = vset.pattern.permute.xlu0 20
        %3957 = vperm.xlu0 %3956, %v459
        %v3958 = vpop.permute.xlu0 %3957
        %3960 = vset.pattern.permute.xlu0 20
        %3961 = vperm.xlu0 %3960, %v460
        %v3962 = vpop.permute.xlu0 %3961
        %3964 = vset.pattern.permute.xlu0 20
        %3965 = vperm.xlu0 %3964, %v461
        %v3966 = vpop.permute.xlu0 %3965
        %3968 = vset.pattern.permute.xlu0 20
        %3969 = vperm.xlu0 %3968, %v462
        %v3970 = vpop.permute.xlu0 %3969
        %3972 = vset.pattern.permute.xlu0 20
        %3973 = vperm.xlu0 %3972, %v463
        %v3974 = vpop.permute.xlu0 %3973
        %3976 = vset.pattern.permute.xlu0 20
        %3977 = vperm.xlu0 %3976, %v464
        %v3978 = vpop.permute.xlu0 %3977
        %v3980 = vmul.f32 %v3930, %v1209
        %v3981 = vmul.f32 %v3934, %v1215
        %v3982 = vmul.f32 %v3938, %v1221
        %v3983 = vmul.f32 %v3942, %v1227
        %v3984 = vmul.f32 %v3946, %v1233
        %v3985 = vmul.f32 %v3950, %v1239
        %v3986 = vmul.f32 %v3954, %v1245
        %v3987 = vmul.f32 %v3958, %v1251
        %v3988 = vmul.f32 %v3962, %v1257
        %v3989 = vmul.f32 %v3966, %v1263
        %v3990 = vmul.f32 %v3970, %v1269
        %v3991 = vmul.f32 %v3974, %v1275
        %v3992 = vmul.f32 %v3978, %v1281
        %v3993 = vadd.f32 %v3915, %v3980
        %v3994 = vadd.f32 %v3916, %v3981
        %v3995 = vadd.f32 %v3917, %v3982
        %v3996 = vadd.f32 %v3918, %v3983
        %v3997 = vadd.f32 %v3919, %v3984
        %v3998 = vadd.f32 %v3920, %v3985
        %v3999 = vadd.f32 %v3921, %v3986
        %v4000 = vadd.f32 %v3922, %v3987
        %v4001 = vadd.f32 %v3923, %v3988
        %v4002 = vadd.f32 %v3924, %v3989
        %v4003 = vadd.f32 %v3925, %v3990
        %v4004 = vadd.f32 %v3926, %v3991
        %v4005 = vadd.f32 %v3927, %v3992
        %4006 = vset.pattern.permute.xlu0 21
        %4007 = vperm.xlu0 %4006, %v452
        %v4008 = vpop.permute.xlu0 %4007
        %4010 = vset.pattern.permute.xlu0 21
        %4011 = vperm.xlu0 %4010, %v453
        %v4012 = vpop.permute.xlu0 %4011
        %4014 = vset.pattern.permute.xlu0 21
        %4015 = vperm.xlu0 %4014, %v454
        %v4016 = vpop.permute.xlu0 %4015
        %4018 = vset.pattern.permute.xlu0 21
        %4019 = vperm.xlu0 %4018, %v455
        %v4020 = vpop.permute.xlu0 %4019
        %4022 = vset.pattern.permute.xlu0 21
        %4023 = vperm.xlu0 %4022, %v456
        %v4024 = vpop.permute.xlu0 %4023
        %4026 = vset.pattern.permute.xlu0 21
        %4027 = vperm.xlu0 %4026, %v457
        %v4028 = vpop.permute.xlu0 %4027
        %4030 = vset.pattern.permute.xlu0 21
        %4031 = vperm.xlu0 %4030, %v458
        %v4032 = vpop.permute.xlu0 %4031
        %4034 = vset.pattern.permute.xlu0 21
        %4035 = vperm.xlu0 %4034, %v459
        %v4036 = vpop.permute.xlu0 %4035
        %4038 = vset.pattern.permute.xlu0 21
        %4039 = vperm.xlu0 %4038, %v460
        %v4040 = vpop.permute.xlu0 %4039
        %4042 = vset.pattern.permute.xlu0 21
        %4043 = vperm.xlu0 %4042, %v461
        %v4044 = vpop.permute.xlu0 %4043
        %4046 = vset.pattern.permute.xlu0 21
        %4047 = vperm.xlu0 %4046, %v462
        %v4048 = vpop.permute.xlu0 %4047
        %4050 = vset.pattern.permute.xlu0 21
        %4051 = vperm.xlu0 %4050, %v463
        %v4052 = vpop.permute.xlu0 %4051
        %4054 = vset.pattern.permute.xlu0 21
        %4055 = vperm.xlu0 %4054, %v464
        %v4056 = vpop.permute.xlu0 %4055
        %v4058 = vmul.f32 %v4008, %v1209
        %v4059 = vmul.f32 %v4012, %v1215
        %v4060 = vmul.f32 %v4016, %v1221
        %v4061 = vmul.f32 %v4020, %v1227
        %v4062 = vmul.f32 %v4024, %v1233
        %v4063 = vmul.f32 %v4028, %v1239
        %v4064 = vmul.f32 %v4032, %v1245
        %v4065 = vmul.f32 %v4036, %v1251
        %v4066 = vmul.f32 %v4040, %v1257
        %v4067 = vmul.f32 %v4044, %v1263
        %v4068 = vmul.f32 %v4048, %v1269
        %v4069 = vmul.f32 %v4052, %v1275
        %v4070 = vmul.f32 %v4056, %v1281
        %4084 = vrot.lane.b32.xlu0 %v4058, 96
        %v4085 = vpop.permute.xlu0 %4084
        %4086 = vrot.lane.b32.xlu0 %v4059, 96
        %v4087 = vpop.permute.xlu0 %4086
        %4088 = vrot.lane.b32.xlu0 %v4060, 96
        %v4089 = vpop.permute.xlu0 %4088
        %4090 = vrot.lane.b32.xlu0 %v4061, 96
        %v4091 = vpop.permute.xlu0 %4090
        %4092 = vrot.lane.b32.xlu0 %v4062, 96
        %v4093 = vpop.permute.xlu0 %4092
        %4094 = vrot.lane.b32.xlu0 %v4063, 96
        %v4095 = vpop.permute.xlu0 %4094
        %4096 = vrot.lane.b32.xlu0 %v4064, 96
        %v4097 = vpop.permute.xlu0 %4096
        %4098 = vrot.lane.b32.xlu0 %v4065, 96
        %v4099 = vpop.permute.xlu0 %4098
        %4100 = vrot.lane.b32.xlu0 %v4066, 96
        %v4101 = vpop.permute.xlu0 %4100
        %4102 = vrot.lane.b32.xlu0 %v4067, 96
        %v4103 = vpop.permute.xlu0 %4102
        %4104 = vrot.lane.b32.xlu0 %v4068, 96
        %v4105 = vpop.permute.xlu0 %4104
        %4106 = vrot.lane.b32.xlu0 %v4069, 96
        %v4107 = vpop.permute.xlu0 %4106
        %4108 = vrot.lane.b32.xlu0 %v4070, 96
        %v4109 = vpop.permute.xlu0 %4108
        %v4123 = vadd.f32 %v3993, %v4085
        %v4124 = vadd.f32 %v3994, %v4087
        %v4125 = vadd.f32 %v3995, %v4089
        %v4126 = vadd.f32 %v3996, %v4091
        %v4127 = vadd.f32 %v3997, %v4093
        %v4128 = vadd.f32 %v3998, %v4095
        %v4129 = vadd.f32 %v3999, %v4097
        %v4130 = vadd.f32 %v4000, %v4099
        %v4131 = vadd.f32 %v4001, %v4101
        %v4132 = vadd.f32 %v4002, %v4103
        %v4133 = vadd.f32 %v4003, %v4105
        %v4134 = vadd.f32 %v4004, %v4107
        %v4135 = vadd.f32 %v4005, %v4109
        %4136 = vset.pattern.permute.xlu0 22
        %4137 = vperm.xlu0 %4136, %v452
        %v4138 = vpop.permute.xlu0 %4137
        %4140 = vset.pattern.permute.xlu0 22
        %4141 = vperm.xlu0 %4140, %v453
        %v4142 = vpop.permute.xlu0 %4141
        %4144 = vset.pattern.permute.xlu0 22
        %4145 = vperm.xlu0 %4144, %v454
        %v4146 = vpop.permute.xlu0 %4145
        %4148 = vset.pattern.permute.xlu0 22
        %4149 = vperm.xlu0 %4148, %v455
        %v4150 = vpop.permute.xlu0 %4149
        %4152 = vset.pattern.permute.xlu0 22
        %4153 = vperm.xlu0 %4152, %v456
        %v4154 = vpop.permute.xlu0 %4153
        %4156 = vset.pattern.permute.xlu0 22
        %4157 = vperm.xlu0 %4156, %v457
        %v4158 = vpop.permute.xlu0 %4157
        %4160 = vset.pattern.permute.xlu0 22
        %4161 = vperm.xlu0 %4160, %v458
        %v4162 = vpop.permute.xlu0 %4161
        %4164 = vset.pattern.permute.xlu0 22
        %4165 = vperm.xlu0 %4164, %v459
        %v4166 = vpop.permute.xlu0 %4165
        %4168 = vset.pattern.permute.xlu0 22
        %4169 = vperm.xlu0 %4168, %v460
        %v4170 = vpop.permute.xlu0 %4169
        %4172 = vset.pattern.permute.xlu0 22
        %4173 = vperm.xlu0 %4172, %v461
        %v4174 = vpop.permute.xlu0 %4173
        %4176 = vset.pattern.permute.xlu0 22
        %4177 = vperm.xlu0 %4176, %v462
        %v4178 = vpop.permute.xlu0 %4177
        %4180 = vset.pattern.permute.xlu0 22
        %4181 = vperm.xlu0 %4180, %v463
        %v4182 = vpop.permute.xlu0 %4181
        %4184 = vset.pattern.permute.xlu0 22
        %4185 = vperm.xlu0 %4184, %v464
        %v4186 = vpop.permute.xlu0 %4185
        %v4188 = vmul.f32 %v4138, %v1209
        %v4189 = vmul.f32 %v4142, %v1215
        %v4190 = vmul.f32 %v4146, %v1221
        %v4191 = vmul.f32 %v4150, %v1227
        %v4192 = vmul.f32 %v4154, %v1233
        %v4193 = vmul.f32 %v4158, %v1239
        %v4194 = vmul.f32 %v4162, %v1245
        %v4195 = vmul.f32 %v4166, %v1251
        %v4196 = vmul.f32 %v4170, %v1257
        %v4197 = vmul.f32 %v4174, %v1263
        %v4198 = vmul.f32 %v4178, %v1269
        %v4199 = vmul.f32 %v4182, %v1275
        %v4200 = vmul.f32 %v4186, %v1281
        %4214 = vrot.lane.b32.xlu0 %v4188, 64
        %v4215 = vpop.permute.xlu0 %4214
        %4216 = vrot.lane.b32.xlu0 %v4189, 64
        %v4217 = vpop.permute.xlu0 %4216
        %4218 = vrot.lane.b32.xlu0 %v4190, 64
        %v4219 = vpop.permute.xlu0 %4218
        %4220 = vrot.lane.b32.xlu0 %v4191, 64
        %v4221 = vpop.permute.xlu0 %4220
        %4222 = vrot.lane.b32.xlu0 %v4192, 64
        %v4223 = vpop.permute.xlu0 %4222
        %4224 = vrot.lane.b32.xlu0 %v4193, 64
        %v4225 = vpop.permute.xlu0 %4224
        %4226 = vrot.lane.b32.xlu0 %v4194, 64
        %v4227 = vpop.permute.xlu0 %4226
        %4228 = vrot.lane.b32.xlu0 %v4195, 64
        %v4229 = vpop.permute.xlu0 %4228
        %4230 = vrot.lane.b32.xlu0 %v4196, 64
        %v4231 = vpop.permute.xlu0 %4230
        %4232 = vrot.lane.b32.xlu0 %v4197, 64
        %v4233 = vpop.permute.xlu0 %4232
        %4234 = vrot.lane.b32.xlu0 %v4198, 64
        %v4235 = vpop.permute.xlu0 %4234
        %4236 = vrot.lane.b32.xlu0 %v4199, 64
        %v4237 = vpop.permute.xlu0 %4236
        %4238 = vrot.lane.b32.xlu0 %v4200, 64
        %v4239 = vpop.permute.xlu0 %4238
        %v4253 = vadd.f32 %v4123, %v4215
        %v4254 = vadd.f32 %v4124, %v4217
        %v4255 = vadd.f32 %v4125, %v4219
        %v4256 = vadd.f32 %v4126, %v4221
        %v4257 = vadd.f32 %v4127, %v4223
        %v4258 = vadd.f32 %v4128, %v4225
        %v4259 = vadd.f32 %v4129, %v4227
        %v4260 = vadd.f32 %v4130, %v4229
        %v4261 = vadd.f32 %v4131, %v4231
        %v4262 = vadd.f32 %v4132, %v4233
        %v4263 = vadd.f32 %v4133, %v4235
        %v4264 = vadd.f32 %v4134, %v4237
        %v4265 = vadd.f32 %v4135, %v4239
        %4266 = vset.pattern.permute.xlu0 23
        %4267 = vperm.xlu0 %4266, %v452
        %v4268 = vpop.permute.xlu0 %4267
        %4270 = vset.pattern.permute.xlu0 23
        %4271 = vperm.xlu0 %4270, %v453
        %v4272 = vpop.permute.xlu0 %4271
        %4274 = vset.pattern.permute.xlu0 23
        %4275 = vperm.xlu0 %4274, %v454
        %v4276 = vpop.permute.xlu0 %4275
        %4278 = vset.pattern.permute.xlu0 23
        %4279 = vperm.xlu0 %4278, %v455
        %v4280 = vpop.permute.xlu0 %4279
        %4282 = vset.pattern.permute.xlu0 23
        %4283 = vperm.xlu0 %4282, %v456
        %v4284 = vpop.permute.xlu0 %4283
        %4286 = vset.pattern.permute.xlu0 23
        %4287 = vperm.xlu0 %4286, %v457
        %v4288 = vpop.permute.xlu0 %4287
        %4290 = vset.pattern.permute.xlu0 23
        %4291 = vperm.xlu0 %4290, %v458
        %v4292 = vpop.permute.xlu0 %4291
        %4294 = vset.pattern.permute.xlu0 23
        %4295 = vperm.xlu0 %4294, %v459
        %v4296 = vpop.permute.xlu0 %4295
        %4298 = vset.pattern.permute.xlu0 23
        %4299 = vperm.xlu0 %4298, %v460
        %v4300 = vpop.permute.xlu0 %4299
        %4302 = vset.pattern.permute.xlu0 23
        %4303 = vperm.xlu0 %4302, %v461
        %v4304 = vpop.permute.xlu0 %4303
        %4306 = vset.pattern.permute.xlu0 23
        %4307 = vperm.xlu0 %4306, %v462
        %v4308 = vpop.permute.xlu0 %4307
        %4310 = vset.pattern.permute.xlu0 23
        %4311 = vperm.xlu0 %4310, %v463
        %v4312 = vpop.permute.xlu0 %4311
        %4314 = vset.pattern.permute.xlu0 23
        %4315 = vperm.xlu0 %4314, %v464
        %v4316 = vpop.permute.xlu0 %4315
        %v4318 = vmul.f32 %v4268, %v1209
        %v4319 = vmul.f32 %v4272, %v1215
        %v4320 = vmul.f32 %v4276, %v1221
        %v4321 = vmul.f32 %v4280, %v1227
        %v4322 = vmul.f32 %v4284, %v1233
        %v4323 = vmul.f32 %v4288, %v1239
        %v4324 = vmul.f32 %v4292, %v1245
        %v4325 = vmul.f32 %v4296, %v1251
        %v4326 = vmul.f32 %v4300, %v1257
        %v4327 = vmul.f32 %v4304, %v1263
        %v4328 = vmul.f32 %v4308, %v1269
        %v4329 = vmul.f32 %v4312, %v1275
        %v4330 = vmul.f32 %v4316, %v1281
        %4344 = vrot.lane.b32.xlu0 %v4318, 32
        %v4345 = vpop.permute.xlu0 %4344
        %4346 = vrot.lane.b32.xlu0 %v4319, 32
        %v4347 = vpop.permute.xlu0 %4346
        %4348 = vrot.lane.b32.xlu0 %v4320, 32
        %v4349 = vpop.permute.xlu0 %4348
        %4350 = vrot.lane.b32.xlu0 %v4321, 32
        %v4351 = vpop.permute.xlu0 %4350
        %4352 = vrot.lane.b32.xlu0 %v4322, 32
        %v4353 = vpop.permute.xlu0 %4352
        %4354 = vrot.lane.b32.xlu0 %v4323, 32
        %v4355 = vpop.permute.xlu0 %4354
        %4356 = vrot.lane.b32.xlu0 %v4324, 32
        %v4357 = vpop.permute.xlu0 %4356
        %4358 = vrot.lane.b32.xlu0 %v4325, 32
        %v4359 = vpop.permute.xlu0 %4358
        %4360 = vrot.lane.b32.xlu0 %v4326, 32
        %v4361 = vpop.permute.xlu0 %4360
        %4362 = vrot.lane.b32.xlu0 %v4327, 32
        %v4363 = vpop.permute.xlu0 %4362
        %4364 = vrot.lane.b32.xlu0 %v4328, 32
        %v4365 = vpop.permute.xlu0 %4364
        %4366 = vrot.lane.b32.xlu0 %v4329, 32
        %v4367 = vpop.permute.xlu0 %4366
        %4368 = vrot.lane.b32.xlu0 %v4330, 32
        %v4369 = vpop.permute.xlu0 %4368
        %v4383 = vadd.f32 %v4253, %v4345
        %v4384 = vadd.f32 %v4254, %v4347
        %v4385 = vadd.f32 %v4255, %v4349
        %v4386 = vadd.f32 %v4256, %v4351
        %v4387 = vadd.f32 %v4257, %v4353
        %v4388 = vadd.f32 %v4258, %v4355
        %v4389 = vadd.f32 %v4259, %v4357
        %v4390 = vadd.f32 %v4260, %v4359
        %v4391 = vadd.f32 %v4261, %v4361
        %v4392 = vadd.f32 %v4262, %v4363
        %v4393 = vadd.f32 %v4263, %v4365
        %v4394 = vadd.f32 %v4264, %v4367
        %v4395 = vadd.f32 %v4265, %v4369
        %4396 = vset.pattern.permute.xlu0 24
        %4397 = vperm.xlu0 %4396, %v452
        %v4398 = vpop.permute.xlu0 %4397
        %4400 = vset.pattern.permute.xlu0 24
        %4401 = vperm.xlu0 %4400, %v453
        %v4402 = vpop.permute.xlu0 %4401
        %4404 = vset.pattern.permute.xlu0 24
        %4405 = vperm.xlu0 %4404, %v454
        %v4406 = vpop.permute.xlu0 %4405
        %4408 = vset.pattern.permute.xlu0 24
        %4409 = vperm.xlu0 %4408, %v455
        %v4410 = vpop.permute.xlu0 %4409
        %4412 = vset.pattern.permute.xlu0 24
        %4413 = vperm.xlu0 %4412, %v456
        %v4414 = vpop.permute.xlu0 %4413
        %4416 = vset.pattern.permute.xlu0 24
        %4417 = vperm.xlu0 %4416, %v457
        %v4418 = vpop.permute.xlu0 %4417
        %4420 = vset.pattern.permute.xlu0 24
        %4421 = vperm.xlu0 %4420, %v458
        %v4422 = vpop.permute.xlu0 %4421
        %4424 = vset.pattern.permute.xlu0 24
        %4425 = vperm.xlu0 %4424, %v459
        %v4426 = vpop.permute.xlu0 %4425
        %4428 = vset.pattern.permute.xlu0 24
        %4429 = vperm.xlu0 %4428, %v460
        %v4430 = vpop.permute.xlu0 %4429
        %4432 = vset.pattern.permute.xlu0 24
        %4433 = vperm.xlu0 %4432, %v461
        %v4434 = vpop.permute.xlu0 %4433
        %4436 = vset.pattern.permute.xlu0 24
        %4437 = vperm.xlu0 %4436, %v462
        %v4438 = vpop.permute.xlu0 %4437
        %4440 = vset.pattern.permute.xlu0 24
        %4441 = vperm.xlu0 %4440, %v463
        %v4442 = vpop.permute.xlu0 %4441
        %4444 = vset.pattern.permute.xlu0 24
        %4445 = vperm.xlu0 %4444, %v464
        %v4446 = vpop.permute.xlu0 %4445
        %v4448 = vmul.f32 %v4398, %v1350
        %v4449 = vmul.f32 %v4402, %v1356
        %v4450 = vmul.f32 %v4406, %v1362
        %v4451 = vmul.f32 %v4410, %v1368
        %v4452 = vmul.f32 %v4414, %v1374
        %v4453 = vmul.f32 %v4418, %v1380
        %v4454 = vmul.f32 %v4422, %v1386
        %v4455 = vmul.f32 %v4426, %v1392
        %v4456 = vmul.f32 %v4430, %v1398
        %v4457 = vmul.f32 %v4434, %v1404
        %v4458 = vmul.f32 %v4438, %v1410
        %v4459 = vmul.f32 %v4442, %v1416
        %v4460 = vmul.f32 %v4446, %v1422
        %v4461 = vadd.f32 %v4383, %v4448
        %v4462 = vadd.f32 %v4384, %v4449
        %v4463 = vadd.f32 %v4385, %v4450
        %v4464 = vadd.f32 %v4386, %v4451
        %v4465 = vadd.f32 %v4387, %v4452
        %v4466 = vadd.f32 %v4388, %v4453
        %v4467 = vadd.f32 %v4389, %v4454
        %v4468 = vadd.f32 %v4390, %v4455
        %v4469 = vadd.f32 %v4391, %v4456
        %v4470 = vadd.f32 %v4392, %v4457
        %v4471 = vadd.f32 %v4393, %v4458
        %v4472 = vadd.f32 %v4394, %v4459
        %v4473 = vadd.f32 %v4395, %v4460
        %4474 = vset.pattern.permute.xlu0 25
        %4475 = vperm.xlu0 %4474, %v452
        %v4476 = vpop.permute.xlu0 %4475
        %4478 = vset.pattern.permute.xlu0 25
        %4479 = vperm.xlu0 %4478, %v453
        %v4480 = vpop.permute.xlu0 %4479
        %4482 = vset.pattern.permute.xlu0 25
        %4483 = vperm.xlu0 %4482, %v454
        %v4484 = vpop.permute.xlu0 %4483
        %4486 = vset.pattern.permute.xlu0 25
        %4487 = vperm.xlu0 %4486, %v455
        %v4488 = vpop.permute.xlu0 %4487
        %4490 = vset.pattern.permute.xlu0 25
        %4491 = vperm.xlu0 %4490, %v456
        %v4492 = vpop.permute.xlu0 %4491
        %4494 = vset.pattern.permute.xlu0 25
        %4495 = vperm.xlu0 %4494, %v457
        %v4496 = vpop.permute.xlu0 %4495
        %4498 = vset.pattern.permute.xlu0 25
        %4499 = vperm.xlu0 %4498, %v458
        %v4500 = vpop.permute.xlu0 %4499
        %4502 = vset.pattern.permute.xlu0 25
        %4503 = vperm.xlu0 %4502, %v459
        %v4504 = vpop.permute.xlu0 %4503
        %4506 = vset.pattern.permute.xlu0 25
        %4507 = vperm.xlu0 %4506, %v460
        %v4508 = vpop.permute.xlu0 %4507
        %4510 = vset.pattern.permute.xlu0 25
        %4511 = vperm.xlu0 %4510, %v461
        %v4512 = vpop.permute.xlu0 %4511
        %4514 = vset.pattern.permute.xlu0 25
        %4515 = vperm.xlu0 %4514, %v462
        %v4516 = vpop.permute.xlu0 %4515
        %4518 = vset.pattern.permute.xlu0 25
        %4519 = vperm.xlu0 %4518, %v463
        %v4520 = vpop.permute.xlu0 %4519
        %4522 = vset.pattern.permute.xlu0 25
        %4523 = vperm.xlu0 %4522, %v464
        %v4524 = vpop.permute.xlu0 %4523
        %v4526 = vmul.f32 %v4476, %v1350
        %v4527 = vmul.f32 %v4480, %v1356
        %v4528 = vmul.f32 %v4484, %v1362
        %v4529 = vmul.f32 %v4488, %v1368
        %v4530 = vmul.f32 %v4492, %v1374
        %v4531 = vmul.f32 %v4496, %v1380
        %v4532 = vmul.f32 %v4500, %v1386
        %v4533 = vmul.f32 %v4504, %v1392
        %v4534 = vmul.f32 %v4508, %v1398
        %v4535 = vmul.f32 %v4512, %v1404
        %v4536 = vmul.f32 %v4516, %v1410
        %v4537 = vmul.f32 %v4520, %v1416
        %v4538 = vmul.f32 %v4524, %v1422
        %4552 = vrot.lane.b32.xlu0 %v4526, 96
        %v4553 = vpop.permute.xlu0 %4552
        %4554 = vrot.lane.b32.xlu0 %v4527, 96
        %v4555 = vpop.permute.xlu0 %4554
        %4556 = vrot.lane.b32.xlu0 %v4528, 96
        %v4557 = vpop.permute.xlu0 %4556
        %4558 = vrot.lane.b32.xlu0 %v4529, 96
        %v4559 = vpop.permute.xlu0 %4558
        %4560 = vrot.lane.b32.xlu0 %v4530, 96
        %v4561 = vpop.permute.xlu0 %4560
        %4562 = vrot.lane.b32.xlu0 %v4531, 96
        %v4563 = vpop.permute.xlu0 %4562
        %4564 = vrot.lane.b32.xlu0 %v4532, 96
        %v4565 = vpop.permute.xlu0 %4564
        %4566 = vrot.lane.b32.xlu0 %v4533, 96
        %v4567 = vpop.permute.xlu0 %4566
        %4568 = vrot.lane.b32.xlu0 %v4534, 96
        %v4569 = vpop.permute.xlu0 %4568
        %4570 = vrot.lane.b32.xlu0 %v4535, 96
        %v4571 = vpop.permute.xlu0 %4570
        %4572 = vrot.lane.b32.xlu0 %v4536, 96
        %v4573 = vpop.permute.xlu0 %4572
        %4574 = vrot.lane.b32.xlu0 %v4537, 96
        %v4575 = vpop.permute.xlu0 %4574
        %4576 = vrot.lane.b32.xlu0 %v4538, 96
        %v4577 = vpop.permute.xlu0 %4576
        %v4591 = vadd.f32 %v4461, %v4553
        %v4592 = vadd.f32 %v4462, %v4555
        %v4593 = vadd.f32 %v4463, %v4557
        %v4594 = vadd.f32 %v4464, %v4559
        %v4595 = vadd.f32 %v4465, %v4561
        %v4596 = vadd.f32 %v4466, %v4563
        %v4597 = vadd.f32 %v4467, %v4565
        %v4598 = vadd.f32 %v4468, %v4567
        %v4599 = vadd.f32 %v4469, %v4569
        %v4600 = vadd.f32 %v4470, %v4571
        %v4601 = vadd.f32 %v4471, %v4573
        %v4602 = vadd.f32 %v4472, %v4575
        %v4603 = vadd.f32 %v4473, %v4577
        %4604 = vset.pattern.permute.xlu0 26
        %4605 = vperm.xlu0 %4604, %v452
        %v4606 = vpop.permute.xlu0 %4605
        %4608 = vset.pattern.permute.xlu0 26
        %4609 = vperm.xlu0 %4608, %v453
        %v4610 = vpop.permute.xlu0 %4609
        %4612 = vset.pattern.permute.xlu0 26
        %4613 = vperm.xlu0 %4612, %v454
        %v4614 = vpop.permute.xlu0 %4613
        %4616 = vset.pattern.permute.xlu0 26
        %4617 = vperm.xlu0 %4616, %v455
        %v4618 = vpop.permute.xlu0 %4617
        %4620 = vset.pattern.permute.xlu0 26
        %4621 = vperm.xlu0 %4620, %v456
        %v4622 = vpop.permute.xlu0 %4621
        %4624 = vset.pattern.permute.xlu0 26
        %4625 = vperm.xlu0 %4624, %v457
        %v4626 = vpop.permute.xlu0 %4625
        %4628 = vset.pattern.permute.xlu0 26
        %4629 = vperm.xlu0 %4628, %v458
        %v4630 = vpop.permute.xlu0 %4629
        %4632 = vset.pattern.permute.xlu0 26
        %4633 = vperm.xlu0 %4632, %v459
        %v4634 = vpop.permute.xlu0 %4633
        %4636 = vset.pattern.permute.xlu0 26
        %4637 = vperm.xlu0 %4636, %v460
        %v4638 = vpop.permute.xlu0 %4637
        %4640 = vset.pattern.permute.xlu0 26
        %4641 = vperm.xlu0 %4640, %v461
        %v4642 = vpop.permute.xlu0 %4641
        %4644 = vset.pattern.permute.xlu0 26
        %4645 = vperm.xlu0 %4644, %v462
        %v4646 = vpop.permute.xlu0 %4645
        %4648 = vset.pattern.permute.xlu0 26
        %4649 = vperm.xlu0 %4648, %v463
        %v4650 = vpop.permute.xlu0 %4649
        %4652 = vset.pattern.permute.xlu0 26
        %4653 = vperm.xlu0 %4652, %v464
        %v4654 = vpop.permute.xlu0 %4653
        %v4656 = vmul.f32 %v4606, %v1350
        %v4657 = vmul.f32 %v4610, %v1356
        %v4658 = vmul.f32 %v4614, %v1362
        %v4659 = vmul.f32 %v4618, %v1368
        %v4660 = vmul.f32 %v4622, %v1374
        %v4661 = vmul.f32 %v4626, %v1380
        %v4662 = vmul.f32 %v4630, %v1386
        %v4663 = vmul.f32 %v4634, %v1392
        %v4664 = vmul.f32 %v4638, %v1398
        %v4665 = vmul.f32 %v4642, %v1404
        %v4666 = vmul.f32 %v4646, %v1410
        %v4667 = vmul.f32 %v4650, %v1416
        %v4668 = vmul.f32 %v4654, %v1422
        %4682 = vrot.lane.b32.xlu0 %v4656, 64
        %v4683 = vpop.permute.xlu0 %4682
        %4684 = vrot.lane.b32.xlu0 %v4657, 64
        %v4685 = vpop.permute.xlu0 %4684
        %4686 = vrot.lane.b32.xlu0 %v4658, 64
        %v4687 = vpop.permute.xlu0 %4686
        %4688 = vrot.lane.b32.xlu0 %v4659, 64
        %v4689 = vpop.permute.xlu0 %4688
        %4690 = vrot.lane.b32.xlu0 %v4660, 64
        %v4691 = vpop.permute.xlu0 %4690
        %4692 = vrot.lane.b32.xlu0 %v4661, 64
        %v4693 = vpop.permute.xlu0 %4692
        %4694 = vrot.lane.b32.xlu0 %v4662, 64
        %v4695 = vpop.permute.xlu0 %4694
        %4696 = vrot.lane.b32.xlu0 %v4663, 64
        %v4697 = vpop.permute.xlu0 %4696
        %4698 = vrot.lane.b32.xlu0 %v4664, 64
        %v4699 = vpop.permute.xlu0 %4698
        %4700 = vrot.lane.b32.xlu0 %v4665, 64
        %v4701 = vpop.permute.xlu0 %4700
        %4702 = vrot.lane.b32.xlu0 %v4666, 64
        %v4703 = vpop.permute.xlu0 %4702
        %4704 = vrot.lane.b32.xlu0 %v4667, 64
        %v4705 = vpop.permute.xlu0 %4704
        %4706 = vrot.lane.b32.xlu0 %v4668, 64
        %v4707 = vpop.permute.xlu0 %4706
        %v4721 = vadd.f32 %v4591, %v4683
        %v4722 = vadd.f32 %v4592, %v4685
        %v4723 = vadd.f32 %v4593, %v4687
        %v4724 = vadd.f32 %v4594, %v4689
        %v4725 = vadd.f32 %v4595, %v4691
        %v4726 = vadd.f32 %v4596, %v4693
        %v4727 = vadd.f32 %v4597, %v4695
        %v4728 = vadd.f32 %v4598, %v4697
        %v4729 = vadd.f32 %v4599, %v4699
        %v4730 = vadd.f32 %v4600, %v4701
        %v4731 = vadd.f32 %v4601, %v4703
        %v4732 = vadd.f32 %v4602, %v4705
        %v4733 = vadd.f32 %v4603, %v4707
        %4734 = vset.pattern.permute.xlu0 27
        %4735 = vperm.xlu0 %4734, %v452
        %v4736 = vpop.permute.xlu0 %4735
        %4738 = vset.pattern.permute.xlu0 27
        %4739 = vperm.xlu0 %4738, %v453
        %v4740 = vpop.permute.xlu0 %4739
        %4742 = vset.pattern.permute.xlu0 27
        %4743 = vperm.xlu0 %4742, %v454
        %v4744 = vpop.permute.xlu0 %4743
        %4746 = vset.pattern.permute.xlu0 27
        %4747 = vperm.xlu0 %4746, %v455
        %v4748 = vpop.permute.xlu0 %4747
        %4750 = vset.pattern.permute.xlu0 27
        %4751 = vperm.xlu0 %4750, %v456
        %v4752 = vpop.permute.xlu0 %4751
        %4754 = vset.pattern.permute.xlu0 27
        %4755 = vperm.xlu0 %4754, %v457
        %v4756 = vpop.permute.xlu0 %4755
        %4758 = vset.pattern.permute.xlu0 27
        %4759 = vperm.xlu0 %4758, %v458
        %v4760 = vpop.permute.xlu0 %4759
        %4762 = vset.pattern.permute.xlu0 27
        %4763 = vperm.xlu0 %4762, %v459
        %v4764 = vpop.permute.xlu0 %4763
        %4766 = vset.pattern.permute.xlu0 27
        %4767 = vperm.xlu0 %4766, %v460
        %v4768 = vpop.permute.xlu0 %4767
        %4770 = vset.pattern.permute.xlu0 27
        %4771 = vperm.xlu0 %4770, %v461
        %v4772 = vpop.permute.xlu0 %4771
        %4774 = vset.pattern.permute.xlu0 27
        %4775 = vperm.xlu0 %4774, %v462
        %v4776 = vpop.permute.xlu0 %4775
        %4778 = vset.pattern.permute.xlu0 27
        %4779 = vperm.xlu0 %4778, %v463
        %v4780 = vpop.permute.xlu0 %4779
        %4782 = vset.pattern.permute.xlu0 27
        %4783 = vperm.xlu0 %4782, %v464
        %v4784 = vpop.permute.xlu0 %4783
        %v4786 = vmul.f32 %v4736, %v1350
        %v4787 = vmul.f32 %v4740, %v1356
        %v4788 = vmul.f32 %v4744, %v1362
        %v4789 = vmul.f32 %v4748, %v1368
        %v4790 = vmul.f32 %v4752, %v1374
        %v4791 = vmul.f32 %v4756, %v1380
        %v4792 = vmul.f32 %v4760, %v1386
        %v4793 = vmul.f32 %v4764, %v1392
        %v4794 = vmul.f32 %v4768, %v1398
        %v4795 = vmul.f32 %v4772, %v1404
        %v4796 = vmul.f32 %v4776, %v1410
        %v4797 = vmul.f32 %v4780, %v1416
        %v4798 = vmul.f32 %v4784, %v1422
        %4812 = vrot.lane.b32.xlu0 %v4786, 32
        %v4813 = vpop.permute.xlu0 %4812
        %4814 = vrot.lane.b32.xlu0 %v4787, 32
        %v4815 = vpop.permute.xlu0 %4814
        %4816 = vrot.lane.b32.xlu0 %v4788, 32
        %v4817 = vpop.permute.xlu0 %4816
        %4818 = vrot.lane.b32.xlu0 %v4789, 32
        %v4819 = vpop.permute.xlu0 %4818
        %4820 = vrot.lane.b32.xlu0 %v4790, 32
        %v4821 = vpop.permute.xlu0 %4820
        %4822 = vrot.lane.b32.xlu0 %v4791, 32
        %v4823 = vpop.permute.xlu0 %4822
        %4824 = vrot.lane.b32.xlu0 %v4792, 32
        %v4825 = vpop.permute.xlu0 %4824
        %4826 = vrot.lane.b32.xlu0 %v4793, 32
        %v4827 = vpop.permute.xlu0 %4826
        %4828 = vrot.lane.b32.xlu0 %v4794, 32
        %v4829 = vpop.permute.xlu0 %4828
        %4830 = vrot.lane.b32.xlu0 %v4795, 32
        %v4831 = vpop.permute.xlu0 %4830
        %4832 = vrot.lane.b32.xlu0 %v4796, 32
        %v4833 = vpop.permute.xlu0 %4832
        %4834 = vrot.lane.b32.xlu0 %v4797, 32
        %v4835 = vpop.permute.xlu0 %4834
        %4836 = vrot.lane.b32.xlu0 %v4798, 32
        %v4837 = vpop.permute.xlu0 %4836
        %v4851 = vadd.f32 %v4721, %v4813
        %v4852 = vadd.f32 %v4722, %v4815
        %v4853 = vadd.f32 %v4723, %v4817
        %v4854 = vadd.f32 %v4724, %v4819
        %v4855 = vadd.f32 %v4725, %v4821
        %v4856 = vadd.f32 %v4726, %v4823
        %v4857 = vadd.f32 %v4727, %v4825
        %v4858 = vadd.f32 %v4728, %v4827
        %v4859 = vadd.f32 %v4729, %v4829
        %v4860 = vadd.f32 %v4730, %v4831
        %v4861 = vadd.f32 %v4731, %v4833
        %v4862 = vadd.f32 %v4732, %v4835
        %v4863 = vadd.f32 %v4733, %v4837
        %4864 = vset.pattern.permute.xlu0 28
        %4865 = vperm.xlu0 %4864, %v452
        %v4866 = vpop.permute.xlu0 %4865
        %4868 = vset.pattern.permute.xlu0 28
        %4869 = vperm.xlu0 %4868, %v453
        %v4870 = vpop.permute.xlu0 %4869
        %4872 = vset.pattern.permute.xlu0 28
        %4873 = vperm.xlu0 %4872, %v454
        %v4874 = vpop.permute.xlu0 %4873
        %4876 = vset.pattern.permute.xlu0 28
        %4877 = vperm.xlu0 %4876, %v455
        %v4878 = vpop.permute.xlu0 %4877
        %4880 = vset.pattern.permute.xlu0 28
        %4881 = vperm.xlu0 %4880, %v456
        %v4882 = vpop.permute.xlu0 %4881
        %4884 = vset.pattern.permute.xlu0 28
        %4885 = vperm.xlu0 %4884, %v457
        %v4886 = vpop.permute.xlu0 %4885
        %4888 = vset.pattern.permute.xlu0 28
        %4889 = vperm.xlu0 %4888, %v458
        %v4890 = vpop.permute.xlu0 %4889
        %4892 = vset.pattern.permute.xlu0 28
        %4893 = vperm.xlu0 %4892, %v459
        %v4894 = vpop.permute.xlu0 %4893
        %4896 = vset.pattern.permute.xlu0 28
        %4897 = vperm.xlu0 %4896, %v460
        %v4898 = vpop.permute.xlu0 %4897
        %4900 = vset.pattern.permute.xlu0 28
        %4901 = vperm.xlu0 %4900, %v461
        %v4902 = vpop.permute.xlu0 %4901
        %4904 = vset.pattern.permute.xlu0 28
        %4905 = vperm.xlu0 %4904, %v462
        %v4906 = vpop.permute.xlu0 %4905
        %4908 = vset.pattern.permute.xlu0 28
        %4909 = vperm.xlu0 %4908, %v463
        %v4910 = vpop.permute.xlu0 %4909
        %4912 = vset.pattern.permute.xlu0 28
        %4913 = vperm.xlu0 %4912, %v464
        %v4914 = vpop.permute.xlu0 %4913
        %v4916 = vmul.f32 %v4866, %v1352
        %v4917 = vmul.f32 %v4870, %v1358
        %v4918 = vmul.f32 %v4874, %v1364
        %v4919 = vmul.f32 %v4878, %v1370
        %v4920 = vmul.f32 %v4882, %v1376
        %v4921 = vmul.f32 %v4886, %v1382
        %v4922 = vmul.f32 %v4890, %v1388
        %v4923 = vmul.f32 %v4894, %v1394
        %v4924 = vmul.f32 %v4898, %v1400
        %v4925 = vmul.f32 %v4902, %v1406
        %v4926 = vmul.f32 %v4906, %v1412
        %v4927 = vmul.f32 %v4910, %v1418
        %v4928 = vmul.f32 %v4914, %v1424
        %v4929 = vadd.f32 %v4851, %v4916
        %v4930 = vadd.f32 %v4852, %v4917
        %v4931 = vadd.f32 %v4853, %v4918
        %v4932 = vadd.f32 %v4854, %v4919
        %v4933 = vadd.f32 %v4855, %v4920
        %v4934 = vadd.f32 %v4856, %v4921
        %v4935 = vadd.f32 %v4857, %v4922
        %v4936 = vadd.f32 %v4858, %v4923
        %v4937 = vadd.f32 %v4859, %v4924
        %v4938 = vadd.f32 %v4860, %v4925
        %v4939 = vadd.f32 %v4861, %v4926
        %v4940 = vadd.f32 %v4862, %v4927
        %v4941 = vadd.f32 %v4863, %v4928
        %4942 = vset.pattern.permute.xlu0 29
        %4943 = vperm.xlu0 %4942, %v452
        %v4944 = vpop.permute.xlu0 %4943
        %4946 = vset.pattern.permute.xlu0 29
        %4947 = vperm.xlu0 %4946, %v453
        %v4948 = vpop.permute.xlu0 %4947
        %4950 = vset.pattern.permute.xlu0 29
        %4951 = vperm.xlu0 %4950, %v454
        %v4952 = vpop.permute.xlu0 %4951
        %4954 = vset.pattern.permute.xlu0 29
        %4955 = vperm.xlu0 %4954, %v455
        %v4956 = vpop.permute.xlu0 %4955
        %4958 = vset.pattern.permute.xlu0 29
        %4959 = vperm.xlu0 %4958, %v456
        %v4960 = vpop.permute.xlu0 %4959
        %4962 = vset.pattern.permute.xlu0 29
        %4963 = vperm.xlu0 %4962, %v457
        %v4964 = vpop.permute.xlu0 %4963
        %4966 = vset.pattern.permute.xlu0 29
        %4967 = vperm.xlu0 %4966, %v458
        %v4968 = vpop.permute.xlu0 %4967
        %4970 = vset.pattern.permute.xlu0 29
        %4971 = vperm.xlu0 %4970, %v459
        %v4972 = vpop.permute.xlu0 %4971
        %4974 = vset.pattern.permute.xlu0 29
        %4975 = vperm.xlu0 %4974, %v460
        %v4976 = vpop.permute.xlu0 %4975
        %4978 = vset.pattern.permute.xlu0 29
        %4979 = vperm.xlu0 %4978, %v461
        %v4980 = vpop.permute.xlu0 %4979
        %4982 = vset.pattern.permute.xlu0 29
        %4983 = vperm.xlu0 %4982, %v462
        %v4984 = vpop.permute.xlu0 %4983
        %4986 = vset.pattern.permute.xlu0 29
        %4987 = vperm.xlu0 %4986, %v463
        %v4988 = vpop.permute.xlu0 %4987
        %4990 = vset.pattern.permute.xlu0 29
        %4991 = vperm.xlu0 %4990, %v464
        %v4992 = vpop.permute.xlu0 %4991
        %v4994 = vmul.f32 %v4944, %v1352
        %v4995 = vmul.f32 %v4948, %v1358
        %v4996 = vmul.f32 %v4952, %v1364
        %v4997 = vmul.f32 %v4956, %v1370
        %v4998 = vmul.f32 %v4960, %v1376
        %v4999 = vmul.f32 %v4964, %v1382
        %v5000 = vmul.f32 %v4968, %v1388
        %v5001 = vmul.f32 %v4972, %v1394
        %v5002 = vmul.f32 %v4976, %v1400
        %v5003 = vmul.f32 %v4980, %v1406
        %v5004 = vmul.f32 %v4984, %v1412
        %v5005 = vmul.f32 %v4988, %v1418
        %v5006 = vmul.f32 %v4992, %v1424
        %5020 = vrot.lane.b32.xlu0 %v4994, 96
        %v5021 = vpop.permute.xlu0 %5020
        %5022 = vrot.lane.b32.xlu0 %v4995, 96
        %v5023 = vpop.permute.xlu0 %5022
        %5024 = vrot.lane.b32.xlu0 %v4996, 96
        %v5025 = vpop.permute.xlu0 %5024
        %5026 = vrot.lane.b32.xlu0 %v4997, 96
        %v5027 = vpop.permute.xlu0 %5026
        %5028 = vrot.lane.b32.xlu0 %v4998, 96
        %v5029 = vpop.permute.xlu0 %5028
        %5030 = vrot.lane.b32.xlu0 %v4999, 96
        %v5031 = vpop.permute.xlu0 %5030
        %5032 = vrot.lane.b32.xlu0 %v5000, 96
        %v5033 = vpop.permute.xlu0 %5032
        %5034 = vrot.lane.b32.xlu0 %v5001, 96
        %v5035 = vpop.permute.xlu0 %5034
        %5036 = vrot.lane.b32.xlu0 %v5002, 96
        %v5037 = vpop.permute.xlu0 %5036
        %5038 = vrot.lane.b32.xlu0 %v5003, 96
        %v5039 = vpop.permute.xlu0 %5038
        %5040 = vrot.lane.b32.xlu0 %v5004, 96
        %v5041 = vpop.permute.xlu0 %5040
        %5042 = vrot.lane.b32.xlu0 %v5005, 96
        %v5043 = vpop.permute.xlu0 %5042
        %5044 = vrot.lane.b32.xlu0 %v5006, 96
        %v5045 = vpop.permute.xlu0 %5044
        %v5059 = vadd.f32 %v4929, %v5021
        %v5060 = vadd.f32 %v4930, %v5023
        %v5061 = vadd.f32 %v4931, %v5025
        %v5062 = vadd.f32 %v4932, %v5027
        %v5063 = vadd.f32 %v4933, %v5029
        %v5064 = vadd.f32 %v4934, %v5031
        %v5065 = vadd.f32 %v4935, %v5033
        %v5066 = vadd.f32 %v4936, %v5035
        %v5067 = vadd.f32 %v4937, %v5037
        %v5068 = vadd.f32 %v4938, %v5039
        %v5069 = vadd.f32 %v4939, %v5041
        %v5070 = vadd.f32 %v4940, %v5043
        %v5071 = vadd.f32 %v4941, %v5045
        %5072 = vset.pattern.permute.xlu0 30
        %5073 = vperm.xlu0 %5072, %v452
        %v5074 = vpop.permute.xlu0 %5073
        %5076 = vset.pattern.permute.xlu0 30
        %5077 = vperm.xlu0 %5076, %v453
        %v5078 = vpop.permute.xlu0 %5077
        %5080 = vset.pattern.permute.xlu0 30
        %5081 = vperm.xlu0 %5080, %v454
        %v5082 = vpop.permute.xlu0 %5081
        %5084 = vset.pattern.permute.xlu0 30
        %5085 = vperm.xlu0 %5084, %v455
        %v5086 = vpop.permute.xlu0 %5085
        %5088 = vset.pattern.permute.xlu0 30
        %5089 = vperm.xlu0 %5088, %v456
        %v5090 = vpop.permute.xlu0 %5089
        %5092 = vset.pattern.permute.xlu0 30
        %5093 = vperm.xlu0 %5092, %v457
        %v5094 = vpop.permute.xlu0 %5093
        %5096 = vset.pattern.permute.xlu0 30
        %5097 = vperm.xlu0 %5096, %v458
        %v5098 = vpop.permute.xlu0 %5097
        %5100 = vset.pattern.permute.xlu0 30
        %5101 = vperm.xlu0 %5100, %v459
        %v5102 = vpop.permute.xlu0 %5101
        %5104 = vset.pattern.permute.xlu0 30
        %5105 = vperm.xlu0 %5104, %v460
        %v5106 = vpop.permute.xlu0 %5105
        %5108 = vset.pattern.permute.xlu0 30
        %5109 = vperm.xlu0 %5108, %v461
        %v5110 = vpop.permute.xlu0 %5109
        %5112 = vset.pattern.permute.xlu0 30
        %5113 = vperm.xlu0 %5112, %v462
        %v5114 = vpop.permute.xlu0 %5113
        %5116 = vset.pattern.permute.xlu0 30
        %5117 = vperm.xlu0 %5116, %v463
        %v5118 = vpop.permute.xlu0 %5117
        %5120 = vset.pattern.permute.xlu0 30
        %5121 = vperm.xlu0 %5120, %v464
        %v5122 = vpop.permute.xlu0 %5121
        %v5124 = vmul.f32 %v5074, %v1352
        %v5125 = vmul.f32 %v5078, %v1358
        %v5126 = vmul.f32 %v5082, %v1364
        %v5127 = vmul.f32 %v5086, %v1370
        %v5128 = vmul.f32 %v5090, %v1376
        %v5129 = vmul.f32 %v5094, %v1382
        %v5130 = vmul.f32 %v5098, %v1388
        %v5131 = vmul.f32 %v5102, %v1394
        %v5132 = vmul.f32 %v5106, %v1400
        %v5133 = vmul.f32 %v5110, %v1406
        %v5134 = vmul.f32 %v5114, %v1412
        %v5135 = vmul.f32 %v5118, %v1418
        %v5136 = vmul.f32 %v5122, %v1424
        %5150 = vrot.lane.b32.xlu0 %v5124, 64
        %v5151 = vpop.permute.xlu0 %5150
        %5152 = vrot.lane.b32.xlu0 %v5125, 64
        %v5153 = vpop.permute.xlu0 %5152
        %5154 = vrot.lane.b32.xlu0 %v5126, 64
        %v5155 = vpop.permute.xlu0 %5154
        %5156 = vrot.lane.b32.xlu0 %v5127, 64
        %v5157 = vpop.permute.xlu0 %5156
        %5158 = vrot.lane.b32.xlu0 %v5128, 64
        %v5159 = vpop.permute.xlu0 %5158
        %5160 = vrot.lane.b32.xlu0 %v5129, 64
        %v5161 = vpop.permute.xlu0 %5160
        %5162 = vrot.lane.b32.xlu0 %v5130, 64
        %v5163 = vpop.permute.xlu0 %5162
        %5164 = vrot.lane.b32.xlu0 %v5131, 64
        %v5165 = vpop.permute.xlu0 %5164
        %5166 = vrot.lane.b32.xlu0 %v5132, 64
        %v5167 = vpop.permute.xlu0 %5166
        %5168 = vrot.lane.b32.xlu0 %v5133, 64
        %v5169 = vpop.permute.xlu0 %5168
        %5170 = vrot.lane.b32.xlu0 %v5134, 64
        %v5171 = vpop.permute.xlu0 %5170
        %5172 = vrot.lane.b32.xlu0 %v5135, 64
        %v5173 = vpop.permute.xlu0 %5172
        %5174 = vrot.lane.b32.xlu0 %v5136, 64
        %v5175 = vpop.permute.xlu0 %5174
        %v5189 = vadd.f32 %v5059, %v5151
        %v5190 = vadd.f32 %v5060, %v5153
        %v5191 = vadd.f32 %v5061, %v5155
        %v5192 = vadd.f32 %v5062, %v5157
        %v5193 = vadd.f32 %v5063, %v5159
        %v5194 = vadd.f32 %v5064, %v5161
        %v5195 = vadd.f32 %v5065, %v5163
        %v5196 = vadd.f32 %v5066, %v5165
        %v5197 = vadd.f32 %v5067, %v5167
        %v5198 = vadd.f32 %v5068, %v5169
        %v5199 = vadd.f32 %v5069, %v5171
        %v5200 = vadd.f32 %v5070, %v5173
        %v5201 = vadd.f32 %v5071, %v5175
        %5202 = vset.pattern.permute.xlu0 31
        %5203 = vperm.xlu0 %5202, %v452
        %v5204 = vpop.permute.xlu0 %5203
        %5206 = vset.pattern.permute.xlu0 31
        %5207 = vperm.xlu0 %5206, %v453
        %v5208 = vpop.permute.xlu0 %5207
        %5210 = vset.pattern.permute.xlu0 31
        %5211 = vperm.xlu0 %5210, %v454
        %v5212 = vpop.permute.xlu0 %5211
        %5214 = vset.pattern.permute.xlu0 31
        %5215 = vperm.xlu0 %5214, %v455
        %v5216 = vpop.permute.xlu0 %5215
        %5218 = vset.pattern.permute.xlu0 31
        %5219 = vperm.xlu0 %5218, %v456
        %v5220 = vpop.permute.xlu0 %5219
        %5222 = vset.pattern.permute.xlu0 31
        %5223 = vperm.xlu0 %5222, %v457
        %v5224 = vpop.permute.xlu0 %5223
        %5226 = vset.pattern.permute.xlu0 31
        %5227 = vperm.xlu0 %5226, %v458
        %v5228 = vpop.permute.xlu0 %5227
        %5230 = vset.pattern.permute.xlu0 31
        %5231 = vperm.xlu0 %5230, %v459
        %v5232 = vpop.permute.xlu0 %5231
        %5234 = vset.pattern.permute.xlu0 31
        %5235 = vperm.xlu0 %5234, %v460
        %v5236 = vpop.permute.xlu0 %5235
        %5238 = vset.pattern.permute.xlu0 31
        %5239 = vperm.xlu0 %5238, %v461
        %v5240 = vpop.permute.xlu0 %5239
        %5242 = vset.pattern.permute.xlu0 31
        %5243 = vperm.xlu0 %5242, %v462
        %v5244 = vpop.permute.xlu0 %5243
        %5246 = vset.pattern.permute.xlu0 31
        %5247 = vperm.xlu0 %5246, %v463
        %v5248 = vpop.permute.xlu0 %5247
        %5250 = vset.pattern.permute.xlu0 31
        %5251 = vperm.xlu0 %5250, %v464
        %v5252 = vpop.permute.xlu0 %5251
        %v5254 = vmul.f32 %v5204, %v1352
        %v5255 = vmul.f32 %v5208, %v1358
        %v5256 = vmul.f32 %v5212, %v1364
        %v5257 = vmul.f32 %v5216, %v1370
        %v5258 = vmul.f32 %v5220, %v1376
        %v5259 = vmul.f32 %v5224, %v1382
        %v5260 = vmul.f32 %v5228, %v1388
        %v5261 = vmul.f32 %v5232, %v1394
        %v5262 = vmul.f32 %v5236, %v1400
        %v5263 = vmul.f32 %v5240, %v1406
        %v5264 = vmul.f32 %v5244, %v1412
        %v5265 = vmul.f32 %v5248, %v1418
        %v5266 = vmul.f32 %v5252, %v1424
        %5280 = vrot.lane.b32.xlu0 %v5254, 32
        %v5281 = vpop.permute.xlu0 %5280
        %5282 = vrot.lane.b32.xlu0 %v5255, 32
        %v5283 = vpop.permute.xlu0 %5282
        %5284 = vrot.lane.b32.xlu0 %v5256, 32
        %v5285 = vpop.permute.xlu0 %5284
        %5286 = vrot.lane.b32.xlu0 %v5257, 32
        %v5287 = vpop.permute.xlu0 %5286
        %5288 = vrot.lane.b32.xlu0 %v5258, 32
        %v5289 = vpop.permute.xlu0 %5288
        %5290 = vrot.lane.b32.xlu0 %v5259, 32
        %v5291 = vpop.permute.xlu0 %5290
        %5292 = vrot.lane.b32.xlu0 %v5260, 32
        %v5293 = vpop.permute.xlu0 %5292
        %5294 = vrot.lane.b32.xlu0 %v5261, 32
        %v5295 = vpop.permute.xlu0 %5294
        %5296 = vrot.lane.b32.xlu0 %v5262, 32
        %v5297 = vpop.permute.xlu0 %5296
        %5298 = vrot.lane.b32.xlu0 %v5263, 32
        %v5299 = vpop.permute.xlu0 %5298
        %5300 = vrot.lane.b32.xlu0 %v5264, 32
        %v5301 = vpop.permute.xlu0 %5300
        %5302 = vrot.lane.b32.xlu0 %v5265, 32
        %v5303 = vpop.permute.xlu0 %5302
        %5304 = vrot.lane.b32.xlu0 %v5266, 32
        %v5305 = vpop.permute.xlu0 %5304
        %v5319 = vadd.f32 %v5189, %v5281
        %v5320 = vadd.f32 %v5190, %v5283
        %v5321 = vadd.f32 %v5191, %v5285
        %v5322 = vadd.f32 %v5192, %v5287
        %v5323 = vadd.f32 %v5193, %v5289
        %v5324 = vadd.f32 %v5194, %v5291
        %v5325 = vadd.f32 %v5195, %v5293
        %v5326 = vadd.f32 %v5196, %v5295
        %v5327 = vadd.f32 %v5197, %v5297
        %v5328 = vadd.f32 %v5198, %v5299
        %v5329 = vadd.f32 %v5199, %v5301
        %v5330 = vadd.f32 %v5200, %v5303
        %v5331 = vadd.f32 %v5201, %v5305
        %vm5332 = vcmask 261120
        %5333 = vst.msk [vmem:[%s423] sm:$0xff] %vm5332, %v5319
        %5334 = vst.msk [vmem:[%s423 + $0x8] sm:$0xff] %vm5332, %v5320
        %5335 = vst.msk [vmem:[%s423 + $0x10] sm:$0xff] %vm5332, %v5321
        %5336 = vst.msk [vmem:[%s423 + $0x18] sm:$0xff] %vm5332, %v5322
        %5337 = vst.msk [vmem:[%s423 + $0x20] sm:$0xff] %vm5332, %v5323
        %5338 = vst.msk [vmem:[%s423 + $0x28] sm:$0xff] %vm5332, %v5324
        %5339 = vst.msk [vmem:[%s423 + $0x30] sm:$0xff] %vm5332, %v5325
        %5340 = vst.msk [vmem:[%s423 + $0x38] sm:$0xff] %vm5332, %v5326
        %5341 = vst.msk [vmem:[%s423 + $0x40] sm:$0xff] %vm5332, %v5327
        %5342 = vst.msk [vmem:[%s423 + $0x48] sm:$0xff] %vm5332, %v5328
        %5343 = vst.msk [vmem:[%s423 + $0x50] sm:$0xff] %vm5332, %v5329
        %5344 = vst.msk [vmem:[%s423 + $0x58] sm:$0xff] %vm5332, %v5330
        %5345 = vst.msk [vmem:[%s423 + $0x60] sm:$0xff] %vm5332, %v5331
        %s5346 = smul.u32 13, %s16
        %p5347 = scmp.lt.s32.totalorder %s5346, 25
        %s5348 = scalar_select %p5347, %s5346, 25
        %s5349 = smul.addr %s5348, 8
        %s5350 = scalar_lea.vmem %s4, %s5349
        // Predicated region
        $region79: #{tpu_custom_call.1} parent=69 // pred_check
          %p5351 = pneg %p128
        $region80: #{tpu_custom_call.1} parent=69 // pred_check_branch
          %5353 = sbr.rel (%p5351) target = $region82
        $region81: #{tpu_custom_call.1} parent=69 // pred_region
          %s5354 = smul.u32 13, %s16
        $region82: #{tpu_custom_call.1} parent=69 // pred_fallthru
          _
      $region70: #{tpu_custom_call.1} parent=5 // pred_fallthru
        _
      %p5355 = scmp.le.s32.totalorder 2, %s11
      // Predicated region
      $region83: #{tpu_custom_call.1} parent=5 // pred_check
        %p5356 = pneg %p5355
      $region84: #{tpu_custom_call.1} parent=5 // pred_check_branch
        %5358 = sbr.rel (%p5356) target = $region86
      $region85: #{tpu_custom_call.1} parent=5 // pred_region
        %s5359 = ssub.s32 %s11, 2
        // Predicated region
        $region87: #{tpu_custom_call.1} parent=85 // pred_check
          %p5360 = pneg %p134
        $region88: #{tpu_custom_call.1} parent=85 // pred_check_branch
          %5362 = sbr.rel (%p5360) target = $region90
        $region89: #{tpu_custom_call.1} parent=85 // pred_region
          %s5363 = smul.u32 13, %s17
          %p5364 = scmp.lt.s32.totalorder %s5363, 25
          %s5365 = scalar_select %p5364, %s5363, 25
          %s5366 = smul.addr %s5365, 8
          %s5367 = scalar_lea.vmem %s4, %s5366
        $region90: #{tpu_custom_call.1} parent=85 // pred_fallthru
          _
      $region86: #{tpu_custom_call.1} parent=5 // pred_fallthru
        _
    $region6: #{tpu_custom_call.1} parent=1 // loop_footer
      %s15 = sadd.s32 1, %s11
    $region7: #{tpu_custom_call.1} parent=1 // loop_footer_branch
      %10 = sbr.rel target = $region3
    $region8: #{tpu_custom_call.1} parent=1 // loop_exit
      _
    %5368 = vsyncpa [#allocation4], 1
    %s5369 = scalar_lea.sflag [#allocation4], 1
    %5370 = vsyncpa %s5369, 1

</llo_original>
